<compile_context>
chip_gen: v7x
topology: tpu7x:2x2x1
jax: 0.10.0
libtpu: 0.0.40
codegen_flags: <defaults>
</compile_context>

<pallas_src>
import functools

import jax
import jax.numpy as jnp
import numpy as np
from jax.experimental import pallas as pl
from jax.experimental.pallas import tpu as pltpu


# ----------------------------------------------------------------------------
# Host-side helpers
# ----------------------------------------------------------------------------
def _round_up(x, m):
    return ((x + m - 1) // m) * m


def _interp_matrix_2x(s):
    """PyTorch Upsample(scale_factor=2, mode='bilinear', align_corners=True)
    interpolation weights along one axis, shape (2*s, s)."""
    out = 2 * s
    A = np.zeros((out, s), dtype=np.float64)
    if s == 1:
        A[:, 0] = 1.0
        return A.astype(np.float32)
    o = np.arange(out, dtype=np.float64)
    src = o * (s - 1) / (out - 1)                  # align_corners=True mapping
    i0 = np.clip(np.floor(src).astype(np.int64), 0, s - 1)
    i1 = np.minimum(i0 + 1, s - 1)
    frac = src - i0
    A[np.arange(out), i0] += 1.0 - frac
    A[np.arange(out), i1] += frac
    return A.astype(np.float32)


def fold_bn(gamma, beta, mean, var, eps=1e-5):
    """BatchNorm2d (inference) folded to per-channel scale/bias."""
    scale = gamma / jnp.sqrt(var + eps)
    bias = beta - mean * scale
    return scale, bias


# ----------------------------------------------------------------------------
# Fused kernel: upsample(x1) -> cat([x2, x1]) -> conv+BN+ReLU -> conv+BN+ReLU
# One grid step == one image (grid over batch, "parallel" for megacore).
#
# Slab layout: every image lives channel-major in a flat, zero-guarded lane
# "slab" of length Lslab with per-row stride Wp, so every conv output is
# lane-dense (Jc = round_up(H*Wp, 128) lanes) and the 9 conv taps are just
# statically shifted lane slices of the slab.
# ----------------------------------------------------------------------------
def _up2d_kernel(x1_ref, x2_ref, aw_ref, w1_ref, s1_ref, b1_ref,
                 w2_ref, s2_ref, b2_ref, mask_ref, o_ref, slab_ref, *,
                 H, W, Wp, Jc, base, Lslab, C1, C2, Cin, Cmid, Cch,
                 row_src, fuse1, fuse2):
    f32 = jnp.float32
    bf16 = jnp.bfloat16
    HWp = H * Wp

    # --- zero only the guard strips every step (data region is fully
    #     rewritten below; per-step so each TensorCore's private scratch is
    #     valid even when the batch axis is split across cores).
    slab_ref[:, 0:base] = jnp.zeros((Cch, base), bf16)
    slab_ref[:, base + HWp:Lslab] = jnp.zeros((Cch, Lslab - base - HWp), bf16)

    # --- embed the skip connection x2 into slab rows [0:C2] (pad lanes zeroed
    #     by the preceding full-width zero store -> no host-side F.pad pass).
    zrow2 = jnp.zeros((C2, Wp), bf16)
    for i in range(H):
        rs = base + i * Wp
        slab_ref[0:C2, rs:rs + Wp] = zrow2
        slab_ref[0:C2, rs + 1:rs + 1 + W] = x2_ref[0, :, i, :].astype(bf16)

    # --- separable bilinear 2x upsample of x1 (+ F.pad) into rows [C2:Cin]:
    #     h-axis = static 2-source-row blend, w-axis = small (w, Wp) matmul
    #     with the column offset / zero pad baked into the matrix.
    zrow1 = jnp.zeros((C1, Wp), bf16)
    aw = aw_ref[...]                                        # (w, Wp) f32
    for i in range(H):
        r0, a0, r1, a1 = row_src[i]
        rs = base + i * Wp
        if a0 == 0.0 and a1 == 0.0:                         # F.pad row
            slab_ref[C2:Cin, rs:rs + Wp] = zrow1
        else:
            src = a0 * x1_ref[0, :, r0, :]                  # (C1, w) f32
            if a1 != 0.0:
                src = src + a1 * x1_ref[0, :, r1, :]
            row = jnp.dot(src, aw, preferred_element_type=f32)   # (C1, Wp)
            slab_ref[C2:Cin, rs:rs + Wp] = row.astype(bf16)

    # --- 3x3 conv on the slab: 9 shifted lane slices.
    def conv3x3(w_ref, ci, fuse):
        def tap(t):
            kh, kw = divmod(t, 3)
            s = base + (kh - 1) * Wp + (kw - 1)
            return slab_ref[0:ci, s:s + Jc]                 # (ci, Jc) bf16

        if fuse:   # tiny ci: one fused-K matmul (per-tap K would underfill MXU)
            x = jnp.concatenate([tap(t) for t in range(9)], axis=0)
            return jnp.dot(w_ref[...], x, preferred_element_type=f32)
        acc = None  # per-tap accumulating matmuls (no 9x im2col buffer)
        for t in range(9):
            p = jnp.dot(w_ref[:, t * ci:(t + 1) * ci], tap(t),
                        preferred_element_type=f32)
            acc = p if acc is None else acc + p
        return acc

    mask = mask_ref[...]                                    # (1, Jc) f32

    # conv1 + folded BN + ReLU; re-embed masked (pad/tail lanes become zero).
    acc1 = conv3x3(w1_ref, Cin, fuse1)                      # (Cmid, Jc) f32
    y1 = jnp.maximum(acc1 * s1_ref[...] + b1_ref[...], 0.0) * mask
    slab_ref[0:Cmid, base:base + Jc] = y1.astype(bf16)

    # conv2 + folded BN + ReLU (no mask: only data lanes are stored below).
    acc2 = conv3x3(w2_ref, Cmid, fuse2)                     # (Cout, Jc) f32
    y2 = jnp.maximum(acc2 * s2_ref[...] + b2_ref[...], 0.0)

    # --- write only the W data lanes per row -> dense NCHW output (no
    #     host-side crop pass; lane-dense whenever W is a multiple of 128).
    for i in range(H):
        s = i * Wp + 1
        o_ref[0, :, i, :] = y2[:, s:s + W]


# ----------------------------------------------------------------------------
# Up2D forward (bilinear=True branch, normtype='bn', inference mode)
# ----------------------------------------------------------------------------
def up2d_forward(x1, x2, params, *, taps_mode="auto"):
    # x1: (N, C1, h, w) low-res, x2: (N, C2, H, W) skip connection (NCHW).
    N, C1, h, w = x1.shape
    Nb, C2, H, W = x2.shape
    assert N == Nb
    Cin = C1 + C2
    Cmid, Cout = params["w1"].shape[0], params["w2"].shape[0]
    assert params["w1"].shape[1] == Cin and params["w2"].shape[1] == Cmid

    H1, W1 = 2 * h, 2 * w
    assert H >= H1 and W >= W1        # F.pad in the module only pads, never crops
    dy0, dx0 = (H - H1) // 2, (W - W1) // 2

    # Slab geometry, 128-aligned by construction.
    Wp = _round_up(W + 2, 8)          # per-row stride (>= W + 2 halo lanes)
    base = _round_up(2 * Wp, 128)     # flat offset of the first data row
    Jc = _round_up(H * Wp, 128)       # lane-dense conv output width
    Lslab = base + Jc + base
    Cch = max(Cin, Cmid)

    # ---- host-side constants (tiny, one-time) --------------------------------
    # w-axis interpolation + column pad, (w, Wp)
    A_w = _interp_matrix_2x(w)                                  # (W1, w)
    awp = np.zeros((w, Wp), np.float32)
    awp[:, 1 + dx0:1 + dx0 + W1] = A_w.T
    awp = jnp.asarray(awp)

    # h-axis interpolation as static (src0, w0, src1, w1) blends per output row
    A_h = _interp_matrix_2x(h)                                  # (H1, h)
    row_src = []
    for I in range(H):
        if dy0 <= I < dy0 + H1:
            r = A_h[I - dy0]
            nz = np.nonzero(r)[0]
            if len(nz) == 1:
                row_src.append((int(nz[0]), float(r[nz[0]]), int(nz[0]), 0.0))
            else:
                row_src.append((int(nz[0]), float(r[nz[0]]),
                                int(nz[1]), float(r[nz[1]])))
        else:
            row_src.append((0, 0.0, 0, 0.0))                    # pure F.pad row
    row_src = tuple(row_src)

    # mask for the y1 re-embed: zero per-row pad lanes and the alignment tail
    j = np.arange(Jc)
    mask = jnp.asarray(((j < H * Wp) & (j % Wp >= 1) & (j % Wp <= W))
                       .astype(np.float32).reshape(1, Jc))

    # conv weights (PyTorch (Cout, Cin, 3, 3)) -> (Cout, 9*Cin), tap-major, bf16
    w1m = jnp.transpose(params["w1"], (0, 2, 3, 1)).reshape(Cmid, 9 * Cin)
    w2m = jnp.transpose(params["w2"], (0, 2, 3, 1)).reshape(Cout, 9 * Cmid)
    w1m, w2m = w1m.astype(jnp.bfloat16), w2m.astype(jnp.bfloat16)

    s1, b1 = fold_bn(params["bn1_gamma"], params["bn1_beta"],
                     params["bn1_mean"], params["bn1_var"])
    s2, b2 = fold_bn(params["bn2_gamma"], params["bn2_beta"],
                     params["bn2_mean"], params["bn2_var"])
    s1 = s1.reshape(Cmid, 1).astype(jnp.float32)
    b1 = b1.reshape(Cmid, 1).astype(jnp.float32)
    s2 = s2.reshape(Cout, 1).astype(jnp.float32)
    b2 = b2.reshape(Cout, 1).astype(jnp.float32)

    if taps_mode == "auto":          # per review: fuse K only for tiny channels
        fuse1, fuse2 = Cin < 64, Cmid < 64
    elif taps_mode == "per_tap":
        fuse1 = fuse2 = False
    elif taps_mode == "fused":
        fuse1 = fuse2 = True
    else:
        raise ValueError(taps_mode)

    kernel = functools.partial(
        _up2d_kernel, H=H, W=W, Wp=Wp, Jc=Jc, base=base, Lslab=Lslab,
        C1=C1, C2=C2, Cin=Cin, Cmid=Cmid, Cch=Cch,
        row_src=row_src, fuse1=fuse1, fuse2=fuse2)

    const2d = lambda n: (0, 0)

    # VMEM budget: slab scratch + double-buffered I/O blocks + constants +
    # in-flight f32 accumulators, with ~2x headroom (capped below physical).
    vmem_est = (Cch * Lslab * 2
                + 2 * 4 * (C1 * h * w + C2 * H * W + Cout * H * W)
                + 2 * (w * Wp * 4 + 9 * (Cmid * Cin + Cout * Cmid) * 2
                       + 2 * (Cmid + Cout) * 4 + Jc * 4)
                + 4 * Jc * (Cmid + Cout) + 2 * Jc * 9 * Cch)
    vmem_limit = int(min(100 * 1024 * 1024, max(32 * 1024 * 1024, 2 * vmem_est)))

    out = pl.pallas_call(
        kernel,
        out_shape=jax.ShapeDtypeStruct((N, Cout, H, W), jnp.float32),
        grid_spec=pltpu.PrefetchScalarGridSpec(
            num_scalar_prefetch=0,
            grid=(N,),
            in_specs=[
                pl.BlockSpec((1, C1, h, w), lambda n: (n, 0, 0, 0)),   # x1 (NCHW)
                pl.BlockSpec((1, C2, H, W), lambda n: (n, 0, 0, 0)),   # x2 (NCHW)
                pl.BlockSpec((w, Wp), const2d),                        # w-interp
                pl.BlockSpec((Cmid, 9 * Cin), const2d),                # conv1 w
                pl.BlockSpec((Cmid, 1), const2d),                      # bn1 scale
                pl.BlockSpec((Cmid, 1), const2d),                      # bn1 bias
                pl.BlockSpec((Cout, 9 * Cmid), const2d),               # conv2 w
                pl.BlockSpec((Cout, 1), const2d),                      # bn2 scale
                pl.BlockSpec((Cout, 1), const2d),                      # bn2 bias
                pl.BlockSpec((1, Jc), const2d),                        # y1 mask
            ],
            out_specs=pl.BlockSpec((1, Cout, H, W), lambda n: (n, 0, 0, 0)),
            scratch_shapes=[pltpu.VMEM((Cch, Lslab), jnp.bfloat16)],
        ),
        compiler_params=pltpu.CompilerParams(
            dimension_semantics=("parallel",),
            vmem_limit_bytes=vmem_limit,
        ),
    )(x1.astype(jnp.float32), x2.astype(jnp.float32),
      awp, w1m, s1, b1, w2m, s2, b2, mask)
    return out


# ----------------------------------------------------------------------------
# Pure-JAX reference (f32) for the correctness check.
# ----------------------------------------------------------------------------
def _reference_up2d(x1, x2, params):
    N, C1, h, w = x1.shape
    H, W = x2.shape[2], x2.shape[3]
    A_h = jnp.asarray(_interp_matrix_2x(h))
    A_w = jnp.asarray(_interp_matrix_2x(w))
    x1u = jnp.einsum("Hh,nchw,Ww->ncHW", A_h, x1, A_w)
    dy, dx = H - x1u.shape[2], W - x1u.shape[3]
    x1u = jnp.pad(x1u, ((0, 0), (0, 0),
                        (dy // 2, dy - dy // 2), (dx // 2, dx - dx // 2)))
    x = jnp.concatenate([x2, x1u], axis=1)

    def conv_bn_relu(x, wgt, gamma, beta, mean, var):
        y = jax.lax.conv_general_dilated(
            x, wgt, (1, 1), "SAME",
            dimension_numbers=("NCHW", "OIHW", "NCHW"))
        s, b = fold_bn(gamma, beta, mean, var)
        y = y * s.reshape(1, -1, 1, 1) + b.reshape(1, -1, 1, 1)
        return jnp.maximum(y, 0.0)

    x = conv_bn_relu(x, params["w1"], params["bn1_gamma"], params["bn1_beta"],
                     params["bn1_mean"], params["bn1_var"])
    x = conv_bn_relu(x, params["w2"], params["bn2_gamma"], params["bn2_beta"],
                     params["bn2_mean"], params["bn2_var"])
    return x


def init_params(key, in_channels, out_channels):
    mid_channels = in_channels // 2
    k1, k2, k3, k4, k5, k6 = jax.random.split(key, 6)
    return {
        # Conv2d weights, PyTorch layout (Cout, Cin, 3, 3), bias=False
        "w1": 0.1 * jax.random.normal(k1, (mid_channels, in_channels, 3, 3), jnp.float32),
        "w2": 0.1 * jax.random.normal(k2, (out_channels, mid_channels, 3, 3), jnp.float32),
        # BatchNorm2d (inference-mode running stats)
        "bn1_gamma": 1.0 + 0.1 * jax.random.normal(k3, (mid_channels,), jnp.float32),
        "bn1_beta": jnp.full((mid_channels,), 0.05, jnp.float32),
        "bn1_mean": 0.1 * jax.random.normal(k5, (mid_channels,), jnp.float32),
        "bn1_var": 1.0 + 0.1 * jnp.abs(jax.random.normal(k5, (mid_channels,), jnp.float32)),
        "bn2_gamma": 1.0 + 0.1 * jax.random.normal(k4, (out_channels,), jnp.float32),
        "bn2_beta": jnp.full((out_channels,), -0.05, jnp.float32),
        "bn2_mean": 0.1 * jax.random.normal(k6, (out_channels,), jnp.float32),
        "bn2_var": 1.0 + 0.1 * jnp.abs(jax.random.normal(k6, (out_channels,), jnp.float32)),
    }


if __name__ == "__main__":
    key = jax.random.PRNGKey(0)
    kx1, kx2, kp = jax.random.split(key, 3)

    # Up2D(in_channels=8, out_channels=8, bilinear=True, normtype='bn')
    in_channels, out_channels = 8, 8
    N, h, w = 2, 8, 8                      # x1 low-res spatial; x2 is 2x (=16)
    c_half = in_channels // 2

    x1 = jax.random.normal(kx1, (N, c_half, h, w), jnp.float32)
    x2 = jax.random.normal(kx2, (N, c_half, 2 * h, 2 * w), jnp.float32)
    params = init_params(kp, in_channels, out_channels)

    # auto -> fused-K taps at these tiny channel counts; also exercise the
    # per-tap accumulation path used at realistic channel counts.
    out = jax.block_until_ready(up2d_forward(x1, x2, params))
    out_pt = jax.block_until_ready(up2d_forward(x1, x2, params, taps_mode="per_tap"))

    expected_shape = (N, out_channels, 2 * h, 2 * w)
    assert out.shape == expected_shape, (out.shape, expected_shape)
    assert bool(jnp.all(jnp.isfinite(out)))
    assert bool(jnp.all(out >= 0.0))       # final ReLU

    ref = jax.block_until_ready(_reference_up2d(x1, x2, params))
    np.testing.assert_allclose(np.asarray(out), np.asarray(ref), rtol=5e-2, atol=5e-2)
    np.testing.assert_allclose(np.asarray(out_pt), np.asarray(ref), rtol=5e-2, atol=5e-2)

    print("KERNEL_OK")
</pallas_src>

<mosaic_0001>
module attributes {stable_mosaic.version = 11 : i64} {
  func.func @_up2d_kernel(%arg0: i32, %arg1: memref<1x4x8x8xf32, #tpu.memory_space<vmem>>, %arg2: memref<1x4x16x16xf32, #tpu.memory_space<vmem>>, %arg3: memref<8x24xf32, #tpu.memory_space<vmem>>, %arg4: memref<4x72xbf16, #tpu.memory_space<vmem>>, %arg5: memref<4x1xf32, #tpu.memory_space<vmem>>, %arg6: memref<4x1xf32, #tpu.memory_space<vmem>>, %arg7: memref<8x36xbf16, #tpu.memory_space<vmem>>, %arg8: memref<8x1xf32, #tpu.memory_space<vmem>>, %arg9: memref<8x1xf32, #tpu.memory_space<vmem>>, %arg10: memref<1x384xf32, #tpu.memory_space<vmem>>, %arg11: memref<1x8x16x16xf32, #tpu.memory_space<vmem>>, %arg12: memref<8x640xbf16, #tpu.memory_space<vmem>>) attributes {dimension_semantics = [#tpu.dimension_semantics<parallel>], iteration_bounds = array<i64: 2>, scalar_prefetch = 0 : i64, scratch_operands = 1 : i64, tpu.core_type = #tpu.core_type<tc>, window_params = [{transform_indices = @transform_0, window_bounds = array<i64: 1, 4, 8, 8>}, {transform_indices = @transform_1, window_bounds = array<i64: 1, 4, 16, 16>}, {pipeline_mode = #tpu.pipeline_mode<synchronous>, transform_indices = @transform_2, window_bounds = array<i64: 8, 24>}, {pipeline_mode = #tpu.pipeline_mode<synchronous>, transform_indices = @transform_3, window_bounds = array<i64: 4, 72>}, {pipeline_mode = #tpu.pipeline_mode<synchronous>, transform_indices = @transform_4, window_bounds = array<i64: 4, 1>}, {pipeline_mode = #tpu.pipeline_mode<synchronous>, transform_indices = @transform_5, window_bounds = array<i64: 4, 1>}, {pipeline_mode = #tpu.pipeline_mode<synchronous>, transform_indices = @transform_6, window_bounds = array<i64: 8, 36>}, {pipeline_mode = #tpu.pipeline_mode<synchronous>, transform_indices = @transform_7, window_bounds = array<i64: 8, 1>}, {pipeline_mode = #tpu.pipeline_mode<synchronous>, transform_indices = @transform_8, window_bounds = array<i64: 8, 1>}, {pipeline_mode = #tpu.pipeline_mode<synchronous>, transform_indices = @transform_9, window_bounds = array<i64: 1, 384>}, {transform_indices = @transform_10, window_bounds = array<i64: 1, 8, 16, 16>}]} {
    %cst = arith.constant 0.000000e+00 : bf16
    %0 = vector.broadcast %cst : bf16 to vector<8x128xbf16>
    %c0 = arith.constant 0 : index
    %c0_0 = arith.constant 0 : index
    %1 = vector.load %arg12[%c0, %c0_0] : memref<8x640xbf16, #tpu.memory_space<vmem>>, vector<8x128xbf16>
    tpu.vector_store %arg12[%c0, %c0_0], %0 {strides = array<i32>} : memref<8x640xbf16, #tpu.memory_space<vmem>>, vector<8x128xbf16>,
    %cst_1 = arith.constant 0.000000e+00 : bf16
    %2 = vector.broadcast %cst_1 : bf16 to vector<8x128xbf16>
    %c0_2 = arith.constant 0 : index
    %c512 = arith.constant 512 : index
    %3 = vector.load %arg12[%c0_2, %c512] : memref<8x640xbf16, #tpu.memory_space<vmem>>, vector<8x128xbf16>
    tpu.vector_store %arg12[%c0_2, %c512], %2 {strides = array<i32>} : memref<8x640xbf16, #tpu.memory_space<vmem>>, vector<8x128xbf16>,
    %cst_3 = arith.constant 0.000000e+00 : bf16
    %4 = vector.broadcast %cst_3 : bf16 to vector<4x24xbf16>
    %c0_4 = arith.constant 0 : index
    %c128 = arith.constant 128 : index
    %5 = vector.load %arg12[%c0_4, %c128] : memref<8x640xbf16, #tpu.memory_space<vmem>>, vector<4x24xbf16>
    tpu.vector_store %arg12[%c0_4, %c128], %4 {strides = array<i32>} : memref<8x640xbf16, #tpu.memory_space<vmem>>, vector<4x24xbf16>,
    %c0_5 = arith.constant 0 : index
    %c0_6 = arith.constant 0 : index
    %c0_7 = arith.constant 0 : index
    %c0_8 = arith.constant 0 : index
    %6 = vector.load %arg2[%c0_5, %c0_6, %c0_7, %c0_8] : memref<1x4x16x16xf32, #tpu.memory_space<vmem>>, vector<1x4x1x16xf32>
    %7 = vector.shape_cast %6 : vector<1x4x1x16xf32> to vector<4x16xf32>
    %8 = arith.truncf %7 : vector<4x16xf32> to vector<4x16xbf16>
    %c0_9 = arith.constant 0 : index
    %c129 = arith.constant 129 : index
    %9 = vector.load %arg12[%c0_9, %c129] : memref<8x640xbf16, #tpu.memory_space<vmem>>, vector<4x16xbf16>
    tpu.vector_store %arg12[%c0_9, %c129], %8 {strides = array<i32>} : memref<8x640xbf16, #tpu.memory_space<vmem>>, vector<4x16xbf16>,
    %c0_10 = arith.constant 0 : index
    %c152 = arith.constant 152 : index
    %10 = vector.load %arg12[%c0_10, %c152] : memref<8x640xbf16, #tpu.memory_space<vmem>>, vector<4x24xbf16>
    tpu.vector_store %arg12[%c0_10, %c152], %4 {strides = array<i32>} : memref<8x640xbf16, #tpu.memory_space<vmem>>, vector<4x24xbf16>,
    %c0_11 = arith.constant 0 : index
    %c0_12 = arith.constant 0 : index
    %c1 = arith.constant 1 : index
    %c0_13 = arith.constant 0 : index
    %11 = vector.load %arg2[%c0_11, %c0_12, %c1, %c0_13] : memref<1x4x16x16xf32, #tpu.memory_space<vmem>>, vector<1x4x1x16xf32>
    %12 = vector.shape_cast %11 : vector<1x4x1x16xf32> to vector<4x16xf32>
    %13 = arith.truncf %12 : vector<4x16xf32> to vector<4x16xbf16>
    %c0_14 = arith.constant 0 : index
    %c153 = arith.constant 153 : index
    %14 = vector.load %arg12[%c0_14, %c153] : memref<8x640xbf16, #tpu.memory_space<vmem>>, vector<4x16xbf16>
    tpu.vector_store %arg12[%c0_14, %c153], %13 {strides = array<i32>} : memref<8x640xbf16, #tpu.memory_space<vmem>>, vector<4x16xbf16>,
    %c0_15 = arith.constant 0 : index
    %c176 = arith.constant 176 : index
    %15 = vector.load %arg12[%c0_15, %c176] : memref<8x640xbf16, #tpu.memory_space<vmem>>, vector<4x24xbf16>
    tpu.vector_store %arg12[%c0_15, %c176], %4 {strides = array<i32>} : memref<8x640xbf16, #tpu.memory_space<vmem>>, vector<4x24xbf16>,
    %c0_16 = arith.constant 0 : index
    %c0_17 = arith.constant 0 : index
    %c2 = arith.constant 2 : index
    %c0_18 = arith.constant 0 : index
    %16 = vector.load %arg2[%c0_16, %c0_17, %c2, %c0_18] : memref<1x4x16x16xf32, #tpu.memory_space<vmem>>, vector<1x4x1x16xf32>
    %17 = vector.shape_cast %16 : vector<1x4x1x16xf32> to vector<4x16xf32>
    %18 = arith.truncf %17 : vector<4x16xf32> to vector<4x16xbf16>
    %c0_19 = arith.constant 0 : index
    %c177 = arith.constant 177 : index
    %19 = vector.load %arg12[%c0_19, %c177] : memref<8x640xbf16, #tpu.memory_space<vmem>>, vector<4x16xbf16>
    tpu.vector_store %arg12[%c0_19, %c177], %18 {strides = array<i32>} : memref<8x640xbf16, #tpu.memory_space<vmem>>, vector<4x16xbf16>,
    %c0_20 = arith.constant 0 : index
    %c200 = arith.constant 200 : index
    %20 = vector.load %arg12[%c0_20, %c200] : memref<8x640xbf16, #tpu.memory_space<vmem>>, vector<4x24xbf16>
    tpu.vector_store %arg12[%c0_20, %c200], %4 {strides = array<i32>} : memref<8x640xbf16, #tpu.memory_space<vmem>>, vector<4x24xbf16>,
    %c0_21 = arith.constant 0 : index
    %c0_22 = arith.constant 0 : index
    %c3 = arith.constant 3 : index
    %c0_23 = arith.constant 0 : index
    %21 = vector.load %arg2[%c0_21, %c0_22, %c3, %c0_23] : memref<1x4x16x16xf32, #tpu.memory_space<vmem>>, vector<1x4x1x16xf32>
    %22 = vector.shape_cast %21 : vector<1x4x1x16xf32> to vector<4x16xf32>
    %23 = arith.truncf %22 : vector<4x16xf32> to vector<4x16xbf16>
    %c0_24 = arith.constant 0 : index
    %c201 = arith.constant 201 : index
    %24 = vector.load %arg12[%c0_24, %c201] : memref<8x640xbf16, #tpu.memory_space<vmem>>, vector<4x16xbf16>
    tpu.vector_store %arg12[%c0_24, %c201], %23 {strides = array<i32>} : memref<8x640xbf16, #tpu.memory_space<vmem>>, vector<4x16xbf16>,
    %c0_25 = arith.constant 0 : index
    %c224 = arith.constant 224 : index
    %25 = vector.load %arg12[%c0_25, %c224] : memref<8x640xbf16, #tpu.memory_space<vmem>>, vector<4x24xbf16>
    tpu.vector_store %arg12[%c0_25, %c224], %4 {strides = array<i32>} : memref<8x640xbf16, #tpu.memory_space<vmem>>, vector<4x24xbf16>,
    %c0_26 = arith.constant 0 : index
    %c0_27 = arith.constant 0 : index
    %c4 = arith.constant 4 : index
    %c0_28 = arith.constant 0 : index
    %26 = vector.load %arg2[%c0_26, %c0_27, %c4, %c0_28] : memref<1x4x16x16xf32, #tpu.memory_space<vmem>>, vector<1x4x1x16xf32>
    %27 = vector.shape_cast %26 : vector<1x4x1x16xf32> to vector<4x16xf32>
    %28 = arith.truncf %27 : vector<4x16xf32> to vector<4x16xbf16>
    %c0_29 = arith.constant 0 : index
    %c225 = arith.constant 225 : index
    %29 = vector.load %arg12[%c0_29, %c225] : memref<8x640xbf16, #tpu.memory_space<vmem>>, vector<4x16xbf16>
    tpu.vector_store %arg12[%c0_29, %c225], %28 {strides = array<i32>} : memref<8x640xbf16, #tpu.memory_space<vmem>>, vector<4x16xbf16>,
    %c0_30 = arith.constant 0 : index
    %c248 = arith.constant 248 : index
    %30 = vector.load %arg12[%c0_30, %c248] : memref<8x640xbf16, #tpu.memory_space<vmem>>, vector<4x24xbf16>
    tpu.vector_store %arg12[%c0_30, %c248], %4 {strides = array<i32>} : memref<8x640xbf16, #tpu.memory_space<vmem>>, vector<4x24xbf16>,
    %c0_31 = arith.constant 0 : index
    %c0_32 = arith.constant 0 : index
    %c5 = arith.constant 5 : index
    %c0_33 = arith.constant 0 : index
    %31 = vector.load %arg2[%c0_31, %c0_32, %c5, %c0_33] : memref<1x4x16x16xf32, #tpu.memory_space<vmem>>, vector<1x4x1x16xf32>
    %32 = vector.shape_cast %31 : vector<1x4x1x16xf32> to vector<4x16xf32>
    %33 = arith.truncf %32 : vector<4x16xf32> to vector<4x16xbf16>
    %c0_34 = arith.constant 0 : index
    %c249 = arith.constant 249 : index
    %34 = vector.load %arg12[%c0_34, %c249] : memref<8x640xbf16, #tpu.memory_space<vmem>>, vector<4x16xbf16>
    tpu.vector_store %arg12[%c0_34, %c249], %33 {strides = array<i32>} : memref<8x640xbf16, #tpu.memory_space<vmem>>, vector<4x16xbf16>,
    %c0_35 = arith.constant 0 : index
    %c272 = arith.constant 272 : index
    %35 = vector.load %arg12[%c0_35, %c272] : memref<8x640xbf16, #tpu.memory_space<vmem>>, vector<4x24xbf16>
    tpu.vector_store %arg12[%c0_35, %c272], %4 {strides = array<i32>} : memref<8x640xbf16, #tpu.memory_space<vmem>>, vector<4x24xbf16>,
    %c0_36 = arith.constant 0 : index
    %c0_37 = arith.constant 0 : index
    %c6 = arith.constant 6 : index
    %c0_38 = arith.constant 0 : index
    %36 = vector.load %arg2[%c0_36, %c0_37, %c6, %c0_38] : memref<1x4x16x16xf32, #tpu.memory_space<vmem>>, vector<1x4x1x16xf32>
    %37 = vector.shape_cast %36 : vector<1x4x1x16xf32> to vector<4x16xf32>
    %38 = arith.truncf %37 : vector<4x16xf32> to vector<4x16xbf16>
    %c0_39 = arith.constant 0 : index
    %c273 = arith.constant 273 : index
    %39 = vector.load %arg12[%c0_39, %c273] : memref<8x640xbf16, #tpu.memory_space<vmem>>, vector<4x16xbf16>
    tpu.vector_store %arg12[%c0_39, %c273], %38 {strides = array<i32>} : memref<8x640xbf16, #tpu.memory_space<vmem>>, vector<4x16xbf16>,
    %c0_40 = arith.constant 0 : index
    %c296 = arith.constant 296 : index
    %40 = vector.load %arg12[%c0_40, %c296] : memref<8x640xbf16, #tpu.memory_space<vmem>>, vector<4x24xbf16>
    tpu.vector_store %arg12[%c0_40, %c296], %4 {strides = array<i32>} : memref<8x640xbf16, #tpu.memory_space<vmem>>, vector<4x24xbf16>,
    %c0_41 = arith.constant 0 : index
    %c0_42 = arith.constant 0 : index
    %c7 = arith.constant 7 : index
    %c0_43 = arith.constant 0 : index
    %41 = vector.load %arg2[%c0_41, %c0_42, %c7, %c0_43] : memref<1x4x16x16xf32, #tpu.memory_space<vmem>>, vector<1x4x1x16xf32>
    %42 = vector.shape_cast %41 : vector<1x4x1x16xf32> to vector<4x16xf32>
    %43 = arith.truncf %42 : vector<4x16xf32> to vector<4x16xbf16>
    %c0_44 = arith.constant 0 : index
    %c297 = arith.constant 297 : index
    %44 = vector.load %arg12[%c0_44, %c297] : memref<8x640xbf16, #tpu.memory_space<vmem>>, vector<4x16xbf16>
    tpu.vector_store %arg12[%c0_44, %c297], %43 {strides = array<i32>} : memref<8x640xbf16, #tpu.memory_space<vmem>>, vector<4x16xbf16>,
    %c0_45 = arith.constant 0 : index
    %c320 = arith.constant 320 : index
    %45 = vector.load %arg12[%c0_45, %c320] : memref<8x640xbf16, #tpu.memory_space<vmem>>, vector<4x24xbf16>
    tpu.vector_store %arg12[%c0_45, %c320], %4 {strides = array<i32>} : memref<8x640xbf16, #tpu.memory_space<vmem>>, vector<4x24xbf16>,
    %c0_46 = arith.constant 0 : index
    %c0_47 = arith.constant 0 : index
    %c8 = arith.constant 8 : index
    %c0_48 = arith.constant 0 : index
    %46 = vector.load %arg2[%c0_46, %c0_47, %c8, %c0_48] : memref<1x4x16x16xf32, #tpu.memory_space<vmem>>, vector<1x4x1x16xf32>
    %47 = vector.shape_cast %46 : vector<1x4x1x16xf32> to vector<4x16xf32>
    %48 = arith.truncf %47 : vector<4x16xf32> to vector<4x16xbf16>
    %c0_49 = arith.constant 0 : index
    %c321 = arith.constant 321 : index
    %49 = vector.load %arg12[%c0_49, %c321] : memref<8x640xbf16, #tpu.memory_space<vmem>>, vector<4x16xbf16>
    tpu.vector_store %arg12[%c0_49, %c321], %48 {strides = array<i32>} : memref<8x640xbf16, #tpu.memory_space<vmem>>, vector<4x16xbf16>,
    %c0_50 = arith.constant 0 : index
    %c344 = arith.constant 344 : index
    %50 = vector.load %arg12[%c0_50, %c344] : memref<8x640xbf16, #tpu.memory_space<vmem>>, vector<4x24xbf16>
    tpu.vector_store %arg12[%c0_50, %c344], %4 {strides = array<i32>} : memref<8x640xbf16, #tpu.memory_space<vmem>>, vector<4x24xbf16>,
    %c0_51 = arith.constant 0 : index
    %c0_52 = arith.constant 0 : index
    %c9 = arith.constant 9 : index
    %c0_53 = arith.constant 0 : index
    %51 = vector.load %arg2[%c0_51, %c0_52, %c9, %c0_53] : memref<1x4x16x16xf32, #tpu.memory_space<vmem>>, vector<1x4x1x16xf32>
    %52 = vector.shape_cast %51 : vector<1x4x1x16xf32> to vector<4x16xf32>
    %53 = arith.truncf %52 : vector<4x16xf32> to vector<4x16xbf16>
    %c0_54 = arith.constant 0 : index
    %c345 = arith.constant 345 : index
    %54 = vector.load %arg12[%c0_54, %c345] : memref<8x640xbf16, #tpu.memory_space<vmem>>, vector<4x16xbf16>
    tpu.vector_store %arg12[%c0_54, %c345], %53 {strides = array<i32>} : memref<8x640xbf16, #tpu.memory_space<vmem>>, vector<4x16xbf16>,
    %c0_55 = arith.constant 0 : index
    %c368 = arith.constant 368 : index
    %55 = vector.load %arg12[%c0_55, %c368] : memref<8x640xbf16, #tpu.memory_space<vmem>>, vector<4x24xbf16>
    tpu.vector_store %arg12[%c0_55, %c368], %4 {strides = array<i32>} : memref<8x640xbf16, #tpu.memory_space<vmem>>, vector<4x24xbf16>,
    %c0_56 = arith.constant 0 : index
    %c0_57 = arith.constant 0 : index
    %c10 = arith.constant 10 : index
    %c0_58 = arith.constant 0 : index
    %56 = vector.load %arg2[%c0_56, %c0_57, %c10, %c0_58] : memref<1x4x16x16xf32, #tpu.memory_space<vmem>>, vector<1x4x1x16xf32>
    %57 = vector.shape_cast %56 : vector<1x4x1x16xf32> to vector<4x16xf32>
    %58 = arith.truncf %57 : vector<4x16xf32> to vector<4x16xbf16>
    %c0_59 = arith.constant 0 : index
    %c369 = arith.constant 369 : index
    %59 = vector.load %arg12[%c0_59, %c369] : memref<8x640xbf16, #tpu.memory_space<vmem>>, vector<4x16xbf16>
    tpu.vector_store %arg12[%c0_59, %c369], %58 {strides = array<i32>} : memref<8x640xbf16, #tpu.memory_space<vmem>>, vector<4x16xbf16>,
    %c0_60 = arith.constant 0 : index
    %c392 = arith.constant 392 : index
    %60 = vector.load %arg12[%c0_60, %c392] : memref<8x640xbf16, #tpu.memory_space<vmem>>, vector<4x24xbf16>
    tpu.vector_store %arg12[%c0_60, %c392], %4 {strides = array<i32>} : memref<8x640xbf16, #tpu.memory_space<vmem>>, vector<4x24xbf16>,
    %c0_61 = arith.constant 0 : index
    %c0_62 = arith.constant 0 : index
    %c11 = arith.constant 11 : index
    %c0_63 = arith.constant 0 : index
    %61 = vector.load %arg2[%c0_61, %c0_62, %c11, %c0_63] : memref<1x4x16x16xf32, #tpu.memory_space<vmem>>, vector<1x4x1x16xf32>
    %62 = vector.shape_cast %61 : vector<1x4x1x16xf32> to vector<4x16xf32>
    %63 = arith.truncf %62 : vector<4x16xf32> to vector<4x16xbf16>
    %c0_64 = arith.constant 0 : index
    %c393 = arith.constant 393 : index
    %64 = vector.load %arg12[%c0_64, %c393] : memref<8x640xbf16, #tpu.memory_space<vmem>>, vector<4x16xbf16>
    tpu.vector_store %arg12[%c0_64, %c393], %63 {strides = array<i32>} : memref<8x640xbf16, #tpu.memory_space<vmem>>, vector<4x16xbf16>,
    %c0_65 = arith.constant 0 : index
    %c416 = arith.constant 416 : index
    %65 = vector.load %arg12[%c0_65, %c416] : memref<8x640xbf16, #tpu.memory_space<vmem>>, vector<4x24xbf16>
    tpu.vector_store %arg12[%c0_65, %c416], %4 {strides = array<i32>} : memref<8x640xbf16, #tpu.memory_space<vmem>>, vector<4x24xbf16>,
    %c0_66 = arith.constant 0 : index
    %c0_67 = arith.constant 0 : index
    %c12 = arith.constant 12 : index
    %c0_68 = arith.constant 0 : index
    %66 = vector.load %arg2[%c0_66, %c0_67, %c12, %c0_68] : memref<1x4x16x16xf32, #tpu.memory_space<vmem>>, vector<1x4x1x16xf32>
    %67 = vector.shape_cast %66 : vector<1x4x1x16xf32> to vector<4x16xf32>
    %68 = arith.truncf %67 : vector<4x16xf32> to vector<4x16xbf16>
    %c0_69 = arith.constant 0 : index
    %c417 = arith.constant 417 : index
    %69 = vector.load %arg12[%c0_69, %c417] : memref<8x640xbf16, #tpu.memory_space<vmem>>, vector<4x16xbf16>
    tpu.vector_store %arg12[%c0_69, %c417], %68 {strides = array<i32>} : memref<8x640xbf16, #tpu.memory_space<vmem>>, vector<4x16xbf16>,
    %c0_70 = arith.constant 0 : index
    %c440 = arith.constant 440 : index
    %70 = vector.load %arg12[%c0_70, %c440] : memref<8x640xbf16, #tpu.memory_space<vmem>>, vector<4x24xbf16>
    tpu.vector_store %arg12[%c0_70, %c440], %4 {strides = array<i32>} : memref<8x640xbf16, #tpu.memory_space<vmem>>, vector<4x24xbf16>,
    %c0_71 = arith.constant 0 : index
    %c0_72 = arith.constant 0 : index
    %c13 = arith.constant 13 : index
    %c0_73 = arith.constant 0 : index
    %71 = vector.load %arg2[%c0_71, %c0_72, %c13, %c0_73] : memref<1x4x16x16xf32, #tpu.memory_space<vmem>>, vector<1x4x1x16xf32>
    %72 = vector.shape_cast %71 : vector<1x4x1x16xf32> to vector<4x16xf32>
    %73 = arith.truncf %72 : vector<4x16xf32> to vector<4x16xbf16>
    %c0_74 = arith.constant 0 : index
    %c441 = arith.constant 441 : index
    %74 = vector.load %arg12[%c0_74, %c441] : memref<8x640xbf16, #tpu.memory_space<vmem>>, vector<4x16xbf16>
    tpu.vector_store %arg12[%c0_74, %c441], %73 {strides = array<i32>} : memref<8x640xbf16, #tpu.memory_space<vmem>>, vector<4x16xbf16>,
    %c0_75 = arith.constant 0 : index
    %c464 = arith.constant 464 : index
    %75 = vector.load %arg12[%c0_75, %c464] : memref<8x640xbf16, #tpu.memory_space<vmem>>, vector<4x24xbf16>
    tpu.vector_store %arg12[%c0_75, %c464], %4 {strides = array<i32>} : memref<8x640xbf16, #tpu.memory_space<vmem>>, vector<4x24xbf16>,
    %c0_76 = arith.constant 0 : index
    %c0_77 = arith.constant 0 : index
    %c14 = arith.constant 14 : index
    %c0_78 = arith.constant 0 : index
    %76 = vector.load %arg2[%c0_76, %c0_77, %c14, %c0_78] : memref<1x4x16x16xf32, #tpu.memory_space<vmem>>, vector<1x4x1x16xf32>
    %77 = vector.shape_cast %76 : vector<1x4x1x16xf32> to vector<4x16xf32>
    %78 = arith.truncf %77 : vector<4x16xf32> to vector<4x16xbf16>
    %c0_79 = arith.constant 0 : index
    %c465 = arith.constant 465 : index
    %79 = vector.load %arg12[%c0_79, %c465] : memref<8x640xbf16, #tpu.memory_space<vmem>>, vector<4x16xbf16>
    tpu.vector_store %arg12[%c0_79, %c465], %78 {strides = array<i32>} : memref<8x640xbf16, #tpu.memory_space<vmem>>, vector<4x16xbf16>,
    %c0_80 = arith.constant 0 : index
    %c488 = arith.constant 488 : index
    %80 = vector.load %arg12[%c0_80, %c488] : memref<8x640xbf16, #tpu.memory_space<vmem>>, vector<4x24xbf16>
    tpu.vector_store %arg12[%c0_80, %c488], %4 {strides = array<i32>} : memref<8x640xbf16, #tpu.memory_space<vmem>>, vector<4x24xbf16>,
    %c0_81 = arith.constant 0 : index
    %c0_82 = arith.constant 0 : index
    %c15 = arith.constant 15 : index
    %c0_83 = arith.constant 0 : index
    %81 = vector.load %arg2[%c0_81, %c0_82, %c15, %c0_83] : memref<1x4x16x16xf32, #tpu.memory_space<vmem>>, vector<1x4x1x16xf32>
    %82 = vector.shape_cast %81 : vector<1x4x1x16xf32> to vector<4x16xf32>
    %83 = arith.truncf %82 : vector<4x16xf32> to vector<4x16xbf16>
    %c0_84 = arith.constant 0 : index
    %c489 = arith.constant 489 : index
    %84 = vector.load %arg12[%c0_84, %c489] : memref<8x640xbf16, #tpu.memory_space<vmem>>, vector<4x16xbf16>
    tpu.vector_store %arg12[%c0_84, %c489], %83 {strides = array<i32>} : memref<8x640xbf16, #tpu.memory_space<vmem>>, vector<4x16xbf16>,
    %c0_85 = arith.constant 0 : index
    %c0_86 = arith.constant 0 : index
    %85 = vector.load %arg3[%c0_85, %c0_86] : memref<8x24xf32, #tpu.memory_space<vmem>>, vector<8x24xf32>
    %c0_87 = arith.constant 0 : index
    %c0_88 = arith.constant 0 : index
    %c0_89 = arith.constant 0 : index
    %c0_90 = arith.constant 0 : index
    %86 = vector.load %arg1[%c0_87, %c0_88, %c0_89, %c0_90] : memref<1x4x8x8xf32, #tpu.memory_space<vmem>>, vector<1x4x1x8xf32>
    %87 = vector.shape_cast %86 : vector<1x4x1x8xf32> to vector<4x8xf32>
    %cst_91 = arith.constant 1.000000e+00 : f32
    %88 = vector.broadcast %cst_91 : f32 to vector<4x8xf32>
    %89 = arith.mulf %88, %87 : vector<4x8xf32>
    %cst_92 = arith.constant dense<0.000000e+00> : vector<4x24xf32>
    %90 = tpu.matmul %89, %85, %cst_92 {dimension_numbers = #tpu.dot_dimension_numbers<[1], [0], [0], [1], [0, 0, 1, 1], [], []>} : vector<4x8xf32>, vector<8x24xf32>, vector<4x24xf32> -> vector<4x24xf32>
    %91 = arith.truncf %90 : vector<4x24xf32> to vector<4x24xbf16>
    %c4_93 = arith.constant 4 : index
    %c128_94 = arith.constant 128 : index
    %92 = vector.load %arg12[%c4_93, %c128_94] : memref<8x640xbf16, #tpu.memory_space<vmem>>, vector<4x24xbf16>
    tpu.vector_store %arg12[%c4_93, %c128_94], %91 {strides = array<i32>} : memref<8x640xbf16, #tpu.memory_space<vmem>>, vector<4x24xbf16>,
    %c0_95 = arith.constant 0 : index
    %c0_96 = arith.constant 0 : index
    %c0_97 = arith.constant 0 : index
    %c0_98 = arith.constant 0 : index
    %93 = vector.load %arg1[%c0_95, %c0_96, %c0_97, %c0_98] : memref<1x4x8x8xf32, #tpu.memory_space<vmem>>, vector<1x4x1x8xf32>
    %94 = vector.shape_cast %93 : vector<1x4x1x8xf32> to vector<4x8xf32>
    %cst_99 = arith.constant 0.533333361 : f32
    %95 = vector.broadcast %cst_99 : f32 to vector<4x8xf32>
    %96 = arith.mulf %95, %94 : vector<4x8xf32>
    %c0_100 = arith.constant 0 : index
    %c0_101 = arith.constant 0 : index
    %c1_102 = arith.constant 1 : index
    %c0_103 = arith.constant 0 : index
    %97 = vector.load %arg1[%c0_100, %c0_101, %c1_102, %c0_103] : memref<1x4x8x8xf32, #tpu.memory_space<vmem>>, vector<1x4x1x8xf32>
    %98 = vector.shape_cast %97 : vector<1x4x1x8xf32> to vector<4x8xf32>
    %cst_104 = arith.constant 0.466666669 : f32
    %99 = vector.broadcast %cst_104 : f32 to vector<4x8xf32>
    %100 = arith.mulf %99, %98 : vector<4x8xf32>
    %101 = arith.addf %96, %100 : vector<4x8xf32>
    %cst_105 = arith.constant dense<0.000000e+00> : vector<4x24xf32>
    %102 = tpu.matmul %101, %85, %cst_105 {dimension_numbers = #tpu.dot_dimension_numbers<[1], [0], [0], [1], [0, 0, 1, 1], [], []>} : vector<4x8xf32>, vector<8x24xf32>, vector<4x24xf32> -> vector<4x24xf32>
    %103 = arith.truncf %102 : vector<4x24xf32> to vector<4x24xbf16>
    %c4_106 = arith.constant 4 : index
    %c152_107 = arith.constant 152 : index
    %104 = vector.load %arg12[%c4_106, %c152_107] : memref<8x640xbf16, #tpu.memory_space<vmem>>, vector<4x24xbf16>
    tpu.vector_store %arg12[%c4_106, %c152_107], %103 {strides = array<i32>} : memref<8x640xbf16, #tpu.memory_space<vmem>>, vector<4x24xbf16>,
    %c0_108 = arith.constant 0 : index
    %c0_109 = arith.constant 0 : index
    %c0_110 = arith.constant 0 : index
    %c0_111 = arith.constant 0 : index
    %105 = vector.load %arg1[%c0_108, %c0_109, %c0_110, %c0_111] : memref<1x4x8x8xf32, #tpu.memory_space<vmem>>, vector<1x4x1x8xf32>
    %106 = vector.shape_cast %105 : vector<1x4x1x8xf32> to vector<4x8xf32>
    %cst_112 = arith.constant 0.0666666701 : f32
    %107 = vector.broadcast %cst_112 : f32 to vector<4x8xf32>
    %108 = arith.mulf %107, %106 : vector<4x8xf32>
    %c0_113 = arith.constant 0 : index
    %c0_114 = arith.constant 0 : index
    %c1_115 = arith.constant 1 : index
    %c0_116 = arith.constant 0 : index
    %109 = vector.load %arg1[%c0_113, %c0_114, %c1_115, %c0_116] : memref<1x4x8x8xf32, #tpu.memory_space<vmem>>, vector<1x4x1x8xf32>
    %110 = vector.shape_cast %109 : vector<1x4x1x8xf32> to vector<4x8xf32>
    %cst_117 = arith.constant 0.933333337 : f32
    %111 = vector.broadcast %cst_117 : f32 to vector<4x8xf32>
    %112 = arith.mulf %111, %110 : vector<4x8xf32>
    %113 = arith.addf %108, %112 : vector<4x8xf32>
    %cst_118 = arith.constant dense<0.000000e+00> : vector<4x24xf32>
    %114 = tpu.matmul %113, %85, %cst_118 {dimension_numbers = #tpu.dot_dimension_numbers<[1], [0], [0], [1], [0, 0, 1, 1], [], []>} : vector<4x8xf32>, vector<8x24xf32>, vector<4x24xf32> -> vector<4x24xf32>
    %115 = arith.truncf %114 : vector<4x24xf32> to vector<4x24xbf16>
    %c4_119 = arith.constant 4 : index
    %c176_120 = arith.constant 176 : index
    %116 = vector.load %arg12[%c4_119, %c176_120] : memref<8x640xbf16, #tpu.memory_space<vmem>>, vector<4x24xbf16>
    tpu.vector_store %arg12[%c4_119, %c176_120], %115 {strides = array<i32>} : memref<8x640xbf16, #tpu.memory_space<vmem>>, vector<4x24xbf16>,
    %c0_121 = arith.constant 0 : index
    %c0_122 = arith.constant 0 : index
    %c1_123 = arith.constant 1 : index
    %c0_124 = arith.constant 0 : index
    %117 = vector.load %arg1[%c0_121, %c0_122, %c1_123, %c0_124] : memref<1x4x8x8xf32, #tpu.memory_space<vmem>>, vector<1x4x1x8xf32>
    %118 = vector.shape_cast %117 : vector<1x4x1x8xf32> to vector<4x8xf32>
    %cst_125 = arith.constant 6.000000e-01 : f32
    %119 = vector.broadcast %cst_125 : f32 to vector<4x8xf32>
    %120 = arith.mulf %119, %118 : vector<4x8xf32>
    %c0_126 = arith.constant 0 : index
    %c0_127 = arith.constant 0 : index
    %c2_128 = arith.constant 2 : index
    %c0_129 = arith.constant 0 : index
    %121 = vector.load %arg1[%c0_126, %c0_127, %c2_128, %c0_129] : memref<1x4x8x8xf32, #tpu.memory_space<vmem>>, vector<1x4x1x8xf32>
    %122 = vector.shape_cast %121 : vector<1x4x1x8xf32> to vector<4x8xf32>
    %cst_130 = arith.constant 4.000000e-01 : f32
    %123 = vector.broadcast %cst_130 : f32 to vector<4x8xf32>
    %124 = arith.mulf %123, %122 : vector<4x8xf32>
    %125 = arith.addf %120, %124 : vector<4x8xf32>
    %cst_131 = arith.constant dense<0.000000e+00> : vector<4x24xf32>
    %126 = tpu.matmul %125, %85, %cst_131 {dimension_numbers = #tpu.dot_dimension_numbers<[1], [0], [0], [1], [0, 0, 1, 1], [], []>} : vector<4x8xf32>, vector<8x24xf32>, vector<4x24xf32> -> vector<4x24xf32>
    %127 = arith.truncf %126 : vector<4x24xf32> to vector<4x24xbf16>
    %c4_132 = arith.constant 4 : index
    %c200_133 = arith.constant 200 : index
    %128 = vector.load %arg12[%c4_132, %c200_133] : memref<8x640xbf16, #tpu.memory_space<vmem>>, vector<4x24xbf16>
    tpu.vector_store %arg12[%c4_132, %c200_133], %127 {strides = array<i32>} : memref<8x640xbf16, #tpu.memory_space<vmem>>, vector<4x24xbf16>,
    %c0_134 = arith.constant 0 : index
    %c0_135 = arith.constant 0 : index
    %c1_136 = arith.constant 1 : index
    %c0_137 = arith.constant 0 : index
    %129 = vector.load %arg1[%c0_134, %c0_135, %c1_136, %c0_137] : memref<1x4x8x8xf32, #tpu.memory_space<vmem>>, vector<1x4x1x8xf32>
    %130 = vector.shape_cast %129 : vector<1x4x1x8xf32> to vector<4x8xf32>
    %cst_138 = arith.constant 0.13333334 : f32
    %131 = vector.broadcast %cst_138 : f32 to vector<4x8xf32>
    %132 = arith.mulf %131, %130 : vector<4x8xf32>
    %c0_139 = arith.constant 0 : index
    %c0_140 = arith.constant 0 : index
    %c2_141 = arith.constant 2 : index
    %c0_142 = arith.constant 0 : index
    %133 = vector.load %arg1[%c0_139, %c0_140, %c2_141, %c0_142] : memref<1x4x8x8xf32, #tpu.memory_space<vmem>>, vector<1x4x1x8xf32>
    %134 = vector.shape_cast %133 : vector<1x4x1x8xf32> to vector<4x8xf32>
    %cst_143 = arith.constant 0.866666674 : f32
    %135 = vector.broadcast %cst_143 : f32 to vector<4x8xf32>
    %136 = arith.mulf %135, %134 : vector<4x8xf32>
    %137 = arith.addf %132, %136 : vector<4x8xf32>
    %cst_144 = arith.constant dense<0.000000e+00> : vector<4x24xf32>
    %138 = tpu.matmul %137, %85, %cst_144 {dimension_numbers = #tpu.dot_dimension_numbers<[1], [0], [0], [1], [0, 0, 1, 1], [], []>} : vector<4x8xf32>, vector<8x24xf32>, vector<4x24xf32> -> vector<4x24xf32>
    %139 = arith.truncf %138 : vector<4x24xf32> to vector<4x24xbf16>
    %c4_145 = arith.constant 4 : index
    %c224_146 = arith.constant 224 : index
    %140 = vector.load %arg12[%c4_145, %c224_146] : memref<8x640xbf16, #tpu.memory_space<vmem>>, vector<4x24xbf16>
    tpu.vector_store %arg12[%c4_145, %c224_146], %139 {strides = array<i32>} : memref<8x640xbf16, #tpu.memory_space<vmem>>, vector<4x24xbf16>,
    %c0_147 = arith.constant 0 : index
    %c0_148 = arith.constant 0 : index
    %c2_149 = arith.constant 2 : index
    %c0_150 = arith.constant 0 : index
    %141 = vector.load %arg1[%c0_147, %c0_148, %c2_149, %c0_150] : memref<1x4x8x8xf32, #tpu.memory_space<vmem>>, vector<1x4x1x8xf32>
    %142 = vector.shape_cast %141 : vector<1x4x1x8xf32> to vector<4x8xf32>
    %cst_151 = arith.constant 0.666666686 : f32
    %143 = vector.broadcast %cst_151 : f32 to vector<4x8xf32>
    %144 = arith.mulf %143, %142 : vector<4x8xf32>
    %c0_152 = arith.constant 0 : index
    %c0_153 = arith.constant 0 : index
    %c3_154 = arith.constant 3 : index
    %c0_155 = arith.constant 0 : index
    %145 = vector.load %arg1[%c0_152, %c0_153, %c3_154, %c0_155] : memref<1x4x8x8xf32, #tpu.memory_space<vmem>>, vector<1x4x1x8xf32>
    %146 = vector.shape_cast %145 : vector<1x4x1x8xf32> to vector<4x8xf32>
    %cst_156 = arith.constant 0.333333343 : f32
    %147 = vector.broadcast %cst_156 : f32 to vector<4x8xf32>
    %148 = arith.mulf %147, %146 : vector<4x8xf32>
    %149 = arith.addf %144, %148 : vector<4x8xf32>
    %cst_157 = arith.constant dense<0.000000e+00> : vector<4x24xf32>
    %150 = tpu.matmul %149, %85, %cst_157 {dimension_numbers = #tpu.dot_dimension_numbers<[1], [0], [0], [1], [0, 0, 1, 1], [], []>} : vector<4x8xf32>, vector<8x24xf32>, vector<4x24xf32> -> vector<4x24xf32>
    %151 = arith.truncf %150 : vector<4x24xf32> to vector<4x24xbf16>
    %c4_158 = arith.constant 4 : index
    %c248_159 = arith.constant 248 : index
    %152 = vector.load %arg12[%c4_158, %c248_159] : memref<8x640xbf16, #tpu.memory_space<vmem>>, vector<4x24xbf16>
    tpu.vector_store %arg12[%c4_158, %c248_159], %151 {strides = array<i32>} : memref<8x640xbf16, #tpu.memory_space<vmem>>, vector<4x24xbf16>,
    %c0_160 = arith.constant 0 : index
    %c0_161 = arith.constant 0 : index
    %c2_162 = arith.constant 2 : index
    %c0_163 = arith.constant 0 : index
    %153 = vector.load %arg1[%c0_160, %c0_161, %c2_162, %c0_163] : memref<1x4x8x8xf32, #tpu.memory_space<vmem>>, vector<1x4x1x8xf32>
    %154 = vector.shape_cast %153 : vector<1x4x1x8xf32> to vector<4x8xf32>
    %cst_164 = arith.constant 2.000000e-01 : f32
    %155 = vector.broadcast %cst_164 : f32 to vector<4x8xf32>
    %156 = arith.mulf %155, %154 : vector<4x8xf32>
    %c0_165 = arith.constant 0 : index
    %c0_166 = arith.constant 0 : index
    %c3_167 = arith.constant 3 : index
    %c0_168 = arith.constant 0 : index
    %157 = vector.load %arg1[%c0_165, %c0_166, %c3_167, %c0_168] : memref<1x4x8x8xf32, #tpu.memory_space<vmem>>, vector<1x4x1x8xf32>
    %158 = vector.shape_cast %157 : vector<1x4x1x8xf32> to vector<4x8xf32>
    %cst_169 = arith.constant 8.000000e-01 : f32
    %159 = vector.broadcast %cst_169 : f32 to vector<4x8xf32>
    %160 = arith.mulf %159, %158 : vector<4x8xf32>
    %161 = arith.addf %156, %160 : vector<4x8xf32>
    %cst_170 = arith.constant dense<0.000000e+00> : vector<4x24xf32>
    %162 = tpu.matmul %161, %85, %cst_170 {dimension_numbers = #tpu.dot_dimension_numbers<[1], [0], [0], [1], [0, 0, 1, 1], [], []>} : vector<4x8xf32>, vector<8x24xf32>, vector<4x24xf32> -> vector<4x24xf32>
    %163 = arith.truncf %162 : vector<4x24xf32> to vector<4x24xbf16>
    %c4_171 = arith.constant 4 : index
    %c272_172 = arith.constant 272 : index
    %164 = vector.load %arg12[%c4_171, %c272_172] : memref<8x640xbf16, #tpu.memory_space<vmem>>, vector<4x24xbf16>
    tpu.vector_store %arg12[%c4_171, %c272_172], %163 {strides = array<i32>} : memref<8x640xbf16, #tpu.memory_space<vmem>>, vector<4x24xbf16>,
    %c0_173 = arith.constant 0 : index
    %c0_174 = arith.constant 0 : index
    %c3_175 = arith.constant 3 : index
    %c0_176 = arith.constant 0 : index
    %165 = vector.load %arg1[%c0_173, %c0_174, %c3_175, %c0_176] : memref<1x4x8x8xf32, #tpu.memory_space<vmem>>, vector<1x4x1x8xf32>
    %166 = vector.shape_cast %165 : vector<1x4x1x8xf32> to vector<4x8xf32>
    %cst_177 = arith.constant 0.733333349 : f32
    %167 = vector.broadcast %cst_177 : f32 to vector<4x8xf32>
    %168 = arith.mulf %167, %166 : vector<4x8xf32>
    %c0_178 = arith.constant 0 : index
    %c0_179 = arith.constant 0 : index
    %c4_180 = arith.constant 4 : index
    %c0_181 = arith.constant 0 : index
    %169 = vector.load %arg1[%c0_178, %c0_179, %c4_180, %c0_181] : memref<1x4x8x8xf32, #tpu.memory_space<vmem>>, vector<1x4x1x8xf32>
    %170 = vector.shape_cast %169 : vector<1x4x1x8xf32> to vector<4x8xf32>
    %cst_182 = arith.constant 0.266666681 : f32
    %171 = vector.broadcast %cst_182 : f32 to vector<4x8xf32>
    %172 = arith.mulf %171, %170 : vector<4x8xf32>
    %173 = arith.addf %168, %172 : vector<4x8xf32>
    %cst_183 = arith.constant dense<0.000000e+00> : vector<4x24xf32>
    %174 = tpu.matmul %173, %85, %cst_183 {dimension_numbers = #tpu.dot_dimension_numbers<[1], [0], [0], [1], [0, 0, 1, 1], [], []>} : vector<4x8xf32>, vector<8x24xf32>, vector<4x24xf32> -> vector<4x24xf32>
    %175 = arith.truncf %174 : vector<4x24xf32> to vector<4x24xbf16>
    %c4_184 = arith.constant 4 : index
    %c296_185 = arith.constant 296 : index
    %176 = vector.load %arg12[%c4_184, %c296_185] : memref<8x640xbf16, #tpu.memory_space<vmem>>, vector<4x24xbf16>
    tpu.vector_store %arg12[%c4_184, %c296_185], %175 {strides = array<i32>} : memref<8x640xbf16, #tpu.memory_space<vmem>>, vector<4x24xbf16>,
    %c0_186 = arith.constant 0 : index
    %c0_187 = arith.constant 0 : index
    %c3_188 = arith.constant 3 : index
    %c0_189 = arith.constant 0 : index
    %177 = vector.load %arg1[%c0_186, %c0_187, %c3_188, %c0_189] : memref<1x4x8x8xf32, #tpu.memory_space<vmem>>, vector<1x4x1x8xf32>
    %178 = vector.shape_cast %177 : vector<1x4x1x8xf32> to vector<4x8xf32>
    %cst_190 = arith.constant 0.266666681 : f32
    %179 = vector.broadcast %cst_190 : f32 to vector<4x8xf32>
    %180 = arith.mulf %179, %178 : vector<4x8xf32>
    %c0_191 = arith.constant 0 : index
    %c0_192 = arith.constant 0 : index
    %c4_193 = arith.constant 4 : index
    %c0_194 = arith.constant 0 : index
    %181 = vector.load %arg1[%c0_191, %c0_192, %c4_193, %c0_194] : memref<1x4x8x8xf32, #tpu.memory_space<vmem>>, vector<1x4x1x8xf32>
    %182 = vector.shape_cast %181 : vector<1x4x1x8xf32> to vector<4x8xf32>
    %cst_195 = arith.constant 0.733333349 : f32
    %183 = vector.broadcast %cst_195 : f32 to vector<4x8xf32>
    %184 = arith.mulf %183, %182 : vector<4x8xf32>
    %185 = arith.addf %180, %184 : vector<4x8xf32>
    %cst_196 = arith.constant dense<0.000000e+00> : vector<4x24xf32>
    %186 = tpu.matmul %185, %85, %cst_196 {dimension_numbers = #tpu.dot_dimension_numbers<[1], [0], [0], [1], [0, 0, 1, 1], [], []>} : vector<4x8xf32>, vector<8x24xf32>, vector<4x24xf32> -> vector<4x24xf32>
    %187 = arith.truncf %186 : vector<4x24xf32> to vector<4x24xbf16>
    %c4_197 = arith.constant 4 : index
    %c320_198 = arith.constant 320 : index
    %188 = vector.load %arg12[%c4_197, %c320_198] : memref<8x640xbf16, #tpu.memory_space<vmem>>, vector<4x24xbf16>
    tpu.vector_store %arg12[%c4_197, %c320_198], %187 {strides = array<i32>} : memref<8x640xbf16, #tpu.memory_space<vmem>>, vector<4x24xbf16>,
    %c0_199 = arith.constant 0 : index
    %c0_200 = arith.constant 0 : index
    %c4_201 = arith.constant 4 : index
    %c0_202 = arith.constant 0 : index
    %189 = vector.load %arg1[%c0_199, %c0_200, %c4_201, %c0_202] : memref<1x4x8x8xf32, #tpu.memory_space<vmem>>, vector<1x4x1x8xf32>
    %190 = vector.shape_cast %189 : vector<1x4x1x8xf32> to vector<4x8xf32>
    %cst_203 = arith.constant 8.000000e-01 : f32
    %191 = vector.broadcast %cst_203 : f32 to vector<4x8xf32>
    %192 = arith.mulf %191, %190 : vector<4x8xf32>
    %c0_204 = arith.constant 0 : index
    %c0_205 = arith.constant 0 : index
    %c5_206 = arith.constant 5 : index
    %c0_207 = arith.constant 0 : index
    %193 = vector.load %arg1[%c0_204, %c0_205, %c5_206, %c0_207] : memref<1x4x8x8xf32, #tpu.memory_space<vmem>>, vector<1x4x1x8xf32>
    %194 = vector.shape_cast %193 : vector<1x4x1x8xf32> to vector<4x8xf32>
    %cst_208 = arith.constant 2.000000e-01 : f32
    %195 = vector.broadcast %cst_208 : f32 to vector<4x8xf32>
    %196 = arith.mulf %195, %194 : vector<4x8xf32>
    %197 = arith.addf %192, %196 : vector<4x8xf32>
    %cst_209 = arith.constant dense<0.000000e+00> : vector<4x24xf32>
    %198 = tpu.matmul %197, %85, %cst_209 {dimension_numbers = #tpu.dot_dimension_numbers<[1], [0], [0], [1], [0, 0, 1, 1], [], []>} : vector<4x8xf32>, vector<8x24xf32>, vector<4x24xf32> -> vector<4x24xf32>
    %199 = arith.truncf %198 : vector<4x24xf32> to vector<4x24xbf16>
    %c4_210 = arith.constant 4 : index
    %c344_211 = arith.constant 344 : index
    %200 = vector.load %arg12[%c4_210, %c344_211] : memref<8x640xbf16, #tpu.memory_space<vmem>>, vector<4x24xbf16>
    tpu.vector_store %arg12[%c4_210, %c344_211], %199 {strides = array<i32>} : memref<8x640xbf16, #tpu.memory_space<vmem>>, vector<4x24xbf16>,
    %c0_212 = arith.constant 0 : index
    %c0_213 = arith.constant 0 : index
    %c4_214 = arith.constant 4 : index
    %c0_215 = arith.constant 0 : index
    %201 = vector.load %arg1[%c0_212, %c0_213, %c4_214, %c0_215] : memref<1x4x8x8xf32, #tpu.memory_space<vmem>>, vector<1x4x1x8xf32>
    %202 = vector.shape_cast %201 : vector<1x4x1x8xf32> to vector<4x8xf32>
    %cst_216 = arith.constant 0.333333343 : f32
    %203 = vector.broadcast %cst_216 : f32 to vector<4x8xf32>
    %204 = arith.mulf %203, %202 : vector<4x8xf32>
    %c0_217 = arith.constant 0 : index
    %c0_218 = arith.constant 0 : index
    %c5_219 = arith.constant 5 : index
    %c0_220 = arith.constant 0 : index
    %205 = vector.load %arg1[%c0_217, %c0_218, %c5_219, %c0_220] : memref<1x4x8x8xf32, #tpu.memory_space<vmem>>, vector<1x4x1x8xf32>
    %206 = vector.shape_cast %205 : vector<1x4x1x8xf32> to vector<4x8xf32>
    %cst_221 = arith.constant 0.666666686 : f32
    %207 = vector.broadcast %cst_221 : f32 to vector<4x8xf32>
    %208 = arith.mulf %207, %206 : vector<4x8xf32>
    %209 = arith.addf %204, %208 : vector<4x8xf32>
    %cst_222 = arith.constant dense<0.000000e+00> : vector<4x24xf32>
    %210 = tpu.matmul %209, %85, %cst_222 {dimension_numbers = #tpu.dot_dimension_numbers<[1], [0], [0], [1], [0, 0, 1, 1], [], []>} : vector<4x8xf32>, vector<8x24xf32>, vector<4x24xf32> -> vector<4x24xf32>
    %211 = arith.truncf %210 : vector<4x24xf32> to vector<4x24xbf16>
    %c4_223 = arith.constant 4 : index
    %c368_224 = arith.constant 368 : index
    %212 = vector.load %arg12[%c4_223, %c368_224] : memref<8x640xbf16, #tpu.memory_space<vmem>>, vector<4x24xbf16>
    tpu.vector_store %arg12[%c4_223, %c368_224], %211 {strides = array<i32>} : memref<8x640xbf16, #tpu.memory_space<vmem>>, vector<4x24xbf16>,
    %c0_225 = arith.constant 0 : index
    %c0_226 = arith.constant 0 : index
    %c5_227 = arith.constant 5 : index
    %c0_228 = arith.constant 0 : index
    %213 = vector.load %arg1[%c0_225, %c0_226, %c5_227, %c0_228] : memref<1x4x8x8xf32, #tpu.memory_space<vmem>>, vector<1x4x1x8xf32>
    %214 = vector.shape_cast %213 : vector<1x4x1x8xf32> to vector<4x8xf32>
    %cst_229 = arith.constant 0.866666674 : f32
    %215 = vector.broadcast %cst_229 : f32 to vector<4x8xf32>
    %216 = arith.mulf %215, %214 : vector<4x8xf32>
    %c0_230 = arith.constant 0 : index
    %c0_231 = arith.constant 0 : index
    %c6_232 = arith.constant 6 : index
    %c0_233 = arith.constant 0 : index
    %217 = vector.load %arg1[%c0_230, %c0_231, %c6_232, %c0_233] : memref<1x4x8x8xf32, #tpu.memory_space<vmem>>, vector<1x4x1x8xf32>
    %218 = vector.shape_cast %217 : vector<1x4x1x8xf32> to vector<4x8xf32>
    %cst_234 = arith.constant 0.13333334 : f32
    %219 = vector.broadcast %cst_234 : f32 to vector<4x8xf32>
    %220 = arith.mulf %219, %218 : vector<4x8xf32>
    %221 = arith.addf %216, %220 : vector<4x8xf32>
    %cst_235 = arith.constant dense<0.000000e+00> : vector<4x24xf32>
    %222 = tpu.matmul %221, %85, %cst_235 {dimension_numbers = #tpu.dot_dimension_numbers<[1], [0], [0], [1], [0, 0, 1, 1], [], []>} : vector<4x8xf32>, vector<8x24xf32>, vector<4x24xf32> -> vector<4x24xf32>
    %223 = arith.truncf %222 : vector<4x24xf32> to vector<4x24xbf16>
    %c4_236 = arith.constant 4 : index
    %c392_237 = arith.constant 392 : index
    %224 = vector.load %arg12[%c4_236, %c392_237] : memref<8x640xbf16, #tpu.memory_space<vmem>>, vector<4x24xbf16>
    tpu.vector_store %arg12[%c4_236, %c392_237], %223 {strides = array<i32>} : memref<8x640xbf16, #tpu.memory_space<vmem>>, vector<4x24xbf16>,
    %c0_238 = arith.constant 0 : index
    %c0_239 = arith.constant 0 : index
    %c5_240 = arith.constant 5 : index
    %c0_241 = arith.constant 0 : index
    %225 = vector.load %arg1[%c0_238, %c0_239, %c5_240, %c0_241] : memref<1x4x8x8xf32, #tpu.memory_space<vmem>>, vector<1x4x1x8xf32>
    %226 = vector.shape_cast %225 : vector<1x4x1x8xf32> to vector<4x8xf32>
    %cst_242 = arith.constant 4.000000e-01 : f32
    %227 = vector.broadcast %cst_242 : f32 to vector<4x8xf32>
    %228 = arith.mulf %227, %226 : vector<4x8xf32>
    %c0_243 = arith.constant 0 : index
    %c0_244 = arith.constant 0 : index
    %c6_245 = arith.constant 6 : index
    %c0_246 = arith.constant 0 : index
    %229 = vector.load %arg1[%c0_243, %c0_244, %c6_245, %c0_246] : memref<1x4x8x8xf32, #tpu.memory_space<vmem>>, vector<1x4x1x8xf32>
    %230 = vector.shape_cast %229 : vector<1x4x1x8xf32> to vector<4x8xf32>
    %cst_247 = arith.constant 6.000000e-01 : f32
    %231 = vector.broadcast %cst_247 : f32 to vector<4x8xf32>
    %232 = arith.mulf %231, %230 : vector<4x8xf32>
    %233 = arith.addf %228, %232 : vector<4x8xf32>
    %cst_248 = arith.constant dense<0.000000e+00> : vector<4x24xf32>
    %234 = tpu.matmul %233, %85, %cst_248 {dimension_numbers = #tpu.dot_dimension_numbers<[1], [0], [0], [1], [0, 0, 1, 1], [], []>} : vector<4x8xf32>, vector<8x24xf32>, vector<4x24xf32> -> vector<4x24xf32>
    %235 = arith.truncf %234 : vector<4x24xf32> to vector<4x24xbf16>
    %c4_249 = arith.constant 4 : index
    %c416_250 = arith.constant 416 : index
    %236 = vector.load %arg12[%c4_249, %c416_250] : memref<8x640xbf16, #tpu.memory_space<vmem>>, vector<4x24xbf16>
    tpu.vector_store %arg12[%c4_249, %c416_250], %235 {strides = array<i32>} : memref<8x640xbf16, #tpu.memory_space<vmem>>, vector<4x24xbf16>,
    %c0_251 = arith.constant 0 : index
    %c0_252 = arith.constant 0 : index
    %c6_253 = arith.constant 6 : index
    %c0_254 = arith.constant 0 : index
    %237 = vector.load %arg1[%c0_251, %c0_252, %c6_253, %c0_254] : memref<1x4x8x8xf32, #tpu.memory_space<vmem>>, vector<1x4x1x8xf32>
    %238 = vector.shape_cast %237 : vector<1x4x1x8xf32> to vector<4x8xf32>
    %cst_255 = arith.constant 0.933333337 : f32
    %239 = vector.broadcast %cst_255 : f32 to vector<4x8xf32>
    %240 = arith.mulf %239, %238 : vector<4x8xf32>
    %c0_256 = arith.constant 0 : index
    %c0_257 = arith.constant 0 : index
    %c7_258 = arith.constant 7 : index
    %c0_259 = arith.constant 0 : index
    %241 = vector.load %arg1[%c0_256, %c0_257, %c7_258, %c0_259] : memref<1x4x8x8xf32, #tpu.memory_space<vmem>>, vector<1x4x1x8xf32>
    %242 = vector.shape_cast %241 : vector<1x4x1x8xf32> to vector<4x8xf32>
    %cst_260 = arith.constant 0.0666666701 : f32
    %243 = vector.broadcast %cst_260 : f32 to vector<4x8xf32>
    %244 = arith.mulf %243, %242 : vector<4x8xf32>
    %245 = arith.addf %240, %244 : vector<4x8xf32>
    %cst_261 = arith.constant dense<0.000000e+00> : vector<4x24xf32>
    %246 = tpu.matmul %245, %85, %cst_261 {dimension_numbers = #tpu.dot_dimension_numbers<[1], [0], [0], [1], [0, 0, 1, 1], [], []>} : vector<4x8xf32>, vector<8x24xf32>, vector<4x24xf32> -> vector<4x24xf32>
    %247 = arith.truncf %246 : vector<4x24xf32> to vector<4x24xbf16>
    %c4_262 = arith.constant 4 : index
    %c440_263 = arith.constant 440 : index
    %248 = vector.load %arg12[%c4_262, %c440_263] : memref<8x640xbf16, #tpu.memory_space<vmem>>, vector<4x24xbf16>
    tpu.vector_store %arg12[%c4_262, %c440_263], %247 {strides = array<i32>} : memref<8x640xbf16, #tpu.memory_space<vmem>>, vector<4x24xbf16>,
    %c0_264 = arith.constant 0 : index
    %c0_265 = arith.constant 0 : index
    %c6_266 = arith.constant 6 : index
    %c0_267 = arith.constant 0 : index
    %249 = vector.load %arg1[%c0_264, %c0_265, %c6_266, %c0_267] : memref<1x4x8x8xf32, #tpu.memory_space<vmem>>, vector<1x4x1x8xf32>
    %250 = vector.shape_cast %249 : vector<1x4x1x8xf32> to vector<4x8xf32>
    %cst_268 = arith.constant 0.466666669 : f32
    %251 = vector.broadcast %cst_268 : f32 to vector<4x8xf32>
    %252 = arith.mulf %251, %250 : vector<4x8xf32>
    %c0_269 = arith.constant 0 : index
    %c0_270 = arith.constant 0 : index
    %c7_271 = arith.constant 7 : index
    %c0_272 = arith.constant 0 : index
    %253 = vector.load %arg1[%c0_269, %c0_270, %c7_271, %c0_272] : memref<1x4x8x8xf32, #tpu.memory_space<vmem>>, vector<1x4x1x8xf32>
    %254 = vector.shape_cast %253 : vector<1x4x1x8xf32> to vector<4x8xf32>
    %cst_273 = arith.constant 0.533333361 : f32
    %255 = vector.broadcast %cst_273 : f32 to vector<4x8xf32>
    %256 = arith.mulf %255, %254 : vector<4x8xf32>
    %257 = arith.addf %252, %256 : vector<4x8xf32>
    %cst_274 = arith.constant dense<0.000000e+00> : vector<4x24xf32>
    %258 = tpu.matmul %257, %85, %cst_274 {dimension_numbers = #tpu.dot_dimension_numbers<[1], [0], [0], [1], [0, 0, 1, 1], [], []>} : vector<4x8xf32>, vector<8x24xf32>, vector<4x24xf32> -> vector<4x24xf32>
    %259 = arith.truncf %258 : vector<4x24xf32> to vector<4x24xbf16>
    %c4_275 = arith.constant 4 : index
    %c464_276 = arith.constant 464 : index
    %260 = vector.load %arg12[%c4_275, %c464_276] : memref<8x640xbf16, #tpu.memory_space<vmem>>, vector<4x24xbf16>
    tpu.vector_store %arg12[%c4_275, %c464_276], %259 {strides = array<i32>} : memref<8x640xbf16, #tpu.memory_space<vmem>>, vector<4x24xbf16>,
    %c0_277 = arith.constant 0 : index
    %c0_278 = arith.constant 0 : index
    %c7_279 = arith.constant 7 : index
    %c0_280 = arith.constant 0 : index
    %261 = vector.load %arg1[%c0_277, %c0_278, %c7_279, %c0_280] : memref<1x4x8x8xf32, #tpu.memory_space<vmem>>, vector<1x4x1x8xf32>
    %262 = vector.shape_cast %261 : vector<1x4x1x8xf32> to vector<4x8xf32>
    %cst_281 = arith.constant 1.000000e+00 : f32
    %263 = vector.broadcast %cst_281 : f32 to vector<4x8xf32>
    %264 = arith.mulf %263, %262 : vector<4x8xf32>
    %cst_282 = arith.constant dense<0.000000e+00> : vector<4x24xf32>
    %265 = tpu.matmul %264, %85, %cst_282 {dimension_numbers = #tpu.dot_dimension_numbers<[1], [0], [0], [1], [0, 0, 1, 1], [], []>} : vector<4x8xf32>, vector<8x24xf32>, vector<4x24xf32> -> vector<4x24xf32>
    %266 = arith.truncf %265 : vector<4x24xf32> to vector<4x24xbf16>
    %c4_283 = arith.constant 4 : index
    %c488_284 = arith.constant 488 : index
    %267 = vector.load %arg12[%c4_283, %c488_284] : memref<8x640xbf16, #tpu.memory_space<vmem>>, vector<4x24xbf16>
    tpu.vector_store %arg12[%c4_283, %c488_284], %266 {strides = array<i32>} : memref<8x640xbf16, #tpu.memory_space<vmem>>, vector<4x24xbf16>,
    %c0_285 = arith.constant 0 : index
    %c0_286 = arith.constant 0 : index
    %268 = vector.load %arg10[%c0_285, %c0_286] : memref<1x384xf32, #tpu.memory_space<vmem>>, vector<1x384xf32>
    %c0_287 = arith.constant 0 : index
    %c103 = arith.constant 103 : index
    %269 = vector.load %arg12[%c0_287, %c103] : memref<8x640xbf16, #tpu.memory_space<vmem>>, vector<8x384xbf16>
    %c0_288 = arith.constant 0 : index
    %c104 = arith.constant 104 : index
    %270 = vector.load %arg12[%c0_288, %c104] : memref<8x640xbf16, #tpu.memory_space<vmem>>, vector<8x384xbf16>
    %c0_289 = arith.constant 0 : index
    %c105 = arith.constant 105 : index
    %271 = vector.load %arg12[%c0_289, %c105] : memref<8x640xbf16, #tpu.memory_space<vmem>>, vector<8x384xbf16>
    %c0_290 = arith.constant 0 : index
    %c127 = arith.constant 127 : index
    %272 = vector.load %arg12[%c0_290, %c127] : memref<8x640xbf16, #tpu.memory_space<vmem>>, vector<8x384xbf16>
    %c0_291 = arith.constant 0 : index
    %c128_292 = arith.constant 128 : index
    %273 = vector.load %arg12[%c0_291, %c128_292] : memref<8x640xbf16, #tpu.memory_space<vmem>>, vector<8x384xbf16>
    %c0_293 = arith.constant 0 : index
    %c129_294 = arith.constant 129 : index
    %274 = vector.load %arg12[%c0_293, %c129_294] : memref<8x640xbf16, #tpu.memory_space<vmem>>, vector<8x384xbf16>
    %c0_295 = arith.constant 0 : index
    %c151 = arith.constant 151 : index
    %275 = vector.load %arg12[%c0_295, %c151] : memref<8x640xbf16, #tpu.memory_space<vmem>>, vector<8x384xbf16>
    %c0_296 = arith.constant 0 : index
    %c152_297 = arith.constant 152 : index
    %276 = vector.load %arg12[%c0_296, %c152_297] : memref<8x640xbf16, #tpu.memory_space<vmem>>, vector<8x384xbf16>
    %c0_298 = arith.constant 0 : index
    %c153_299 = arith.constant 153 : index
    %277 = vector.load %arg12[%c0_298, %c153_299] : memref<8x640xbf16, #tpu.memory_space<vmem>>, vector<8x384xbf16>
    %278 = tpu.concatenate %269, %270, %271, %272, %273, %274, %275, %276, %277 in 0 : vector<8x384xbf16>, vector<8x384xbf16>, vector<8x384xbf16>, vector<8x384xbf16>, vector<8x384xbf16>, vector<8x384xbf16>, vector<8x384xbf16>, vector<8x384xbf16>, vector<8x384xbf16> -> vector<72x384xbf16>
    %c0_300 = arith.constant 0 : index
    %c0_301 = arith.constant 0 : index
    %279 = vector.load %arg4[%c0_300, %c0_301] : memref<4x72xbf16, #tpu.memory_space<vmem>>, vector<4x72xbf16>
    %cst_302 = arith.constant dense<0.000000e+00> : vector<4x384xf32>
    %280 = tpu.matmul %279, %278, %cst_302 {dimension_numbers = #tpu.dot_dimension_numbers<[1], [0], [0], [1], [0, 0, 1, 1], [], []>} : vector<4x72xbf16>, vector<72x384xbf16>, vector<4x384xf32> -> vector<4x384xf32>
    %c0_303 = arith.constant 0 : index
    %c0_304 = arith.constant 0 : index
    %281 = vector.load %arg5[%c0_303, %c0_304] : memref<4x1xf32, #tpu.memory_space<vmem>>, vector<4x1xf32>
    %282 = vector.broadcast %281 : vector<4x1xf32> to vector<4x384xf32>
    %283 = arith.mulf %280, %282 : vector<4x384xf32>
    %c0_305 = arith.constant 0 : index
    %c0_306 = arith.constant 0 : index
    %284 = vector.load %arg6[%c0_305, %c0_306] : memref<4x1xf32, #tpu.memory_space<vmem>>, vector<4x1xf32>
    %285 = vector.broadcast %284 : vector<4x1xf32> to vector<4x384xf32>
    %286 = arith.addf %283, %285 : vector<4x384xf32>
    %cst_307 = arith.constant 0.000000e+00 : f32
    %287 = vector.broadcast %cst_307 : f32 to vector<4x384xf32>
    %288 = arith.maximumf %286, %287 : vector<4x384xf32>
    %289 = vector.broadcast %268 : vector<1x384xf32> to vector<4x384xf32>
    %290 = arith.mulf %288, %289 : vector<4x384xf32>
    %291 = arith.truncf %290 : vector<4x384xf32> to vector<4x384xbf16>
    %c0_308 = arith.constant 0 : index
    %c128_309 = arith.constant 128 : index
    %292 = vector.load %arg12[%c0_308, %c128_309] : memref<8x640xbf16, #tpu.memory_space<vmem>>, vector<4x384xbf16>
    tpu.vector_store %arg12[%c0_308, %c128_309], %291 {strides = array<i32>} : memref<8x640xbf16, #tpu.memory_space<vmem>>, vector<4x384xbf16>,
    %c0_310 = arith.constant 0 : index
    %c103_311 = arith.constant 103 : index
    %293 = vector.load %arg12[%c0_310, %c103_311] : memref<8x640xbf16, #tpu.memory_space<vmem>>, vector<4x384xbf16>
    %c0_312 = arith.constant 0 : index
    %c104_313 = arith.constant 104 : index
    %294 = vector.load %arg12[%c0_312, %c104_313] : memref<8x640xbf16, #tpu.memory_space<vmem>>, vector<4x384xbf16>
    %c0_314 = arith.constant 0 : index
    %c105_315 = arith.constant 105 : index
    %295 = vector.load %arg12[%c0_314, %c105_315] : memref<8x640xbf16, #tpu.memory_space<vmem>>, vector<4x384xbf16>
    %c0_316 = arith.constant 0 : index
    %c127_317 = arith.constant 127 : index
    %296 = vector.load %arg12[%c0_316, %c127_317] : memref<8x640xbf16, #tpu.memory_space<vmem>>, vector<4x384xbf16>
    %c0_318 = arith.constant 0 : index
    %c128_319 = arith.constant 128 : index
    %297 = vector.load %arg12[%c0_318, %c128_319] : memref<8x640xbf16, #tpu.memory_space<vmem>>, vector<4x384xbf16>
    %c0_320 = arith.constant 0 : index
    %c129_321 = arith.constant 129 : index
    %298 = vector.load %arg12[%c0_320, %c129_321] : memref<8x640xbf16, #tpu.memory_space<vmem>>, vector<4x384xbf16>
    %c0_322 = arith.constant 0 : index
    %c151_323 = arith.constant 151 : index
    %299 = vector.load %arg12[%c0_322, %c151_323] : memref<8x640xbf16, #tpu.memory_space<vmem>>, vector<4x384xbf16>
    %c0_324 = arith.constant 0 : index
    %c152_325 = arith.constant 152 : index
    %300 = vector.load %arg12[%c0_324, %c152_325] : memref<8x640xbf16, #tpu.memory_space<vmem>>, vector<4x384xbf16>
    %c0_326 = arith.constant 0 : index
    %c153_327 = arith.constant 153 : index
    %301 = vector.load %arg12[%c0_326, %c153_327] : memref<8x640xbf16, #tpu.memory_space<vmem>>, vector<4x384xbf16>
    %302 = tpu.concatenate %293, %294, %295, %296, %297, %298, %299, %300, %301 in 0 : vector<4x384xbf16>, vector<4x384xbf16>, vector<4x384xbf16>, vector<4x384xbf16>, vector<4x384xbf16>, vector<4x384xbf16>, vector<4x384xbf16>, vector<4x384xbf16>, vector<4x384xbf16> -> vector<36x384xbf16>
    %c0_328 = arith.constant 0 : index
    %c0_329 = arith.constant 0 : index
    %303 = vector.load %arg7[%c0_328, %c0_329] : memref<8x36xbf16, #tpu.memory_space<vmem>>, vector<8x36xbf16>
    %cst_330 = arith.constant dense<0.000000e+00> : vector<8x384xf32>
    %304 = tpu.matmul %303, %302, %cst_330 {dimension_numbers = #tpu.dot_dimension_numbers<[1], [0], [0], [1], [0, 0, 1, 1], [], []>} : vector<8x36xbf16>, vector<36x384xbf16>, vector<8x384xf32> -> vector<8x384xf32>
    %c0_331 = arith.constant 0 : index
    %c0_332 = arith.constant 0 : index
    %305 = vector.load %arg8[%c0_331, %c0_332] : memref<8x1xf32, #tpu.memory_space<vmem>>, vector<8x1xf32>
    %306 = vector.broadcast %305 : vector<8x1xf32> to vector<8x384xf32>
    %307 = arith.mulf %304, %306 : vector<8x384xf32>
    %c0_333 = arith.constant 0 : index
    %c0_334 = arith.constant 0 : index
    %308 = vector.load %arg9[%c0_333, %c0_334] : memref<8x1xf32, #tpu.memory_space<vmem>>, vector<8x1xf32>
    %309 = vector.broadcast %308 : vector<8x1xf32> to vector<8x384xf32>
    %310 = arith.addf %307, %309 : vector<8x384xf32>
    %cst_335 = arith.constant 0.000000e+00 : f32
    %311 = vector.broadcast %cst_335 : f32 to vector<8x384xf32>
    %312 = arith.maximumf %310, %311 : vector<8x384xf32>
    %313 = vector.extract_strided_slice %312 {offsets = [0, 1], sizes = [8, 16], strides = [1, 1]} : vector<8x384xf32> to vector<8x16xf32>
    %c0_336 = arith.constant 0 : index
    %c0_337 = arith.constant 0 : index
    %c0_338 = arith.constant 0 : index
    %c0_339 = arith.constant 0 : index
    %314 = vector.load %arg11[%c0_336, %c0_337, %c0_338, %c0_339] : memref<1x8x16x16xf32, #tpu.memory_space<vmem>>, vector<1x8x1x16xf32>
    %315 = vector.shape_cast %314 : vector<1x8x1x16xf32> to vector<8x16xf32>
    %316 = vector.shape_cast %313 : vector<8x16xf32> to vector<1x8x1x16xf32>
    tpu.vector_store %arg11[%c0_336, %c0_337, %c0_338, %c0_339], %316 {strides = array<i32>} : memref<1x8x16x16xf32, #tpu.memory_space<vmem>>, vector<1x8x1x16xf32>,
    %317 = vector.extract_strided_slice %312 {offsets = [0, 25], sizes = [8, 16], strides = [1, 1]} : vector<8x384xf32> to vector<8x16xf32>
    %c0_340 = arith.constant 0 : index
    %c0_341 = arith.constant 0 : index
    %c1_342 = arith.constant 1 : index
    %c0_343 = arith.constant 0 : index
    %318 = vector.load %arg11[%c0_340, %c0_341, %c1_342, %c0_343] : memref<1x8x16x16xf32, #tpu.memory_space<vmem>>, vector<1x8x1x16xf32>
    %319 = vector.shape_cast %318 : vector<1x8x1x16xf32> to vector<8x16xf32>
    %320 = vector.shape_cast %317 : vector<8x16xf32> to vector<1x8x1x16xf32>
    tpu.vector_store %arg11[%c0_340, %c0_341, %c1_342, %c0_343], %320 {strides = array<i32>} : memref<1x8x16x16xf32, #tpu.memory_space<vmem>>, vector<1x8x1x16xf32>,
    %321 = vector.extract_strided_slice %312 {offsets = [0, 49], sizes = [8, 16], strides = [1, 1]} : vector<8x384xf32> to vector<8x16xf32>
    %c0_344 = arith.constant 0 : index
    %c0_345 = arith.constant 0 : index
    %c2_346 = arith.constant 2 : index
    %c0_347 = arith.constant 0 : index
    %322 = vector.load %arg11[%c0_344, %c0_345, %c2_346, %c0_347] : memref<1x8x16x16xf32, #tpu.memory_space<vmem>>, vector<1x8x1x16xf32>
    %323 = vector.shape_cast %322 : vector<1x8x1x16xf32> to vector<8x16xf32>
    %324 = vector.shape_cast %321 : vector<8x16xf32> to vector<1x8x1x16xf32>
    tpu.vector_store %arg11[%c0_344, %c0_345, %c2_346, %c0_347], %324 {strides = array<i32>} : memref<1x8x16x16xf32, #tpu.memory_space<vmem>>, vector<1x8x1x16xf32>,
    %325 = vector.extract_strided_slice %312 {offsets = [0, 73], sizes = [8, 16], strides = [1, 1]} : vector<8x384xf32> to vector<8x16xf32>
    %c0_348 = arith.constant 0 : index
    %c0_349 = arith.constant 0 : index
    %c3_350 = arith.constant 3 : index
    %c0_351 = arith.constant 0 : index
    %326 = vector.load %arg11[%c0_348, %c0_349, %c3_350, %c0_351] : memref<1x8x16x16xf32, #tpu.memory_space<vmem>>, vector<1x8x1x16xf32>
    %327 = vector.shape_cast %326 : vector<1x8x1x16xf32> to vector<8x16xf32>
    %328 = vector.shape_cast %325 : vector<8x16xf32> to vector<1x8x1x16xf32>
    tpu.vector_store %arg11[%c0_348, %c0_349, %c3_350, %c0_351], %328 {strides = array<i32>} : memref<1x8x16x16xf32, #tpu.memory_space<vmem>>, vector<1x8x1x16xf32>,
    %329 = vector.extract_strided_slice %312 {offsets = [0, 97], sizes = [8, 16], strides = [1, 1]} : vector<8x384xf32> to vector<8x16xf32>
    %c0_352 = arith.constant 0 : index
    %c0_353 = arith.constant 0 : index
    %c4_354 = arith.constant 4 : index
    %c0_355 = arith.constant 0 : index
    %330 = vector.load %arg11[%c0_352, %c0_353, %c4_354, %c0_355] : memref<1x8x16x16xf32, #tpu.memory_space<vmem>>, vector<1x8x1x16xf32>
    %331 = vector.shape_cast %330 : vector<1x8x1x16xf32> to vector<8x16xf32>
    %332 = vector.shape_cast %329 : vector<8x16xf32> to vector<1x8x1x16xf32>
    tpu.vector_store %arg11[%c0_352, %c0_353, %c4_354, %c0_355], %332 {strides = array<i32>} : memref<1x8x16x16xf32, #tpu.memory_space<vmem>>, vector<1x8x1x16xf32>,
    %333 = vector.extract_strided_slice %312 {offsets = [0, 121], sizes = [8, 16], strides = [1, 1]} : vector<8x384xf32> to vector<8x16xf32>
    %c0_356 = arith.constant 0 : index
    %c0_357 = arith.constant 0 : index
    %c5_358 = arith.constant 5 : index
    %c0_359 = arith.constant 0 : index
    %334 = vector.load %arg11[%c0_356, %c0_357, %c5_358, %c0_359] : memref<1x8x16x16xf32, #tpu.memory_space<vmem>>, vector<1x8x1x16xf32>
    %335 = vector.shape_cast %334 : vector<1x8x1x16xf32> to vector<8x16xf32>
    %336 = vector.shape_cast %333 : vector<8x16xf32> to vector<1x8x1x16xf32>
    tpu.vector_store %arg11[%c0_356, %c0_357, %c5_358, %c0_359], %336 {strides = array<i32>} : memref<1x8x16x16xf32, #tpu.memory_space<vmem>>, vector<1x8x1x16xf32>,
    %337 = vector.extract_strided_slice %312 {offsets = [0, 145], sizes = [8, 16], strides = [1, 1]} : vector<8x384xf32> to vector<8x16xf32>
    %c0_360 = arith.constant 0 : index
    %c0_361 = arith.constant 0 : index
    %c6_362 = arith.constant 6 : index
    %c0_363 = arith.constant 0 : index
    %338 = vector.load %arg11[%c0_360, %c0_361, %c6_362, %c0_363] : memref<1x8x16x16xf32, #tpu.memory_space<vmem>>, vector<1x8x1x16xf32>
    %339 = vector.shape_cast %338 : vector<1x8x1x16xf32> to vector<8x16xf32>
    %340 = vector.shape_cast %337 : vector<8x16xf32> to vector<1x8x1x16xf32>
    tpu.vector_store %arg11[%c0_360, %c0_361, %c6_362, %c0_363], %340 {strides = array<i32>} : memref<1x8x16x16xf32, #tpu.memory_space<vmem>>, vector<1x8x1x16xf32>,
    %341 = vector.extract_strided_slice %312 {offsets = [0, 169], sizes = [8, 16], strides = [1, 1]} : vector<8x384xf32> to vector<8x16xf32>
    %c0_364 = arith.constant 0 : index
    %c0_365 = arith.constant 0 : index
    %c7_366 = arith.constant 7 : index
    %c0_367 = arith.constant 0 : index
    %342 = vector.load %arg11[%c0_364, %c0_365, %c7_366, %c0_367] : memref<1x8x16x16xf32, #tpu.memory_space<vmem>>, vector<1x8x1x16xf32>
    %343 = vector.shape_cast %342 : vector<1x8x1x16xf32> to vector<8x16xf32>
    %344 = vector.shape_cast %341 : vector<8x16xf32> to vector<1x8x1x16xf32>
    tpu.vector_store %arg11[%c0_364, %c0_365, %c7_366, %c0_367], %344 {strides = array<i32>} : memref<1x8x16x16xf32, #tpu.memory_space<vmem>>, vector<1x8x1x16xf32>,
    %345 = vector.extract_strided_slice %312 {offsets = [0, 193], sizes = [8, 16], strides = [1, 1]} : vector<8x384xf32> to vector<8x16xf32>
    %c0_368 = arith.constant 0 : index
    %c0_369 = arith.constant 0 : index
    %c8_370 = arith.constant 8 : index
    %c0_371 = arith.constant 0 : index
    %346 = vector.load %arg11[%c0_368, %c0_369, %c8_370, %c0_371] : memref<1x8x16x16xf32, #tpu.memory_space<vmem>>, vector<1x8x1x16xf32>
    %347 = vector.shape_cast %346 : vector<1x8x1x16xf32> to vector<8x16xf32>
    %348 = vector.shape_cast %345 : vector<8x16xf32> to vector<1x8x1x16xf32>
    tpu.vector_store %arg11[%c0_368, %c0_369, %c8_370, %c0_371], %348 {strides = array<i32>} : memref<1x8x16x16xf32, #tpu.memory_space<vmem>>, vector<1x8x1x16xf32>,
    %349 = vector.extract_strided_slice %312 {offsets = [0, 217], sizes = [8, 16], strides = [1, 1]} : vector<8x384xf32> to vector<8x16xf32>
    %c0_372 = arith.constant 0 : index
    %c0_373 = arith.constant 0 : index
    %c9_374 = arith.constant 9 : index
    %c0_375 = arith.constant 0 : index
    %350 = vector.load %arg11[%c0_372, %c0_373, %c9_374, %c0_375] : memref<1x8x16x16xf32, #tpu.memory_space<vmem>>, vector<1x8x1x16xf32>
    %351 = vector.shape_cast %350 : vector<1x8x1x16xf32> to vector<8x16xf32>
    %352 = vector.shape_cast %349 : vector<8x16xf32> to vector<1x8x1x16xf32>
    tpu.vector_store %arg11[%c0_372, %c0_373, %c9_374, %c0_375], %352 {strides = array<i32>} : memref<1x8x16x16xf32, #tpu.memory_space<vmem>>, vector<1x8x1x16xf32>,
    %353 = vector.extract_strided_slice %312 {offsets = [0, 241], sizes = [8, 16], strides = [1, 1]} : vector<8x384xf32> to vector<8x16xf32>
    %c0_376 = arith.constant 0 : index
    %c0_377 = arith.constant 0 : index
    %c10_378 = arith.constant 10 : index
    %c0_379 = arith.constant 0 : index
    %354 = vector.load %arg11[%c0_376, %c0_377, %c10_378, %c0_379] : memref<1x8x16x16xf32, #tpu.memory_space<vmem>>, vector<1x8x1x16xf32>
    %355 = vector.shape_cast %354 : vector<1x8x1x16xf32> to vector<8x16xf32>
    %356 = vector.shape_cast %353 : vector<8x16xf32> to vector<1x8x1x16xf32>
    tpu.vector_store %arg11[%c0_376, %c0_377, %c10_378, %c0_379], %356 {strides = array<i32>} : memref<1x8x16x16xf32, #tpu.memory_space<vmem>>, vector<1x8x1x16xf32>,
    %357 = vector.extract_strided_slice %312 {offsets = [0, 265], sizes = [8, 16], strides = [1, 1]} : vector<8x384xf32> to vector<8x16xf32>
    %c0_380 = arith.constant 0 : index
    %c0_381 = arith.constant 0 : index
    %c11_382 = arith.constant 11 : index
    %c0_383 = arith.constant 0 : index
    %358 = vector.load %arg11[%c0_380, %c0_381, %c11_382, %c0_383] : memref<1x8x16x16xf32, #tpu.memory_space<vmem>>, vector<1x8x1x16xf32>
    %359 = vector.shape_cast %358 : vector<1x8x1x16xf32> to vector<8x16xf32>
    %360 = vector.shape_cast %357 : vector<8x16xf32> to vector<1x8x1x16xf32>
    tpu.vector_store %arg11[%c0_380, %c0_381, %c11_382, %c0_383], %360 {strides = array<i32>} : memref<1x8x16x16xf32, #tpu.memory_space<vmem>>, vector<1x8x1x16xf32>,
    %361 = vector.extract_strided_slice %312 {offsets = [0, 289], sizes = [8, 16], strides = [1, 1]} : vector<8x384xf32> to vector<8x16xf32>
    %c0_384 = arith.constant 0 : index
    %c0_385 = arith.constant 0 : index
    %c12_386 = arith.constant 12 : index
    %c0_387 = arith.constant 0 : index
    %362 = vector.load %arg11[%c0_384, %c0_385, %c12_386, %c0_387] : memref<1x8x16x16xf32, #tpu.memory_space<vmem>>, vector<1x8x1x16xf32>
    %363 = vector.shape_cast %362 : vector<1x8x1x16xf32> to vector<8x16xf32>
    %364 = vector.shape_cast %361 : vector<8x16xf32> to vector<1x8x1x16xf32>
    tpu.vector_store %arg11[%c0_384, %c0_385, %c12_386, %c0_387], %364 {strides = array<i32>} : memref<1x8x16x16xf32, #tpu.memory_space<vmem>>, vector<1x8x1x16xf32>,
    %365 = vector.extract_strided_slice %312 {offsets = [0, 313], sizes = [8, 16], strides = [1, 1]} : vector<8x384xf32> to vector<8x16xf32>
    %c0_388 = arith.constant 0 : index
    %c0_389 = arith.constant 0 : index
    %c13_390 = arith.constant 13 : index
    %c0_391 = arith.constant 0 : index
    %366 = vector.load %arg11[%c0_388, %c0_389, %c13_390, %c0_391] : memref<1x8x16x16xf32, #tpu.memory_space<vmem>>, vector<1x8x1x16xf32>
    %367 = vector.shape_cast %366 : vector<1x8x1x16xf32> to vector<8x16xf32>
    %368 = vector.shape_cast %365 : vector<8x16xf32> to vector<1x8x1x16xf32>
    tpu.vector_store %arg11[%c0_388, %c0_389, %c13_390, %c0_391], %368 {strides = array<i32>} : memref<1x8x16x16xf32, #tpu.memory_space<vmem>>, vector<1x8x1x16xf32>,
    %369 = vector.extract_strided_slice %312 {offsets = [0, 337], sizes = [8, 16], strides = [1, 1]} : vector<8x384xf32> to vector<8x16xf32>
    %c0_392 = arith.constant 0 : index
    %c0_393 = arith.constant 0 : index
    %c14_394 = arith.constant 14 : index
    %c0_395 = arith.constant 0 : index
    %370 = vector.load %arg11[%c0_392, %c0_393, %c14_394, %c0_395] : memref<1x8x16x16xf32, #tpu.memory_space<vmem>>, vector<1x8x1x16xf32>
    %371 = vector.shape_cast %370 : vector<1x8x1x16xf32> to vector<8x16xf32>
    %372 = vector.shape_cast %369 : vector<8x16xf32> to vector<1x8x1x16xf32>
    tpu.vector_store %arg11[%c0_392, %c0_393, %c14_394, %c0_395], %372 {strides = array<i32>} : memref<1x8x16x16xf32, #tpu.memory_space<vmem>>, vector<1x8x1x16xf32>,
    %373 = vector.extract_strided_slice %312 {offsets = [0, 361], sizes = [8, 16], strides = [1, 1]} : vector<8x384xf32> to vector<8x16xf32>
    %c0_396 = arith.constant 0 : index
    %c0_397 = arith.constant 0 : index
    %c15_398 = arith.constant 15 : index
    %c0_399 = arith.constant 0 : index
    %374 = vector.load %arg11[%c0_396, %c0_397, %c15_398, %c0_399] : memref<1x8x16x16xf32, #tpu.memory_space<vmem>>, vector<1x8x1x16xf32>
    %375 = vector.shape_cast %374 : vector<1x8x1x16xf32> to vector<8x16xf32>
    %376 = vector.shape_cast %373 : vector<8x16xf32> to vector<1x8x1x16xf32>
    tpu.vector_store %arg11[%c0_396, %c0_397, %c15_398, %c0_399], %376 {strides = array<i32>} : memref<1x8x16x16xf32, #tpu.memory_space<vmem>>, vector<1x8x1x16xf32>,
    return
  }
  func.func @transform_0(%arg0: i32) -> (i32, i32, i32, i32) {
    %c0_i32 = arith.constant 0 : i32
    %c0_i32_0 = arith.constant 0 : i32
    %c0_i32_1 = arith.constant 0 : i32
    %c0_i32_2 = arith.constant 0 : i32
    return %arg0, %c0_i32, %c0_i32_0, %c0_i32_1 : i32, i32, i32, i32
  }
  func.func @transform_1(%arg0: i32) -> (i32, i32, i32, i32) {
    %c0_i32 = arith.constant 0 : i32
    %c0_i32_0 = arith.constant 0 : i32
    %c0_i32_1 = arith.constant 0 : i32
    %c0_i32_2 = arith.constant 0 : i32
    return %arg0, %c0_i32, %c0_i32_0, %c0_i32_1 : i32, i32, i32, i32
  }
  func.func @transform_2(%arg0: i32) -> (i32, i32) {
    %c0_i32 = arith.constant 0 : i32
    %c0_i32_0 = arith.constant 0 : i32
    %c0_i32_1 = arith.constant 0 : i32
    return %c0_i32, %c0_i32_0 : i32, i32
  }
  func.func @transform_3(%arg0: i32) -> (i32, i32) {
    %c0_i32 = arith.constant 0 : i32
    %c0_i32_0 = arith.constant 0 : i32
    %c0_i32_1 = arith.constant 0 : i32
    return %c0_i32, %c0_i32_0 : i32, i32
  }
  func.func @transform_4(%arg0: i32) -> (i32, i32) {
    %c0_i32 = arith.constant 0 : i32
    %c0_i32_0 = arith.constant 0 : i32
    %c0_i32_1 = arith.constant 0 : i32
    return %c0_i32, %c0_i32_0 : i32, i32
  }
  func.func @transform_5(%arg0: i32) -> (i32, i32) {
    %c0_i32 = arith.constant 0 : i32
    %c0_i32_0 = arith.constant 0 : i32
    %c0_i32_1 = arith.constant 0 : i32
    return %c0_i32, %c0_i32_0 : i32, i32
  }
  func.func @transform_6(%arg0: i32) -> (i32, i32) {
    %c0_i32 = arith.constant 0 : i32
    %c0_i32_0 = arith.constant 0 : i32
    %c0_i32_1 = arith.constant 0 : i32
    return %c0_i32, %c0_i32_0 : i32, i32
  }
  func.func @transform_7(%arg0: i32) -> (i32, i32) {
    %c0_i32 = arith.constant 0 : i32
    %c0_i32_0 = arith.constant 0 : i32
    %c0_i32_1 = arith.constant 0 : i32
    return %c0_i32, %c0_i32_0 : i32, i32
  }
  func.func @transform_8(%arg0: i32) -> (i32, i32) {
    %c0_i32 = arith.constant 0 : i32
    %c0_i32_0 = arith.constant 0 : i32
    %c0_i32_1 = arith.constant 0 : i32
    return %c0_i32, %c0_i32_0 : i32, i32
  }
  func.func @transform_9(%arg0: i32) -> (i32, i32) {
    %c0_i32 = arith.constant 0 : i32
    %c0_i32_0 = arith.constant 0 : i32
    %c0_i32_1 = arith.constant 0 : i32
    return %c0_i32, %c0_i32_0 : i32, i32
  }
  func.func @transform_10(%arg0: i32) -> (i32, i32, i32, i32) {
    %c0_i32 = arith.constant 0 : i32
    %c0_i32_0 = arith.constant 0 : i32
    %c0_i32_1 = arith.constant 0 : i32
    %c0_i32_2 = arith.constant 0 : i32
    return %arg0, %c0_i32, %c0_i32_0, %c0_i32_1 : i32, i32, i32, i32
  }
}

</mosaic_0001>

<llo_original>
// kernel: tpu_custom_call.1
$region0: #{tpu_custom_call.1}
  #allocation0 [shape = 'u32[]', space=smem, size = 0x4, offset = 0x4, fixed_abs, tag = 'smem constant byte address 0x4 - core index']
  #allocation1 [shape = 'u32[144,128]{1,0:T(1,128)}', space=vmem, size = 0x12000, scoped, tag = 'internal scratch']
  #allocation2 [shape = 'bf16[8,640]{1,0:T(8,128)(2,1)}', space=vmem, size = 0x2800, scoped, tag = 'scratch operand']
  %s0 = inlined_call_operand.hbm [shape: f32[2,4,8,8], index: 0, kind: input, shape index: {}]
  %s1 = inlined_call_operand.hbm [shape: f32[2,4,16,16], index: 1, kind: input, shape index: {}]
  %s2 = inlined_call_operand.vmem [shape: f32[8,24], index: 2, kind: input, shape index: {}]
  %s3 = inlined_call_operand.vmem [shape: bf16[4,72], index: 3, kind: input, shape index: {}]
  %s4 = inlined_call_operand.vmem [shape: f32[4,1], index: 4, kind: input, shape index: {}]
  %s5 = inlined_call_operand.vmem [shape: f32[4,1], index: 5, kind: input, shape index: {}]
  %s6 = inlined_call_operand.vmem [shape: bf16[8,36], index: 6, kind: input, shape index: {}]
  %s7 = inlined_call_operand.vmem [shape: f32[8,1], index: 7, kind: input, shape index: {}]
  %s8 = inlined_call_operand.vmem [shape: f32[8,1], index: 8, kind: input, shape index: {}]
  %s9 = inlined_call_operand.vmem [shape: f32[1,384], index: 9, kind: input, shape index: {}]
  %s10 = inlined_call_operand.hbm [shape: f32[2,8,16,16], index: 10, kind: output, shape index: {}]
  %s11 = sld [smem:[#allocation0]]
  $region81: #{tpu_custom_call.1} parent=0
    _
  %s13 = ssub.s32 1, %s11
  %s14 = scalar_select 0, %s13, %s11
  $region1: #{tpu_custom_call.1} parent=0
    #allocation3 [shape = 'u8[32768]{0}', space=vmem, size = 0x8000, scoped, tag = 'input window, operand 0']
    #allocation4 [shape = 's32[2]{0}', space=sflag, size = 0x8, scoped, tag = 'scoped memory for tpu_custom_call.1']
    #allocation5 [shape = 's32[2]{0}', space=sflag, size = 0x8, scoped, tag = 'scoped memory for tpu_custom_call.1']
    #allocation6 [shape = 'u8[65536]{0}', space=vmem, size = 0x10000, scoped, tag = 'input window, operand 1']
    #allocation7 [shape = 's32[2]{0}', space=sflag, size = 0x8, scoped, tag = 'scoped memory for tpu_custom_call.1']
    #allocation8 [shape = 'u8[131072]{0}', space=vmem, size = 0x20000, scoped, tag = 'output window, operand 0']
    %15 = vsyncpa [#allocation4], 0
    %s16 = scalar_lea.sflag [#allocation4], 1
    %17 = vsyncpa %s16, 0
    %18 = vsyncpa [#allocation7], 0
    %s19 = scalar_lea.sflag [#allocation7], 1
    %20 = vsyncpa %s19, 0
    %21 = vsyncpa [#allocation5], 0
    %s22 = scalar_lea.sflag [#allocation5], 1
    %23 = vsyncpa %s22, 0
    loop: start=0, step=1, limit=4
    $region2: #{tpu_custom_call.1} parent=1 // loop_pre_header
      _
    $region3: #{tpu_custom_call.1} parent=1 // loop_header
      %s25 = sphi 0, %s29
      %p26 = scmp.ge.s32.totalorder %s25, 4
      %s35 = sphi 0, %s37
      %s38 = sphi 0, %s35
      %s39 = sphi 0, %s38
      %s55 = sphi 0, %s39
      %s61 = sphi 0, %s63
      %s64 = sphi 0, %s61
      %s65 = sphi 0, %s64
      %s81 = sphi 0, %s65
      %s85 = sphi 0, %s85
      %s87 = sphi 0, %s85
      %s88 = sphi 0, %s87
      %s102 = sphi 0, %s88
      %s106 = sphi 0, %s106
      %s108 = sphi 0, %s106
      %s109 = sphi 0, %s108
      %s123 = sphi 0, %s109
      %s127 = sphi 0, %s127
      %s129 = sphi 0, %s127
      %s130 = sphi 0, %s129
      %s144 = sphi 0, %s130
      %s148 = sphi 0, %s148
      %s150 = sphi 0, %s148
      %s151 = sphi 0, %s150
      %s165 = sphi 0, %s151
      %s169 = sphi 0, %s169
      %s171 = sphi 0, %s169
      %s172 = sphi 0, %s171
      %s186 = sphi 0, %s172
      %s190 = sphi 0, %s190
      %s192 = sphi 0, %s190
      %s193 = sphi 0, %s192
      %s207 = sphi 0, %s193
      %s211 = sphi 0, %s211
      %s213 = sphi 0, %s211
      %s214 = sphi 0, %s213
      %s228 = sphi 0, %s214
      %s232 = sphi 0, %s232
      %s234 = sphi 0, %s232
      %s235 = sphi 0, %s234
      %s249 = sphi 0, %s235
      %s255 = sphi 0, %s257
      %s258 = sphi 0, %s255
      %s259 = sphi 0, %s258
      %s275 = sphi 0, %s259
    $region4: #{tpu_custom_call.1} parent=1 // loop_header_branch
      %28 = sbr.rel (%p26) target = $region8
    $region5: #{tpu_custom_call.1} parent=1 // loop_body
      %s30 = ssub.s32 %s25, 1
      %s31 = ssub.s32 %s25, 2
      %s32 = sadd.s32 %s25, 1
      %s33 = ssub.s32 %s25, %s32
      %p34 = scmp.eq.s32.totalorder %s33, 0
      %s36 = sadd.s32 %s35, 1
      %s37 = scalar_select %p34, %s35, %s36
      %p40 = pneg %p34
      %p41 = scmp.eq.s32.totalorder %s25, 1
      %p42 = por %p40, %p41
      %p43 = scmp.ne.s32.totalorder %s35, %s38
      %p44 = scmp.eq.s32.totalorder %s25, 0
      %p45 = por %p43, %p44
      %p46 = scmp.ne.s32.totalorder %s35, %s38
      %p47 = scmp.eq.s32.totalorder %s30, 1
      %p48 = por %p46, %p47
      %p49 = scmp.ne.s32.totalorder %s38, %s39
      %p50 = scmp.eq.s32.totalorder %s30, 0
      %p51 = por %p49, %p50
      %p52 = scmp.ne.s32.totalorder %s38, %s39
      %p53 = scmp.eq.s32.totalorder %s31, 1
      %p54 = por %p52, %p53
      %p56 = scmp.ne.s32.totalorder %s39, %s55
      %p57 = scmp.eq.s32.totalorder %s31, 0
      %p58 = por %p56, %p57
      %s59 = ssub.s32 %s25, %s32
      %p60 = scmp.eq.s32.totalorder %s59, 0
      %s62 = sadd.s32 %s61, 1
      %s63 = scalar_select %p60, %s61, %s62
      %p66 = pneg %p60
      %p67 = scmp.eq.s32.totalorder %s25, 1
      %p68 = por %p66, %p67
      %p69 = scmp.ne.s32.totalorder %s61, %s64
      %p70 = scmp.eq.s32.totalorder %s25, 0
      %p71 = por %p69, %p70
      %p72 = scmp.ne.s32.totalorder %s61, %s64
      %p73 = scmp.eq.s32.totalorder %s30, 1
      %p74 = por %p72, %p73
      %p75 = scmp.ne.s32.totalorder %s64, %s65
      %p76 = scmp.eq.s32.totalorder %s30, 0
      %p77 = por %p75, %p76
      %p78 = scmp.ne.s32.totalorder %s64, %s65
      %p79 = scmp.eq.s32.totalorder %s31, 1
      %p80 = por %p78, %p79
      %p82 = scmp.ne.s32.totalorder %s65, %s81
      %p83 = scmp.eq.s32.totalorder %s31, 0
      %p84 = por %p82, %p83
      %s86 = sadd.s32 %s85, 1
      %p89 = scmp.eq.s32.totalorder %s25, 1
      %p90 = scmp.ne.s32.totalorder %s85, %s87
      %p91 = scmp.eq.s32.totalorder %s25, 0
      %p92 = por %p90, %p91
      %p93 = scmp.ne.s32.totalorder %s85, %s87
      %p94 = scmp.eq.s32.totalorder %s30, 1
      %p95 = por %p93, %p94
      %p96 = scmp.ne.s32.totalorder %s87, %s88
      %p97 = scmp.eq.s32.totalorder %s30, 0
      %p98 = por %p96, %p97
      %p99 = scmp.ne.s32.totalorder %s87, %s88
      %p100 = scmp.eq.s32.totalorder %s31, 1
      %p101 = por %p99, %p100
      %p103 = scmp.ne.s32.totalorder %s88, %s102
      %p104 = scmp.eq.s32.totalorder %s31, 0
      %p105 = por %p103, %p104
      %s107 = sadd.s32 %s106, 1
      %p110 = scmp.eq.s32.totalorder %s25, 1
      %p111 = scmp.ne.s32.totalorder %s106, %s108
      %p112 = scmp.eq.s32.totalorder %s25, 0
      %p113 = por %p111, %p112
      %p114 = scmp.ne.s32.totalorder %s106, %s108
      %p115 = scmp.eq.s32.totalorder %s30, 1
      %p116 = por %p114, %p115
      %p117 = scmp.ne.s32.totalorder %s108, %s109
      %p118 = scmp.eq.s32.totalorder %s30, 0
      %p119 = por %p117, %p118
      %p120 = scmp.ne.s32.totalorder %s108, %s109
      %p121 = scmp.eq.s32.totalorder %s31, 1
      %p122 = por %p120, %p121
      %p124 = scmp.ne.s32.totalorder %s109, %s123
      %p125 = scmp.eq.s32.totalorder %s31, 0
      %p126 = por %p124, %p125
      %s128 = sadd.s32 %s127, 1
      %p131 = scmp.eq.s32.totalorder %s25, 1
      %p132 = scmp.ne.s32.totalorder %s127, %s129
      %p133 = scmp.eq.s32.totalorder %s25, 0
      %p134 = por %p132, %p133
      %p135 = scmp.ne.s32.totalorder %s127, %s129
      %p136 = scmp.eq.s32.totalorder %s30, 1
      %p137 = por %p135, %p136
      %p138 = scmp.ne.s32.totalorder %s129, %s130
      %p139 = scmp.eq.s32.totalorder %s30, 0
      %p140 = por %p138, %p139
      %p141 = scmp.ne.s32.totalorder %s129, %s130
      %p142 = scmp.eq.s32.totalorder %s31, 1
      %p143 = por %p141, %p142
      %p145 = scmp.ne.s32.totalorder %s130, %s144
      %p146 = scmp.eq.s32.totalorder %s31, 0
      %p147 = por %p145, %p146
      %s149 = sadd.s32 %s148, 1
      %p152 = scmp.eq.s32.totalorder %s25, 1
      %p153 = scmp.ne.s32.totalorder %s148, %s150
      %p154 = scmp.eq.s32.totalorder %s25, 0
      %p155 = por %p153, %p154
      %p156 = scmp.ne.s32.totalorder %s148, %s150
      %p157 = scmp.eq.s32.totalorder %s30, 1
      %p158 = por %p156, %p157
      %p159 = scmp.ne.s32.totalorder %s150, %s151
      %p160 = scmp.eq.s32.totalorder %s30, 0
      %p161 = por %p159, %p160
      %p162 = scmp.ne.s32.totalorder %s150, %s151
      %p163 = scmp.eq.s32.totalorder %s31, 1
      %p164 = por %p162, %p163
      %p166 = scmp.ne.s32.totalorder %s151, %s165
      %p167 = scmp.eq.s32.totalorder %s31, 0
      %p168 = por %p166, %p167
      %s170 = sadd.s32 %s169, 1
      %p173 = scmp.eq.s32.totalorder %s25, 1
      %p174 = scmp.ne.s32.totalorder %s169, %s171
      %p175 = scmp.eq.s32.totalorder %s25, 0
      %p176 = por %p174, %p175
      %p177 = scmp.ne.s32.totalorder %s169, %s171
      %p178 = scmp.eq.s32.totalorder %s30, 1
      %p179 = por %p177, %p178
      %p180 = scmp.ne.s32.totalorder %s171, %s172
      %p181 = scmp.eq.s32.totalorder %s30, 0
      %p182 = por %p180, %p181
      %p183 = scmp.ne.s32.totalorder %s171, %s172
      %p184 = scmp.eq.s32.totalorder %s31, 1
      %p185 = por %p183, %p184
      %p187 = scmp.ne.s32.totalorder %s172, %s186
      %p188 = scmp.eq.s32.totalorder %s31, 0
      %p189 = por %p187, %p188
      %s191 = sadd.s32 %s190, 1
      %p194 = scmp.eq.s32.totalorder %s25, 1
      %p195 = scmp.ne.s32.totalorder %s190, %s192
      %p196 = scmp.eq.s32.totalorder %s25, 0
      %p197 = por %p195, %p196
      %p198 = scmp.ne.s32.totalorder %s190, %s192
      %p199 = scmp.eq.s32.totalorder %s30, 1
      %p200 = por %p198, %p199
      %p201 = scmp.ne.s32.totalorder %s192, %s193
      %p202 = scmp.eq.s32.totalorder %s30, 0
      %p203 = por %p201, %p202
      %p204 = scmp.ne.s32.totalorder %s192, %s193
      %p205 = scmp.eq.s32.totalorder %s31, 1
      %p206 = por %p204, %p205
      %p208 = scmp.ne.s32.totalorder %s193, %s207
      %p209 = scmp.eq.s32.totalorder %s31, 0
      %p210 = por %p208, %p209
      %s212 = sadd.s32 %s211, 1
      %p215 = scmp.eq.s32.totalorder %s25, 1
      %p216 = scmp.ne.s32.totalorder %s211, %s213
      %p217 = scmp.eq.s32.totalorder %s25, 0
      %p218 = por %p216, %p217
      %p219 = scmp.ne.s32.totalorder %s211, %s213
      %p220 = scmp.eq.s32.totalorder %s30, 1
      %p221 = por %p219, %p220
      %p222 = scmp.ne.s32.totalorder %s213, %s214
      %p223 = scmp.eq.s32.totalorder %s30, 0
      %p224 = por %p222, %p223
      %p225 = scmp.ne.s32.totalorder %s213, %s214
      %p226 = scmp.eq.s32.totalorder %s31, 1
      %p227 = por %p225, %p226
      %p229 = scmp.ne.s32.totalorder %s214, %s228
      %p230 = scmp.eq.s32.totalorder %s31, 0
      %p231 = por %p229, %p230
      %s233 = sadd.s32 %s232, 1
      %p236 = scmp.eq.s32.totalorder %s25, 1
      %p237 = scmp.ne.s32.totalorder %s232, %s234
      %p238 = scmp.eq.s32.totalorder %s25, 0
      %p239 = por %p237, %p238
      %p240 = scmp.ne.s32.totalorder %s232, %s234
      %p241 = scmp.eq.s32.totalorder %s30, 1
      %p242 = por %p240, %p241
      %p243 = scmp.ne.s32.totalorder %s234, %s235
      %p244 = scmp.eq.s32.totalorder %s30, 0
      %p245 = por %p243, %p244
      %p246 = scmp.ne.s32.totalorder %s234, %s235
      %p247 = scmp.eq.s32.totalorder %s31, 1
      %p248 = por %p246, %p247
      %p250 = scmp.ne.s32.totalorder %s235, %s249
      %p251 = scmp.eq.s32.totalorder %s31, 0
      %p252 = por %p250, %p251
      %s253 = ssub.s32 %s25, %s32
      %p254 = scmp.eq.s32.totalorder %s253, 0
      %s256 = sadd.s32 %s255, 1
      %s257 = scalar_select %p254, %s255, %s256
      %p260 = pneg %p254
      %p261 = scmp.eq.s32.totalorder %s25, 1
      %p262 = por %p260, %p261
      %p263 = scmp.ne.s32.totalorder %s255, %s258
      %p264 = scmp.eq.s32.totalorder %s25, 0
      %p265 = por %p263, %p264
      %p266 = scmp.ne.s32.totalorder %s255, %s258
      %p267 = scmp.eq.s32.totalorder %s30, 1
      %p268 = por %p266, %p267
      %p269 = scmp.ne.s32.totalorder %s258, %s259
      %p270 = scmp.eq.s32.totalorder %s30, 0
      %p271 = por %p269, %p270
      %p272 = scmp.ne.s32.totalorder %s258, %s259
      %p273 = scmp.eq.s32.totalorder %s31, 1
      %p274 = por %p272, %p273
      %p276 = scmp.ne.s32.totalorder %s259, %s275
      %p277 = scmp.eq.s32.totalorder %s31, 0
      %p278 = por %p276, %p277
      %p279 = scmp.le.s32.totalorder 1, %s25
      %p280 = scmp.lt.s32.totalorder %s25, 3
      %p281 = pnand %p279, %p280
      %p282 = pneg %p281
      // Predicated region
      $region9: #{tpu_custom_call.1} parent=5 // pred_check
        _
      $region10: #{tpu_custom_call.1} parent=5 // pred_check_branch
        %284 = sbr.rel (%p281) target = $region12
      $region11: #{tpu_custom_call.1} parent=5 // pred_region
        %s285 = ssub.s32 %s25, 1
        // Predicated region
        $region13: #{tpu_custom_call.1} parent=11 // pred_check
          %p286 = pneg %p98
        $region14: #{tpu_custom_call.1} parent=11 // pred_check_branch
          %288 = sbr.rel (%p286) target = $region16
        $region15: #{tpu_custom_call.1} parent=11 // pred_region
          _
        $region16: #{tpu_custom_call.1} parent=11 // pred_fallthru
          _
        // Predicated region
        $region17: #{tpu_custom_call.1} parent=11 // pred_check
          %p289 = pneg %p119
        $region18: #{tpu_custom_call.1} parent=11 // pred_check_branch
          %291 = sbr.rel (%p289) target = $region20
        $region19: #{tpu_custom_call.1} parent=11 // pred_region
          _
        $region20: #{tpu_custom_call.1} parent=11 // pred_fallthru
          _
        // Predicated region
        $region21: #{tpu_custom_call.1} parent=11 // pred_check
          %p292 = pneg %p140
        $region22: #{tpu_custom_call.1} parent=11 // pred_check_branch
          %294 = sbr.rel (%p292) target = $region24
        $region23: #{tpu_custom_call.1} parent=11 // pred_region
          _
        $region24: #{tpu_custom_call.1} parent=11 // pred_fallthru
          _
        // Predicated region
        $region25: #{tpu_custom_call.1} parent=11 // pred_check
          %p295 = pneg %p161
        $region26: #{tpu_custom_call.1} parent=11 // pred_check_branch
          %297 = sbr.rel (%p295) target = $region28
        $region27: #{tpu_custom_call.1} parent=11 // pred_region
          _
        $region28: #{tpu_custom_call.1} parent=11 // pred_fallthru
          _
        // Predicated region
        $region29: #{tpu_custom_call.1} parent=11 // pred_check
          %p298 = pneg %p182
        $region30: #{tpu_custom_call.1} parent=11 // pred_check_branch
          %300 = sbr.rel (%p298) target = $region32
        $region31: #{tpu_custom_call.1} parent=11 // pred_region
          _
        $region32: #{tpu_custom_call.1} parent=11 // pred_fallthru
          _
        // Predicated region
        $region33: #{tpu_custom_call.1} parent=11 // pred_check
          %p301 = pneg %p203
        $region34: #{tpu_custom_call.1} parent=11 // pred_check_branch
          %303 = sbr.rel (%p301) target = $region36
        $region35: #{tpu_custom_call.1} parent=11 // pred_region
          _
        $region36: #{tpu_custom_call.1} parent=11 // pred_fallthru
          _
        // Predicated region
        $region37: #{tpu_custom_call.1} parent=11 // pred_check
          %p304 = pneg %p224
        $region38: #{tpu_custom_call.1} parent=11 // pred_check_branch
          %306 = sbr.rel (%p304) target = $region40
        $region39: #{tpu_custom_call.1} parent=11 // pred_region
          _
        $region40: #{tpu_custom_call.1} parent=11 // pred_fallthru
          _
        // Predicated region
        $region41: #{tpu_custom_call.1} parent=11 // pred_check
          %p307 = pneg %p245
        $region42: #{tpu_custom_call.1} parent=11 // pred_check_branch
          %309 = sbr.rel (%p307) target = $region44
        $region43: #{tpu_custom_call.1} parent=11 // pred_region
          _
        $region44: #{tpu_custom_call.1} parent=11 // pred_fallthru
          _
      $region12: #{tpu_custom_call.1} parent=5 // pred_fallthru
        _
      %p310 = scmp.lt.s32.totalorder %s25, 2
      // Predicated region
      $region45: #{tpu_custom_call.1} parent=5 // pred_check
        %p311 = pneg %p310
      $region46: #{tpu_custom_call.1} parent=5 // pred_check_branch
        %313 = sbr.rel (%p311) target = $region48
      $region47: #{tpu_custom_call.1} parent=5 // pred_region
        // Predicated region
        $region49: #{tpu_custom_call.1} parent=47 // pred_check
          %p314 = pneg %p45
        $region50: #{tpu_custom_call.1} parent=47 // pred_check_branch
          %316 = sbr.rel (%p314) target = $region52
        $region51: #{tpu_custom_call.1} parent=47 // pred_region
          %s317 = sand.u32 %s35, 1
          %s318 = scalar_lea.sflag [#allocation4], %s317
          %s319 = sand.u32 %s35, 1
          %s320 = smul.addr %s319, 32
          %s321 = scalar_lea.vmem [#allocation3], %s320
          %s323 = ssub.s32 512, 512
          %324 = vsyncadd %s318, %s323
          %s325 = smul.addr %s25, 4
          %s326 = smul.addr %s325, 128
          %s327 = scalar_lea.hbm %s0, %s326
          %s328 = sshll.u32 %s321, 4
          %s329 = int_to_ptr.vmem [resolvable:$true] %s328
          %334 = dma.hbm_to_vmem [thread:$0]  %s327, 512, %s329, %s318, 128, 128, 8
        $region52: #{tpu_custom_call.1} parent=47 // pred_fallthru
          _
        // Predicated region
        $region53: #{tpu_custom_call.1} parent=47 // pred_check
          %p335 = pneg %p71
        $region54: #{tpu_custom_call.1} parent=47 // pred_check_branch
          %337 = sbr.rel (%p335) target = $region56
        $region55: #{tpu_custom_call.1} parent=47 // pred_region
          %s338 = sand.u32 %s61, 1
          %s339 = scalar_lea.sflag [#allocation7], %s338
          %s340 = sand.u32 %s61, 1
          %s341 = smul.addr %s340, 64
          %s342 = scalar_lea.vmem [#allocation6], %s341
          %s344 = ssub.s32 1024, 1024
          %345 = vsyncadd %s339, %s344
          %s346 = smul.addr %s25, 8
          %s347 = smul.addr %s346, 128
          %s348 = scalar_lea.hbm %s1, %s347
          %s349 = sshll.u32 %s342, 4
          %s350 = int_to_ptr.vmem [resolvable:$true] %s349
          %355 = dma.hbm_to_vmem [thread:$0]  %s348, 1024, %s350, %s339, 128, 128, 8
        $region56: #{tpu_custom_call.1} parent=47 // pred_fallthru
          _
      $region48: #{tpu_custom_call.1} parent=5 // pred_fallthru
        _
      %p356 = scmp.le.s32.totalorder 1, %s25
      %p357 = scmp.lt.s32.totalorder %s25, 3
      %p358 = pnand %p356, %p357
      %p359 = pneg %p358
      // Predicated region
      $region57: #{tpu_custom_call.1} parent=5 // pred_check
        _
      $region58: #{tpu_custom_call.1} parent=5 // pred_check_branch
        %361 = sbr.rel (%p358) target = $region60
      $region59: #{tpu_custom_call.1} parent=5 // pred_region
        %s362 = ssub.s32 %s25, 1
        %s363 = sand.u32 %s38, 1
        %s364 = scalar_lea.sflag [#allocation4], %s363
        %s365 = sand.u32 %s38, 1
        %s366 = smul.addr %s365, 32
        %s367 = scalar_lea.vmem [#allocation3], %s366
        // Predicated region
        $region61: #{tpu_custom_call.1} parent=59 // pred_check
          %p368 = pneg %p51
        $region62: #{tpu_custom_call.1} parent=59 // pred_check_branch
          %370 = sbr.rel (%p368) target = $region64
        $region63: #{tpu_custom_call.1} parent=59 // pred_region
          %371 = dma.done %s364, 512
        $region64: #{tpu_custom_call.1} parent=59 // pred_fallthru
          _
        %s372 = sand.u32 %s64, 1
        %s373 = scalar_lea.sflag [#allocation7], %s372
        %s374 = sand.u32 %s64, 1
        %s375 = smul.addr %s374, 64
        %s376 = scalar_lea.vmem [#allocation6], %s375
        // Predicated region
        $region65: #{tpu_custom_call.1} parent=59 // pred_check
          %p377 = pneg %p77
        $region66: #{tpu_custom_call.1} parent=59 // pred_check_branch
          %379 = sbr.rel (%p377) target = $region68
        $region67: #{tpu_custom_call.1} parent=59 // pred_region
          %380 = dma.done %s373, 1024
        $region68: #{tpu_custom_call.1} parent=59 // pred_fallthru
          _
        %s381 = sand.u32 %s38, 1
        %s382 = scalar_lea.sflag [#allocation4], %s381
        %s383 = sand.u32 %s38, 1
        %s384 = smul.addr %s383, 32
        %s385 = scalar_lea.vmem [#allocation3], %s384
        %p386 = pneg %p51
        %p387 = pneg %p48
        %s388 = sand.u32 %s64, 1
        %s389 = scalar_lea.sflag [#allocation7], %s388
        %s390 = sand.u32 %s64, 1
        %s391 = smul.addr %s390, 64
        %s392 = scalar_lea.vmem [#allocation6], %s391
        %p393 = pneg %p77
        %p394 = pneg %p74
        %p395 = pneg %p98
        %p396 = pneg %p95
        %p397 = pneg %p119
        %p398 = pneg %p116
        %p399 = pneg %p140
        %p400 = pneg %p137
        %p401 = pneg %p161
        %p402 = pneg %p158
        %p403 = pneg %p182
        %p404 = pneg %p179
        %p405 = pneg %p203
        %p406 = pneg %p200
        %p407 = pneg %p224
        %p408 = pneg %p221
        %p409 = pneg %p245
        %p410 = pneg %p242
        %p411 = pneg %p271
        %p412 = pneg %p268
        %s413 = sand.u32 %s258, 1
        %s414 = scalar_lea.sflag [#allocation5], %s413
        %s415 = sand.u32 %s258, 1
        %s416 = smul.addr %s415, 128
        %s417 = scalar_lea.vmem [#allocation8], %s416
        %419 = vst [vmem:[#allocation2] sm:$0xf] 0
        %420 = vst [vmem:[#allocation2 + $0x10] sm:$0xf] 0
        %vm421 = vcmask 189440
        %422 = vst.msk [vmem:[#allocation2 + $0x4] sm:$0x3] %vm421, 0
        %v423 = vld [vmem:[%s376] sm:$0x1]
        %v424 = vld [vmem:[%s376 + $0x10] sm:$0x1]
        %v425 = vld [vmem:[%s376 + $0x20] sm:$0x1]
        %v426 = vld [vmem:[%s376 + $0x30] sm:$0x1]
        %v427 = vpack.c.bf16 %v423, %v423
        %v428 = vpack.c.bf16 %v424, %v424
        %v429 = vpack.c.bf16 %v425, %v425
        %v430 = vpack.c.bf16 %v426, %v426
        %v435 = vunpack.c.l.b16 %v427
        %v436 = vunpack.c.l.b16 %v428
        %v437 = vunpack.c.l.b16 %v429
        %v438 = vunpack.c.l.b16 %v430
        %v439 = vpack.c.b16 %v435, %v435
        %v440 = vpack.c.b16 %v436, %v436
        %v441 = vpack.c.b16 %v437, %v437
        %v442 = vpack.c.b16 %v438, %v438
        %v443 = vunpack.c.l.b16 %v439
        %v444 = vunpack.c.l.b16 %v440
        %v445 = vunpack.c.l.b16 %v441
        %v446 = vunpack.c.l.b16 %v442
        %v447 = vrot.slane %v444, 7
        %vm448 = vcmask 1041409
        %v449 = vsel %vm448, %v447, %v443
        %v450 = vrot.slane %v445, 6
        %vm451 = vcmask 1042434
        %v452 = vsel %vm451, %v450, %v449
        %v453 = vrot.slane %v446, 5
        %vm454 = vcmask 1043459
        %v455 = vsel %vm454, %v453, %v452
        %v456 = vpack.c.b16 %v455, %v455
        %457 = vrot.lane.b32.xlu0 %v456, 1
        %v458 = vpop.permute.xlu0 %457
        %vm460 = vcmask 132104
        %461 = vst.msk [vmem:[#allocation2 + $0x4] sm:$0x3] %vm460, %v458
        %vm462 = vcmask 386240
        %463 = vst.msk [vmem:[#allocation2 + $0x4] sm:$0x3] %vm462, 0
        %v464 = vld [vmem:[%s376 + $0x1] sm:$0x1]
        %v465 = vld [vmem:[%s376 + $0x11] sm:$0x1]
        %v466 = vld [vmem:[%s376 + $0x21] sm:$0x1]
        %v467 = vld [vmem:[%s376 + $0x31] sm:$0x1]
        %v468 = vpack.c.bf16 %v464, %v464
        %v469 = vpack.c.bf16 %v465, %v465
        %v470 = vpack.c.bf16 %v466, %v466
        %v471 = vpack.c.bf16 %v467, %v467
        %v476 = vunpack.c.l.b16 %v468
        %v477 = vunpack.c.l.b16 %v469
        %v478 = vunpack.c.l.b16 %v470
        %v479 = vunpack.c.l.b16 %v471
        %v480 = vpack.c.b16 %v476, %v476
        %v481 = vpack.c.b16 %v477, %v477
        %v482 = vpack.c.b16 %v478, %v478
        %v483 = vpack.c.b16 %v479, %v479
        %v484 = vunpack.c.l.b16 %v480
        %v485 = vunpack.c.l.b16 %v481
        %v486 = vunpack.c.l.b16 %v482
        %v487 = vunpack.c.l.b16 %v483
        %v488 = vrot.slane %v485, 7
        %v489 = vsel %vm448, %v488, %v484
        %v490 = vrot.slane %v486, 6
        %v491 = vsel %vm451, %v490, %v489
        %v492 = vrot.slane %v487, 5
        %v493 = vsel %vm454, %v492, %v491
        %v494 = vpack.c.b16 %v493, %v493
        %495 = vrot.lane.b32.xlu0 %v494, 25
        %v496 = vpop.permute.xlu0 %495
        %vm498 = vcmask 328904
        %499 = vst.msk [vmem:[#allocation2 + $0x4] sm:$0x3] %vm498, %v496
        %vm500 = vcmask 583040
        %501 = vst.msk [vmem:[#allocation2 + $0x4] sm:$0x3] %vm500, 0
        %v502 = vld [vmem:[%s376 + $0x2] sm:$0x1]
        %v503 = vld [vmem:[%s376 + $0x12] sm:$0x1]
        %v504 = vld [vmem:[%s376 + $0x22] sm:$0x1]
        %v505 = vld [vmem:[%s376 + $0x32] sm:$0x1]
        %v506 = vpack.c.bf16 %v502, %v502
        %v507 = vpack.c.bf16 %v503, %v503
        %v508 = vpack.c.bf16 %v504, %v504
        %v509 = vpack.c.bf16 %v505, %v505
        %v514 = vunpack.c.l.b16 %v506
        %v515 = vunpack.c.l.b16 %v507
        %v516 = vunpack.c.l.b16 %v508
        %v517 = vunpack.c.l.b16 %v509
        %v518 = vpack.c.b16 %v514, %v514
        %v519 = vpack.c.b16 %v515, %v515
        %v520 = vpack.c.b16 %v516, %v516
        %v521 = vpack.c.b16 %v517, %v517
        %v522 = vunpack.c.l.b16 %v518
        %v523 = vunpack.c.l.b16 %v519
        %v524 = vunpack.c.l.b16 %v520
        %v525 = vunpack.c.l.b16 %v521
        %v526 = vrot.slane %v523, 7
        %v527 = vsel %vm448, %v526, %v522
        %v528 = vrot.slane %v524, 6
        %v529 = vsel %vm451, %v528, %v527
        %v530 = vrot.slane %v525, 5
        %v531 = vsel %vm454, %v530, %v529
        %v532 = vpack.c.b16 %v531, %v531
        %533 = vrot.lane.b32.xlu0 %v532, 49
        %v534 = vpop.permute.xlu0 %533
        %vm536 = vcmask 525704
        %537 = vst.msk [vmem:[#allocation2 + $0x4] sm:$0x3] %vm536, %v534
        %vm538 = vcmask 779840
        %539 = vst.msk [vmem:[#allocation2 + $0x4] sm:$0x3] %vm538, 0
        %v540 = vld [vmem:[%s376 + $0x3] sm:$0x1]
        %v541 = vld [vmem:[%s376 + $0x13] sm:$0x1]
        %v542 = vld [vmem:[%s376 + $0x23] sm:$0x1]
        %v543 = vld [vmem:[%s376 + $0x33] sm:$0x1]
        %v544 = vpack.c.bf16 %v540, %v540
        %v545 = vpack.c.bf16 %v541, %v541
        %v546 = vpack.c.bf16 %v542, %v542
        %v547 = vpack.c.bf16 %v543, %v543
        %v552 = vunpack.c.l.b16 %v544
        %v553 = vunpack.c.l.b16 %v545
        %v554 = vunpack.c.l.b16 %v546
        %v555 = vunpack.c.l.b16 %v547
        %v556 = vpack.c.b16 %v552, %v552
        %v557 = vpack.c.b16 %v553, %v553
        %v558 = vpack.c.b16 %v554, %v554
        %v559 = vpack.c.b16 %v555, %v555
        %v560 = vunpack.c.l.b16 %v556
        %v561 = vunpack.c.l.b16 %v557
        %v562 = vunpack.c.l.b16 %v558
        %v563 = vunpack.c.l.b16 %v559
        %v564 = vrot.slane %v561, 7
        %v565 = vsel %vm448, %v564, %v560
        %v566 = vrot.slane %v562, 6
        %v567 = vsel %vm451, %v566, %v565
        %v568 = vrot.slane %v563, 5
        %v569 = vsel %vm454, %v568, %v567
        %v570 = vpack.c.b16 %v569, %v569
        %571 = vrot.lane.b32.xlu0 %v570, 73
        %v572 = vpop.permute.xlu0 %571
        %vm574 = vcmask 722504
        %575 = vst.msk [vmem:[#allocation2 + $0x4] sm:$0x3] %vm574, %v572
        %vm576 = vcmask 976640
        %577 = vst.msk [vmem:[#allocation2 + $0x4] sm:$0x3] %vm576, 0
        %v578 = vld [vmem:[%s376 + $0x4] sm:$0x1]
        %v579 = vld [vmem:[%s376 + $0x14] sm:$0x1]
        %v580 = vld [vmem:[%s376 + $0x24] sm:$0x1]
        %v581 = vld [vmem:[%s376 + $0x34] sm:$0x1]
        %v582 = vpack.c.bf16 %v578, %v578
        %v583 = vpack.c.bf16 %v579, %v579
        %v584 = vpack.c.bf16 %v580, %v580
        %v585 = vpack.c.bf16 %v581, %v581
        %v590 = vunpack.c.l.b16 %v582
        %v591 = vunpack.c.l.b16 %v583
        %v592 = vunpack.c.l.b16 %v584
        %v593 = vunpack.c.l.b16 %v585
        %v594 = vpack.c.b16 %v590, %v590
        %v595 = vpack.c.b16 %v591, %v591
        %v596 = vpack.c.b16 %v592, %v592
        %v597 = vpack.c.b16 %v593, %v593
        %v598 = vunpack.c.l.b16 %v594
        %v599 = vunpack.c.l.b16 %v595
        %v600 = vunpack.c.l.b16 %v596
        %v601 = vunpack.c.l.b16 %v597
        %v602 = vrot.slane %v599, 7
        %v603 = vsel %vm448, %v602, %v598
        %v604 = vrot.slane %v600, 6
        %v605 = vsel %vm451, %v604, %v603
        %v606 = vrot.slane %v601, 5
        %v607 = vsel %vm454, %v606, %v605
        %v608 = vpack.c.b16 %v607, %v607
        %609 = vrot.lane.b32.xlu0 %v608, 97
        %v610 = vpop.permute.xlu0 %609
        %vm612 = vcmask 919304
        %613 = vst.msk [vmem:[#allocation2 + $0x4] sm:$0x3] %vm612, %v610
        %vm614 = vcmask 1042368
        %vm615 = vcmask 128004
        %vm616 = vmor %vm615, %vm614
        %617 = vst.msk [vmem:[#allocation2 + $0x4] sm:$0x33] %vm616, 0
        %v618 = vld [vmem:[%s376 + $0x5] sm:$0x1]
        %v619 = vld [vmem:[%s376 + $0x15] sm:$0x1]
        %v620 = vld [vmem:[%s376 + $0x25] sm:$0x1]
        %v621 = vld [vmem:[%s376 + $0x35] sm:$0x1]
        %v622 = vpack.c.bf16 %v618, %v618
        %v623 = vpack.c.bf16 %v619, %v619
        %v624 = vpack.c.bf16 %v620, %v620
        %v625 = vpack.c.bf16 %v621, %v621
        %v630 = vunpack.c.l.b16 %v622
        %v631 = vunpack.c.l.b16 %v623
        %v632 = vunpack.c.l.b16 %v624
        %v633 = vunpack.c.l.b16 %v625
        %v634 = vpack.c.b16 %v630, %v630
        %v635 = vpack.c.b16 %v631, %v631
        %v636 = vpack.c.b16 %v632, %v632
        %v637 = vpack.c.b16 %v633, %v633
        %v638 = vunpack.c.l.b16 %v634
        %v639 = vunpack.c.l.b16 %v635
        %v640 = vunpack.c.l.b16 %v636
        %v641 = vunpack.c.l.b16 %v637
        %v642 = vrot.slane %v639, 7
        %v643 = vsel %vm448, %v642, %v638
        %v644 = vrot.slane %v640, 6
        %v645 = vsel %vm451, %v644, %v643
        %v646 = vrot.slane %v641, 5
        %v647 = vsel %vm454, %v646, %v645
        %v648 = vpack.c.b16 %v647, %v647
        %649 = vrot.lane.b32.xlu0 %v648, 121
        %v650 = vpop.permute.xlu0 %649
        %v651 = vrot.slane %v650, 4
        %vm652 = vcmask 990208
        %v653 = vsel %vm652, %v651, %v650
        %vm655 = vcmask 1042376
        %vm656 = vcmask 70660
        %vm657 = vmor %vm656, %vm655
        %658 = vst.msk [vmem:[#allocation2 + $0x4] sm:$0x33] %vm657, %v653
        %vm659 = vcmask 320640
        %660 = vst.msk [vmem:[#allocation2 + $0x8] sm:$0x3] %vm659, 0
        %v661 = vld [vmem:[%s376 + $0x6] sm:$0x1]
        %v662 = vld [vmem:[%s376 + $0x16] sm:$0x1]
        %v663 = vld [vmem:[%s376 + $0x26] sm:$0x1]
        %v664 = vld [vmem:[%s376 + $0x36] sm:$0x1]
        %v665 = vpack.c.bf16 %v661, %v661
        %v666 = vpack.c.bf16 %v662, %v662
        %v667 = vpack.c.bf16 %v663, %v663
        %v668 = vpack.c.bf16 %v664, %v664
        %v673 = vunpack.c.l.b16 %v665
        %v674 = vunpack.c.l.b16 %v666
        %v675 = vunpack.c.l.b16 %v667
        %v676 = vunpack.c.l.b16 %v668
        %v677 = vpack.c.b16 %v673, %v673
        %v678 = vpack.c.b16 %v674, %v674
        %v679 = vpack.c.b16 %v675, %v675
        %v680 = vpack.c.b16 %v676, %v676
        %v681 = vunpack.c.l.b16 %v677
        %v682 = vunpack.c.l.b16 %v678
        %v683 = vunpack.c.l.b16 %v679
        %v684 = vunpack.c.l.b16 %v680
        %v685 = vrot.slane %v682, 7
        %v686 = vsel %vm448, %v685, %v681
        %v687 = vrot.slane %v683, 6
        %v688 = vsel %vm451, %v687, %v686
        %v689 = vrot.slane %v684, 5
        %v690 = vsel %vm454, %v689, %v688
        %v691 = vpack.c.b16 %v690, %v690
        %692 = vrot.lane.b32.xlu0 %v691, 17
        %v693 = vpop.permute.xlu0 %692
        %vm695 = vcmask 263304
        %696 = vst.msk [vmem:[#allocation2 + $0x8] sm:$0x3] %vm695, %v693
        %vm697 = vcmask 517440
        %698 = vst.msk [vmem:[#allocation2 + $0x8] sm:$0x3] %vm697, 0
        %v699 = vld [vmem:[%s376 + $0x7] sm:$0x1]
        %v700 = vld [vmem:[%s376 + $0x17] sm:$0x1]
        %v701 = vld [vmem:[%s376 + $0x27] sm:$0x1]
        %v702 = vld [vmem:[%s376 + $0x37] sm:$0x1]
        %v703 = vpack.c.bf16 %v699, %v699
        %v704 = vpack.c.bf16 %v700, %v700
        %v705 = vpack.c.bf16 %v701, %v701
        %v706 = vpack.c.bf16 %v702, %v702
        %v711 = vunpack.c.l.b16 %v703
        %v712 = vunpack.c.l.b16 %v704
        %v713 = vunpack.c.l.b16 %v705
        %v714 = vunpack.c.l.b16 %v706
        %v715 = vpack.c.b16 %v711, %v711
        %v716 = vpack.c.b16 %v712, %v712
        %v717 = vpack.c.b16 %v713, %v713
        %v718 = vpack.c.b16 %v714, %v714
        %v719 = vunpack.c.l.b16 %v715
        %v720 = vunpack.c.l.b16 %v716
        %v721 = vunpack.c.l.b16 %v717
        %v722 = vunpack.c.l.b16 %v718
        %v723 = vrot.slane %v720, 7
        %v724 = vsel %vm448, %v723, %v719
        %v725 = vrot.slane %v721, 6
        %v726 = vsel %vm451, %v725, %v724
        %v727 = vrot.slane %v722, 5
        %v728 = vsel %vm454, %v727, %v726
        %v729 = vpack.c.b16 %v728, %v728
        %730 = vrot.lane.b32.xlu0 %v729, 41
        %v731 = vpop.permute.xlu0 %730
        %vm733 = vcmask 460104
        %734 = vst.msk [vmem:[#allocation2 + $0x8] sm:$0x3] %vm733, %v731
        %vm735 = vcmask 714240
        %736 = vst.msk [vmem:[#allocation2 + $0x8] sm:$0x3] %vm735, 0
        %v737 = vld [vmem:[%s376 + $0x8] sm:$0x1]
        %v738 = vld [vmem:[%s376 + $0x18] sm:$0x1]
        %v739 = vld [vmem:[%s376 + $0x28] sm:$0x1]
        %v740 = vld [vmem:[%s376 + $0x38] sm:$0x1]
        %v741 = vpack.c.bf16 %v737, %v737
        %v742 = vpack.c.bf16 %v738, %v738
        %v743 = vpack.c.bf16 %v739, %v739
        %v744 = vpack.c.bf16 %v740, %v740
        %v749 = vunpack.c.l.b16 %v741
        %v750 = vunpack.c.l.b16 %v742
        %v751 = vunpack.c.l.b16 %v743
        %v752 = vunpack.c.l.b16 %v744
        %v753 = vpack.c.b16 %v749, %v749
        %v754 = vpack.c.b16 %v750, %v750
        %v755 = vpack.c.b16 %v751, %v751
        %v756 = vpack.c.b16 %v752, %v752
        %v757 = vunpack.c.l.b16 %v753
        %v758 = vunpack.c.l.b16 %v754
        %v759 = vunpack.c.l.b16 %v755
        %v760 = vunpack.c.l.b16 %v756
        %v761 = vrot.slane %v758, 7
        %v762 = vsel %vm448, %v761, %v757
        %v763 = vrot.slane %v759, 6
        %v764 = vsel %vm451, %v763, %v762
        %v765 = vrot.slane %v760, 5
        %v766 = vsel %vm454, %v765, %v764
        %v767 = vpack.c.b16 %v766, %v766
        %768 = vrot.lane.b32.xlu0 %v767, 65
        %v769 = vpop.permute.xlu0 %768
        %vm771 = vcmask 656904
        %772 = vst.msk [vmem:[#allocation2 + $0x8] sm:$0x3] %vm771, %v769
        %vm773 = vcmask 911040
        %774 = vst.msk [vmem:[#allocation2 + $0x8] sm:$0x3] %vm773, 0
        %v775 = vld [vmem:[%s376 + $0x9] sm:$0x1]
        %v776 = vld [vmem:[%s376 + $0x19] sm:$0x1]
        %v777 = vld [vmem:[%s376 + $0x29] sm:$0x1]
        %v778 = vld [vmem:[%s376 + $0x39] sm:$0x1]
        %v779 = vpack.c.bf16 %v775, %v775
        %v780 = vpack.c.bf16 %v776, %v776
        %v781 = vpack.c.bf16 %v777, %v777
        %v782 = vpack.c.bf16 %v778, %v778
        %v787 = vunpack.c.l.b16 %v779
        %v788 = vunpack.c.l.b16 %v780
        %v789 = vunpack.c.l.b16 %v781
        %v790 = vunpack.c.l.b16 %v782
        %v791 = vpack.c.b16 %v787, %v787
        %v792 = vpack.c.b16 %v788, %v788
        %v793 = vpack.c.b16 %v789, %v789
        %v794 = vpack.c.b16 %v790, %v790
        %v795 = vunpack.c.l.b16 %v791
        %v796 = vunpack.c.l.b16 %v792
        %v797 = vunpack.c.l.b16 %v793
        %v798 = vunpack.c.l.b16 %v794
        %v799 = vrot.slane %v796, 7
        %v800 = vsel %vm448, %v799, %v795
        %v801 = vrot.slane %v797, 6
        %v802 = vsel %vm451, %v801, %v800
        %v803 = vrot.slane %v798, 5
        %v804 = vsel %vm454, %v803, %v802
        %v805 = vpack.c.b16 %v804, %v804
        %806 = vrot.lane.b32.xlu0 %v805, 89
        %v807 = vpop.permute.xlu0 %806
        %vm809 = vcmask 853704
        %810 = vst.msk [vmem:[#allocation2 + $0x8] sm:$0x3] %vm809, %v807
        %vm811 = vcmask 1042304
        %vm812 = vcmask 62468
        %vm813 = vmor %vm812, %vm811
        %814 = vst.msk [vmem:[#allocation2 + $0x8] sm:$0x33] %vm813, 0
        %v815 = vld [vmem:[%s376 + $0xa] sm:$0x1]
        %v816 = vld [vmem:[%s376 + $0x1a] sm:$0x1]
        %v817 = vld [vmem:[%s376 + $0x2a] sm:$0x1]
        %v818 = vld [vmem:[%s376 + $0x3a] sm:$0x1]
        %v819 = vpack.c.bf16 %v815, %v815
        %v820 = vpack.c.bf16 %v816, %v816
        %v821 = vpack.c.bf16 %v817, %v817
        %v822 = vpack.c.bf16 %v818, %v818
        %v827 = vunpack.c.l.b16 %v819
        %v828 = vunpack.c.l.b16 %v820
        %v829 = vunpack.c.l.b16 %v821
        %v830 = vunpack.c.l.b16 %v822
        %v831 = vpack.c.b16 %v827, %v827
        %v832 = vpack.c.b16 %v828, %v828
        %v833 = vpack.c.b16 %v829, %v829
        %v834 = vpack.c.b16 %v830, %v830
        %v835 = vunpack.c.l.b16 %v831
        %v836 = vunpack.c.l.b16 %v832
        %v837 = vunpack.c.l.b16 %v833
        %v838 = vunpack.c.l.b16 %v834
        %v839 = vrot.slane %v836, 7
        %v840 = vsel %vm448, %v839, %v835
        %v841 = vrot.slane %v837, 6
        %v842 = vsel %vm451, %v841, %v840
        %v843 = vrot.slane %v838, 5
        %v844 = vsel %vm454, %v843, %v842
        %v845 = vpack.c.b16 %v844, %v844
        %846 = vrot.lane.b32.xlu0 %v845, 113
        %v847 = vpop.permute.xlu0 %846
        %v848 = vrot.slane %v847, 4
        %vm849 = vcmask 924672
        %v850 = vsel %vm849, %v848, %v847
        %vm852 = vcmask 1042312
        %vm853 = vcmask 5124
        %vm854 = vmor %vm853, %vm852
        %855 = vst.msk [vmem:[#allocation2 + $0x8] sm:$0x33] %vm854, %v850
        %vm856 = vcmask 255040
        %857 = vst.msk [vmem:[#allocation2 + $0xc] sm:$0x3] %vm856, 0
        %v858 = vld [vmem:[%s376 + $0xb] sm:$0x1]
        %v859 = vld [vmem:[%s376 + $0x1b] sm:$0x1]
        %v860 = vld [vmem:[%s376 + $0x2b] sm:$0x1]
        %v861 = vld [vmem:[%s376 + $0x3b] sm:$0x1]
        %v862 = vpack.c.bf16 %v858, %v858
        %v863 = vpack.c.bf16 %v859, %v859
        %v864 = vpack.c.bf16 %v860, %v860
        %v865 = vpack.c.bf16 %v861, %v861
        %v870 = vunpack.c.l.b16 %v862
        %v871 = vunpack.c.l.b16 %v863
        %v872 = vunpack.c.l.b16 %v864
        %v873 = vunpack.c.l.b16 %v865
        %v874 = vpack.c.b16 %v870, %v870
        %v875 = vpack.c.b16 %v871, %v871
        %v876 = vpack.c.b16 %v872, %v872
        %v877 = vpack.c.b16 %v873, %v873
        %v878 = vunpack.c.l.b16 %v874
        %v879 = vunpack.c.l.b16 %v875
        %v880 = vunpack.c.l.b16 %v876
        %v881 = vunpack.c.l.b16 %v877
        %v882 = vrot.slane %v879, 7
        %v883 = vsel %vm448, %v882, %v878
        %v884 = vrot.slane %v880, 6
        %v885 = vsel %vm451, %v884, %v883
        %v886 = vrot.slane %v881, 5
        %v887 = vsel %vm454, %v886, %v885
        %v888 = vpack.c.b16 %v887, %v887
        %889 = vrot.lane.b32.xlu0 %v888, 9
        %v890 = vpop.permute.xlu0 %889
        %vm892 = vcmask 197704
        %893 = vst.msk [vmem:[#allocation2 + $0xc] sm:$0x3] %vm892, %v890
        %vm894 = vcmask 451840
        %895 = vst.msk [vmem:[#allocation2 + $0xc] sm:$0x3] %vm894, 0
        %v896 = vld [vmem:[%s376 + $0xc] sm:$0x1]
        %v897 = vld [vmem:[%s376 + $0x1c] sm:$0x1]
        %v898 = vld [vmem:[%s376 + $0x2c] sm:$0x1]
        %v899 = vld [vmem:[%s376 + $0x3c] sm:$0x1]
        %v900 = vpack.c.bf16 %v896, %v896
        %v901 = vpack.c.bf16 %v897, %v897
        %v902 = vpack.c.bf16 %v898, %v898
        %v903 = vpack.c.bf16 %v899, %v899
        %v908 = vunpack.c.l.b16 %v900
        %v909 = vunpack.c.l.b16 %v901
        %v910 = vunpack.c.l.b16 %v902
        %v911 = vunpack.c.l.b16 %v903
        %v912 = vpack.c.b16 %v908, %v908
        %v913 = vpack.c.b16 %v909, %v909
        %v914 = vpack.c.b16 %v910, %v910
        %v915 = vpack.c.b16 %v911, %v911
        %v916 = vunpack.c.l.b16 %v912
        %v917 = vunpack.c.l.b16 %v913
        %v918 = vunpack.c.l.b16 %v914
        %v919 = vunpack.c.l.b16 %v915
        %v920 = vrot.slane %v917, 7
        %v921 = vsel %vm448, %v920, %v916
        %v922 = vrot.slane %v918, 6
        %v923 = vsel %vm451, %v922, %v921
        %v924 = vrot.slane %v919, 5
        %v925 = vsel %vm454, %v924, %v923
        %v926 = vpack.c.b16 %v925, %v925
        %927 = vrot.lane.b32.xlu0 %v926, 33
        %v928 = vpop.permute.xlu0 %927
        %vm930 = vcmask 394504
        %931 = vst.msk [vmem:[#allocation2 + $0xc] sm:$0x3] %vm930, %v928
        %vm932 = vcmask 648640
        %933 = vst.msk [vmem:[#allocation2 + $0xc] sm:$0x3] %vm932, 0
        %v934 = vld [vmem:[%s376 + $0xd] sm:$0x1]
        %v935 = vld [vmem:[%s376 + $0x1d] sm:$0x1]
        %v936 = vld [vmem:[%s376 + $0x2d] sm:$0x1]
        %v937 = vld [vmem:[%s376 + $0x3d] sm:$0x1]
        %v938 = vpack.c.bf16 %v934, %v934
        %v939 = vpack.c.bf16 %v935, %v935
        %v940 = vpack.c.bf16 %v936, %v936
        %v941 = vpack.c.bf16 %v937, %v937
        %v946 = vunpack.c.l.b16 %v938
        %v947 = vunpack.c.l.b16 %v939
        %v948 = vunpack.c.l.b16 %v940
        %v949 = vunpack.c.l.b16 %v941
        %v950 = vpack.c.b16 %v946, %v946
        %v951 = vpack.c.b16 %v947, %v947
        %v952 = vpack.c.b16 %v948, %v948
        %v953 = vpack.c.b16 %v949, %v949
        %v954 = vunpack.c.l.b16 %v950
        %v955 = vunpack.c.l.b16 %v951
        %v956 = vunpack.c.l.b16 %v952
        %v957 = vunpack.c.l.b16 %v953
        %v958 = vrot.slane %v955, 7
        %v959 = vsel %vm448, %v958, %v954
        %v960 = vrot.slane %v956, 6
        %v961 = vsel %vm451, %v960, %v959
        %v962 = vrot.slane %v957, 5
        %v963 = vsel %vm454, %v962, %v961
        %v964 = vpack.c.b16 %v963, %v963
        %965 = vrot.lane.b32.xlu0 %v964, 57
        %v966 = vpop.permute.xlu0 %965
        %vm968 = vcmask 591304
        %969 = vst.msk [vmem:[#allocation2 + $0xc] sm:$0x3] %vm968, %v966
        %vm970 = vcmask 845440
        %971 = vst.msk [vmem:[#allocation2 + $0xc] sm:$0x3] %vm970, 0
        %v972 = vld [vmem:[%s376 + $0xe] sm:$0x1]
        %v973 = vld [vmem:[%s376 + $0x1e] sm:$0x1]
        %v974 = vld [vmem:[%s376 + $0x2e] sm:$0x1]
        %v975 = vld [vmem:[%s376 + $0x3e] sm:$0x1]
        %v976 = vpack.c.bf16 %v972, %v972
        %v977 = vpack.c.bf16 %v973, %v973
        %v978 = vpack.c.bf16 %v974, %v974
        %v979 = vpack.c.bf16 %v975, %v975
        %v984 = vunpack.c.l.b16 %v976
        %v985 = vunpack.c.l.b16 %v977
        %v986 = vunpack.c.l.b16 %v978
        %v987 = vunpack.c.l.b16 %v979
        %v988 = vpack.c.b16 %v984, %v984
        %v989 = vpack.c.b16 %v985, %v985
        %v990 = vpack.c.b16 %v986, %v986
        %v991 = vpack.c.b16 %v987, %v987
        %v992 = vunpack.c.l.b16 %v988
        %v993 = vunpack.c.l.b16 %v989
        %v994 = vunpack.c.l.b16 %v990
        %v995 = vunpack.c.l.b16 %v991
        %v996 = vrot.slane %v993, 7
        %v997 = vsel %vm448, %v996, %v992
        %v998 = vrot.slane %v994, 6
        %v999 = vsel %vm451, %v998, %v997
        %v1000 = vrot.slane %v995, 5
        %v1001 = vsel %vm454, %v1000, %v999
        %v1002 = vpack.c.b16 %v1001, %v1001
        %1003 = vrot.lane.b32.xlu0 %v1002, 81
        %v1004 = vpop.permute.xlu0 %1003
        %vm1006 = vcmask 788104
        %1007 = vst.msk [vmem:[#allocation2 + $0xc] sm:$0x3] %vm1006, %v1004
        %vm1008 = vcmask 1042240
        %1009 = vst.msk [vmem:[#allocation2 + $0xc] sm:$0x3] %vm1008, 0
        %v1010 = vld [vmem:[%s376 + $0xf] sm:$0x1]
        %v1011 = vld [vmem:[%s376 + $0x1f] sm:$0x1]
        %v1012 = vld [vmem:[%s376 + $0x2f] sm:$0x1]
        %v1013 = vld [vmem:[%s376 + $0x3f] sm:$0x1]
        %v1014 = vpack.c.bf16 %v1010, %v1010
        %v1015 = vpack.c.bf16 %v1011, %v1011
        %v1016 = vpack.c.bf16 %v1012, %v1012
        %v1017 = vpack.c.bf16 %v1013, %v1013
        %v1022 = vunpack.c.l.b16 %v1014
        %v1023 = vunpack.c.l.b16 %v1015
        %v1024 = vunpack.c.l.b16 %v1016
        %v1025 = vunpack.c.l.b16 %v1017
        %v1026 = vpack.c.b16 %v1022, %v1022
        %v1027 = vpack.c.b16 %v1023, %v1023
        %v1028 = vpack.c.b16 %v1024, %v1024
        %v1029 = vpack.c.b16 %v1025, %v1025
        %v1030 = vunpack.c.l.b16 %v1026
        %v1031 = vunpack.c.l.b16 %v1027
        %v1032 = vunpack.c.l.b16 %v1028
        %v1033 = vunpack.c.l.b16 %v1029
        %v1034 = vrot.slane %v1031, 7
        %v1035 = vsel %vm448, %v1034, %v1030
        %v1036 = vrot.slane %v1032, 6
        %v1037 = vsel %vm451, %v1036, %v1035
        %v1038 = vrot.slane %v1033, 5
        %v1039 = vsel %vm454, %v1038, %v1037
        %v1040 = vpack.c.b16 %v1039, %v1039
        %1041 = vrot.lane.b32.xlu0 %v1040, 105
        %v1042 = vpop.permute.xlu0 %1041
        %vm1044 = vcmask 984904
        %1045 = vst.msk [vmem:[#allocation2 + $0xc] sm:$0x3] %vm1044, %v1042
        %v1046 = vld [vmem:[%s2] sm:$0xff]
        %v1047 = vld [vmem:[%s367] sm:$0x1]
        %v1048 = vld [vmem:[%s367 + $0x8] sm:$0x1]
        %v1049 = vld [vmem:[%s367 + $0x10] sm:$0x1]
        %v1050 = vld [vmem:[%s367 + $0x18] sm:$0x1]
        %v1055 = vrot.slane %v1048, 7
        %v1056 = vsel %vm448, %v1055, %v1047
        %v1057 = vrot.slane %v1049, 6
        %v1058 = vsel %vm451, %v1057, %v1056
        %v1059 = vrot.slane %v1050, 5
        %v1060 = vsel %vm454, %v1059, %v1058
        %vm1061 = vcmask 64512
        %v1062 = vsel %vm1061, %v1060, 0
        %1064 = vmatprep.subr.mxu0 0.0
        %1065 = vmatpush1.msra.mxu0 %v1046
        %1066 = vmatprep.subr.mxu0 0.0
        %1067 = vmatpush1.msra.mxu0 0.0
        %1068 = vmatprep.subr.mxu0 0.0
        %1069 = vmatpush1.msra.mxu0 0.0
        %1070 = vmatprep.subr.mxu0 0.0
        %1071 = vmatpush1.msra.mxu0 0.0
        %1072 = vmatprep.subr.mxu0 0.0
        %1073 = vmatpush1.msra.mxu0 0.0
        %1074 = vmatprep.subr.mxu0 0.0
        %1075 = vmatpush1.msra.mxu0 0.0
        %1076 = vmatprep.subr.mxu0 0.0
        %1077 = vmatpush1.msra.mxu0 0.0
        %1078 = vmatprep.subr.mxu0 0.0
        %1079 = vmatpush1.msra.mxu0 0.0
        %1080 = vmatprep.subr.mxu0 0.0
        %1081 = vmatpush1.msra.mxu0 0.0
        %1082 = vmatprep.subr.mxu0 0.0
        %1083 = vmatpush1.msra.mxu0 0.0
        %1084 = vmatprep.subr.mxu0 0.0
        %1085 = vmatpush1.msra.mxu0 0.0
        %1086 = vmatprep.subr.mxu0 0.0
        %1087 = vmatpush1.msra.mxu0 0.0
        %1088 = vmatprep.subr.mxu0 0.0
        %1089 = vmatpush1.msra.mxu0 0.0
        %1090 = vmatprep.subr.mxu0 0.0
        %1091 = vmatpush1.msra.mxu0 0.0
        %1092 = vmatprep.subr.mxu0 0.0
        %1093 = vmatpush1.msra.mxu0 0.0
        %1094 = vmatprep.subr.mxu0 0.0
        %1095 = vmatpush1.msra.mxu0 0.0
        %1096 = vmatprep.subr.mxu0 0.0
        %1097 = vmatpush1.msra.mxu0 0.0
        %1098 = vmatprep.subr.mxu0 0.0
        %1099 = vmatpush1.msra.mxu0 0.0
        %1100 = vmatprep.subr.mxu0 0.0
        %1101 = vmatpush1.msra.mxu0 0.0
        %1102 = vmatprep.subr.mxu0 0.0
        %1103 = vmatpush1.msra.mxu0 0.0
        %1104 = vmatprep.subr.mxu0 0.0
        %1105 = vmatpush1.msra.mxu0 0.0
        %1106 = vmatprep.subr.mxu0 0.0
        %1107 = vmatpush1.msra.mxu0 0.0
        %1108 = vmatprep.subr.mxu0 0.0
        %1109 = vmatpush1.msra.mxu0 0.0
        %1110 = vmatprep.subr.mxu0 0.0
        %1111 = vmatpush1.msra.mxu0 0.0
        %1112 = vmatprep.subr.mxu0 0.0
        %1113 = vmatpush1.msra.mxu0 0.0
        %1114 = vmatprep.subr.mxu0 0.0
        %1115 = vmatpush1.msra.mxu0 0.0
        %1116 = vmatprep.subr.mxu0 0.0
        %1117 = vmatpush1.msra.mxu0 0.0
        %1118 = vmatprep.subr.mxu0 0.0
        %1119 = vmatpush1.msra.mxu0 0.0
        %1120 = vmatprep.subr.mxu0 0.0
        %1121 = vmatpush1.msra.mxu0 0.0
        %1122 = vmatprep.subr.mxu0 0.0
        %1123 = vmatpush1.msra.mxu0 0.0
        %1124 = vmatprep.subr.mxu0 0.0
        %1125 = vmatpush1.msra.mxu0 0.0
        %1126 = vmatprep.subr.mxu0 0.0
        %1127 = vmatpush1.msra.mxu0 0.0
        %1128 = vmatprep.mubr.f32.mxu0 0.0
        %1129 = vmatmul.mubr.f32.gmra.mrb[0].mxu0 %v1062
        %v1130 = vpop.f32.mrb[0].mxu0
        %v1131 = vadd.f32 0.0, %v1130
        %v1132 = vpop.f32.mrb[0].mxu0
        %1133 = vdwg.mxu0
        %v1134 = vpack.c.bf16 %v1131, %v1131
        %v1136 = vunpack.c.l.b16 %v1134
        %v1137 = vpack.c.b16 %v1136, %v1136
        %v1138 = vrot.slane %v1137, 6
        %vm1140 = vcmask 191490
        %1141 = vst.msk [vmem:[#allocation2 + $0x4] sm:$0xc] %vm1140, %v1138
        %v1142 = vld [vmem:[%s367] sm:$0x1]
        %v1143 = vld [vmem:[%s367 + $0x8] sm:$0x1]
        %v1144 = vld [vmem:[%s367 + $0x10] sm:$0x1]
        %v1145 = vld [vmem:[%s367 + $0x18] sm:$0x1]
        %v1146 = vmul.f32 %v1142, 0.53333336
        %v1147 = vmul.f32 %v1143, 0.53333336
        %v1148 = vmul.f32 %v1144, 0.53333336
        %v1149 = vmul.f32 %v1145, 0.53333336
        %v1150 = vld [vmem:[%s367 + $0x1] sm:$0x1]
        %v1151 = vld [vmem:[%s367 + $0x9] sm:$0x1]
        %v1152 = vld [vmem:[%s367 + $0x11] sm:$0x1]
        %v1153 = vld [vmem:[%s367 + $0x19] sm:$0x1]
        %v1154 = vmul.f32 %v1150, 0.46666667
        %v1155 = vmul.f32 %v1151, 0.46666667
        %v1156 = vmul.f32 %v1152, 0.46666667
        %v1157 = vmul.f32 %v1153, 0.46666667
        %v1158 = vadd.f32 %v1146, %v1154
        %v1159 = vadd.f32 %v1147, %v1155
        %v1160 = vadd.f32 %v1148, %v1156
        %v1161 = vadd.f32 %v1149, %v1157
        %v1166 = vrot.slane %v1159, 7
        %v1167 = vsel %vm448, %v1166, %v1158
        %v1168 = vrot.slane %v1160, 6
        %v1169 = vsel %vm451, %v1168, %v1167
        %v1170 = vrot.slane %v1161, 5
        %v1171 = vsel %vm454, %v1170, %v1169
        %v1172 = vsel %vm1061, %v1171, 0
        %1174 = vmatprep.subr.mxu0 0.0
        %1175 = vmatpush1.msra.mxu0 %v1046
        %1176 = vmatprep.subr.mxu0 0.0
        %1177 = vmatpush1.msra.mxu0 0.0
        %1178 = vmatprep.subr.mxu0 0.0
        %1179 = vmatpush1.msra.mxu0 0.0
        %1180 = vmatprep.subr.mxu0 0.0
        %1181 = vmatpush1.msra.mxu0 0.0
        %1182 = vmatprep.subr.mxu0 0.0
        %1183 = vmatpush1.msra.mxu0 0.0
        %1184 = vmatprep.subr.mxu0 0.0
        %1185 = vmatpush1.msra.mxu0 0.0
        %1186 = vmatprep.subr.mxu0 0.0
        %1187 = vmatpush1.msra.mxu0 0.0
        %1188 = vmatprep.subr.mxu0 0.0
        %1189 = vmatpush1.msra.mxu0 0.0
        %1190 = vmatprep.subr.mxu0 0.0
        %1191 = vmatpush1.msra.mxu0 0.0
        %1192 = vmatprep.subr.mxu0 0.0
        %1193 = vmatpush1.msra.mxu0 0.0
        %1194 = vmatprep.subr.mxu0 0.0
        %1195 = vmatpush1.msra.mxu0 0.0
        %1196 = vmatprep.subr.mxu0 0.0
        %1197 = vmatpush1.msra.mxu0 0.0
        %1198 = vmatprep.subr.mxu0 0.0
        %1199 = vmatpush1.msra.mxu0 0.0
        %1200 = vmatprep.subr.mxu0 0.0
        %1201 = vmatpush1.msra.mxu0 0.0
        %1202 = vmatprep.subr.mxu0 0.0
        %1203 = vmatpush1.msra.mxu0 0.0
        %1204 = vmatprep.subr.mxu0 0.0
        %1205 = vmatpush1.msra.mxu0 0.0
        %1206 = vmatprep.subr.mxu0 0.0
        %1207 = vmatpush1.msra.mxu0 0.0
        %1208 = vmatprep.subr.mxu0 0.0
        %1209 = vmatpush1.msra.mxu0 0.0
        %1210 = vmatprep.subr.mxu0 0.0
        %1211 = vmatpush1.msra.mxu0 0.0
        %1212 = vmatprep.subr.mxu0 0.0
        %1213 = vmatpush1.msra.mxu0 0.0
        %1214 = vmatprep.subr.mxu0 0.0
        %1215 = vmatpush1.msra.mxu0 0.0
        %1216 = vmatprep.subr.mxu0 0.0
        %1217 = vmatpush1.msra.mxu0 0.0
        %1218 = vmatprep.subr.mxu0 0.0
        %1219 = vmatpush1.msra.mxu0 0.0
        %1220 = vmatprep.subr.mxu0 0.0
        %1221 = vmatpush1.msra.mxu0 0.0
        %1222 = vmatprep.subr.mxu0 0.0
        %1223 = vmatpush1.msra.mxu0 0.0
        %1224 = vmatprep.subr.mxu0 0.0
        %1225 = vmatpush1.msra.mxu0 0.0
        %1226 = vmatprep.subr.mxu0 0.0
        %1227 = vmatpush1.msra.mxu0 0.0
        %1228 = vmatprep.subr.mxu0 0.0
        %1229 = vmatpush1.msra.mxu0 0.0
        %1230 = vmatprep.subr.mxu0 0.0
        %1231 = vmatpush1.msra.mxu0 0.0
        %1232 = vmatprep.subr.mxu0 0.0
        %1233 = vmatpush1.msra.mxu0 0.0
        %1234 = vmatprep.subr.mxu0 0.0
        %1235 = vmatpush1.msra.mxu0 0.0
        %1236 = vmatprep.subr.mxu0 0.0
        %1237 = vmatpush1.msra.mxu0 0.0
        %1238 = vmatprep.mubr.f32.mxu0 0.0
        %1239 = vmatmul.mubr.f32.gmra.mrb[0].mxu0 %v1172
        %v1240 = vpop.f32.mrb[0].mxu0
        %v1241 = vadd.f32 0.0, %v1240
        %v1242 = vpop.f32.mrb[0].mxu0
        %1243 = vdwg.mxu0
        %v1244 = vpack.c.bf16 %v1241, %v1241
        %v1246 = vunpack.c.l.b16 %v1244
        %v1247 = vpack.c.b16 %v1246, %v1246
        %v1248 = vrot.slane %v1247, 6
        %1249 = vrot.lane.b32.xlu0 %v1248, 24
        %v1250 = vpop.permute.xlu0 %1249
        %vm1252 = vcmask 388290
        %1253 = vst.msk [vmem:[#allocation2 + $0x4] sm:$0xc] %vm1252, %v1250
        %v1254 = vld [vmem:[%s367] sm:$0x1]
        %v1255 = vld [vmem:[%s367 + $0x8] sm:$0x1]
        %v1256 = vld [vmem:[%s367 + $0x10] sm:$0x1]
        %v1257 = vld [vmem:[%s367 + $0x18] sm:$0x1]
        %v1258 = vmul.f32 %v1254, 0.06666667
        %v1259 = vmul.f32 %v1255, 0.06666667
        %v1260 = vmul.f32 %v1256, 0.06666667
        %v1261 = vmul.f32 %v1257, 0.06666667
        %v1262 = vld [vmem:[%s367 + $0x1] sm:$0x1]
        %v1263 = vld [vmem:[%s367 + $0x9] sm:$0x1]
        %v1264 = vld [vmem:[%s367 + $0x11] sm:$0x1]
        %v1265 = vld [vmem:[%s367 + $0x19] sm:$0x1]
        %v1266 = vmul.f32 %v1262, 0.93333334
        %v1267 = vmul.f32 %v1263, 0.93333334
        %v1268 = vmul.f32 %v1264, 0.93333334
        %v1269 = vmul.f32 %v1265, 0.93333334
        %v1270 = vadd.f32 %v1258, %v1266
        %v1271 = vadd.f32 %v1259, %v1267
        %v1272 = vadd.f32 %v1260, %v1268
        %v1273 = vadd.f32 %v1261, %v1269
        %v1278 = vrot.slane %v1271, 7
        %v1279 = vsel %vm448, %v1278, %v1270
        %v1280 = vrot.slane %v1272, 6
        %v1281 = vsel %vm451, %v1280, %v1279
        %v1282 = vrot.slane %v1273, 5
        %v1283 = vsel %vm454, %v1282, %v1281
        %v1284 = vsel %vm1061, %v1283, 0
        %1286 = vmatprep.subr.mxu0 0.0
        %1287 = vmatpush1.msra.mxu0 %v1046
        %1288 = vmatprep.subr.mxu0 0.0
        %1289 = vmatpush1.msra.mxu0 0.0
        %1290 = vmatprep.subr.mxu0 0.0
        %1291 = vmatpush1.msra.mxu0 0.0
        %1292 = vmatprep.subr.mxu0 0.0
        %1293 = vmatpush1.msra.mxu0 0.0
        %1294 = vmatprep.subr.mxu0 0.0
        %1295 = vmatpush1.msra.mxu0 0.0
        %1296 = vmatprep.subr.mxu0 0.0
        %1297 = vmatpush1.msra.mxu0 0.0
        %1298 = vmatprep.subr.mxu0 0.0
        %1299 = vmatpush1.msra.mxu0 0.0
        %1300 = vmatprep.subr.mxu0 0.0
        %1301 = vmatpush1.msra.mxu0 0.0
        %1302 = vmatprep.subr.mxu0 0.0
        %1303 = vmatpush1.msra.mxu0 0.0
        %1304 = vmatprep.subr.mxu0 0.0
        %1305 = vmatpush1.msra.mxu0 0.0
        %1306 = vmatprep.subr.mxu0 0.0
        %1307 = vmatpush1.msra.mxu0 0.0
        %1308 = vmatprep.subr.mxu0 0.0
        %1309 = vmatpush1.msra.mxu0 0.0
        %1310 = vmatprep.subr.mxu0 0.0
        %1311 = vmatpush1.msra.mxu0 0.0
        %1312 = vmatprep.subr.mxu0 0.0
        %1313 = vmatpush1.msra.mxu0 0.0
        %1314 = vmatprep.subr.mxu0 0.0
        %1315 = vmatpush1.msra.mxu0 0.0
        %1316 = vmatprep.subr.mxu0 0.0
        %1317 = vmatpush1.msra.mxu0 0.0
        %1318 = vmatprep.subr.mxu0 0.0
        %1319 = vmatpush1.msra.mxu0 0.0
        %1320 = vmatprep.subr.mxu0 0.0
        %1321 = vmatpush1.msra.mxu0 0.0
        %1322 = vmatprep.subr.mxu0 0.0
        %1323 = vmatpush1.msra.mxu0 0.0
        %1324 = vmatprep.subr.mxu0 0.0
        %1325 = vmatpush1.msra.mxu0 0.0
        %1326 = vmatprep.subr.mxu0 0.0
        %1327 = vmatpush1.msra.mxu0 0.0
        %1328 = vmatprep.subr.mxu0 0.0
        %1329 = vmatpush1.msra.mxu0 0.0
        %1330 = vmatprep.subr.mxu0 0.0
        %1331 = vmatpush1.msra.mxu0 0.0
        %1332 = vmatprep.subr.mxu0 0.0
        %1333 = vmatpush1.msra.mxu0 0.0
        %1334 = vmatprep.subr.mxu0 0.0
        %1335 = vmatpush1.msra.mxu0 0.0
        %1336 = vmatprep.subr.mxu0 0.0
        %1337 = vmatpush1.msra.mxu0 0.0
        %1338 = vmatprep.subr.mxu0 0.0
        %1339 = vmatpush1.msra.mxu0 0.0
        %1340 = vmatprep.subr.mxu0 0.0
        %1341 = vmatpush1.msra.mxu0 0.0
        %1342 = vmatprep.subr.mxu0 0.0
        %1343 = vmatpush1.msra.mxu0 0.0
        %1344 = vmatprep.subr.mxu0 0.0
        %1345 = vmatpush1.msra.mxu0 0.0
        %1346 = vmatprep.subr.mxu0 0.0
        %1347 = vmatpush1.msra.mxu0 0.0
        %1348 = vmatprep.subr.mxu0 0.0
        %1349 = vmatpush1.msra.mxu0 0.0
        %1350 = vmatprep.mubr.f32.mxu0 0.0
        %1351 = vmatmul.mubr.f32.gmra.mrb[0].mxu0 %v1284
        %v1352 = vpop.f32.mrb[0].mxu0
        %v1353 = vadd.f32 0.0, %v1352
        %v1354 = vpop.f32.mrb[0].mxu0
        %1355 = vdwg.mxu0
        %v1356 = vpack.c.bf16 %v1353, %v1353
        %v1358 = vunpack.c.l.b16 %v1356
        %v1359 = vpack.c.b16 %v1358, %v1358
        %v1360 = vrot.slane %v1359, 6
        %1361 = vrot.lane.b32.xlu0 %v1360, 48
        %v1362 = vpop.permute.xlu0 %1361
        %vm1364 = vcmask 585090
        %1365 = vst.msk [vmem:[#allocation2 + $0x4] sm:$0xc] %vm1364, %v1362
        %v1366 = vld [vmem:[%s367 + $0x1] sm:$0x1]
        %v1367 = vld [vmem:[%s367 + $0x9] sm:$0x1]
        %v1368 = vld [vmem:[%s367 + $0x11] sm:$0x1]
        %v1369 = vld [vmem:[%s367 + $0x19] sm:$0x1]
        %v1370 = vmul.f32 %v1366, 0.6
        %v1371 = vmul.f32 %v1367, 0.6
        %v1372 = vmul.f32 %v1368, 0.6
        %v1373 = vmul.f32 %v1369, 0.6
        %v1374 = vld [vmem:[%s367 + $0x2] sm:$0x1]
        %v1375 = vld [vmem:[%s367 + $0xa] sm:$0x1]
        %v1376 = vld [vmem:[%s367 + $0x12] sm:$0x1]
        %v1377 = vld [vmem:[%s367 + $0x1a] sm:$0x1]
        %v1378 = vmul.f32 %v1374, 0.4
        %v1379 = vmul.f32 %v1375, 0.4
        %v1380 = vmul.f32 %v1376, 0.4
        %v1381 = vmul.f32 %v1377, 0.4
        %v1382 = vadd.f32 %v1370, %v1378
        %v1383 = vadd.f32 %v1371, %v1379
        %v1384 = vadd.f32 %v1372, %v1380
        %v1385 = vadd.f32 %v1373, %v1381
        %v1390 = vrot.slane %v1383, 7
        %v1391 = vsel %vm448, %v1390, %v1382
        %v1392 = vrot.slane %v1384, 6
        %v1393 = vsel %vm451, %v1392, %v1391
        %v1394 = vrot.slane %v1385, 5
        %v1395 = vsel %vm454, %v1394, %v1393
        %v1396 = vsel %vm1061, %v1395, 0
        %1398 = vmatprep.subr.mxu0 0.0
        %1399 = vmatpush1.msra.mxu0 %v1046
        %1400 = vmatprep.subr.mxu0 0.0
        %1401 = vmatpush1.msra.mxu0 0.0
        %1402 = vmatprep.subr.mxu0 0.0
        %1403 = vmatpush1.msra.mxu0 0.0
        %1404 = vmatprep.subr.mxu0 0.0
        %1405 = vmatpush1.msra.mxu0 0.0
        %1406 = vmatprep.subr.mxu0 0.0
        %1407 = vmatpush1.msra.mxu0 0.0
        %1408 = vmatprep.subr.mxu0 0.0
        %1409 = vmatpush1.msra.mxu0 0.0
        %1410 = vmatprep.subr.mxu0 0.0
        %1411 = vmatpush1.msra.mxu0 0.0
        %1412 = vmatprep.subr.mxu0 0.0
        %1413 = vmatpush1.msra.mxu0 0.0
        %1414 = vmatprep.subr.mxu0 0.0
        %1415 = vmatpush1.msra.mxu0 0.0
        %1416 = vmatprep.subr.mxu0 0.0
        %1417 = vmatpush1.msra.mxu0 0.0
        %1418 = vmatprep.subr.mxu0 0.0
        %1419 = vmatpush1.msra.mxu0 0.0
        %1420 = vmatprep.subr.mxu0 0.0
        %1421 = vmatpush1.msra.mxu0 0.0
        %1422 = vmatprep.subr.mxu0 0.0
        %1423 = vmatpush1.msra.mxu0 0.0
        %1424 = vmatprep.subr.mxu0 0.0
        %1425 = vmatpush1.msra.mxu0 0.0
        %1426 = vmatprep.subr.mxu0 0.0
        %1427 = vmatpush1.msra.mxu0 0.0
        %1428 = vmatprep.subr.mxu0 0.0
        %1429 = vmatpush1.msra.mxu0 0.0
        %1430 = vmatprep.subr.mxu0 0.0
        %1431 = vmatpush1.msra.mxu0 0.0
        %1432 = vmatprep.subr.mxu0 0.0
        %1433 = vmatpush1.msra.mxu0 0.0
        %1434 = vmatprep.subr.mxu0 0.0
        %1435 = vmatpush1.msra.mxu0 0.0
        %1436 = vmatprep.subr.mxu0 0.0
        %1437 = vmatpush1.msra.mxu0 0.0
        %1438 = vmatprep.subr.mxu0 0.0
        %1439 = vmatpush1.msra.mxu0 0.0
        %1440 = vmatprep.subr.mxu0 0.0
        %1441 = vmatpush1.msra.mxu0 0.0
        %1442 = vmatprep.subr.mxu0 0.0
        %1443 = vmatpush1.msra.mxu0 0.0
        %1444 = vmatprep.subr.mxu0 0.0
        %1445 = vmatpush1.msra.mxu0 0.0
        %1446 = vmatprep.subr.mxu0 0.0
        %1447 = vmatpush1.msra.mxu0 0.0
        %1448 = vmatprep.subr.mxu0 0.0
        %1449 = vmatpush1.msra.mxu0 0.0
        %1450 = vmatprep.subr.mxu0 0.0
        %1451 = vmatpush1.msra.mxu0 0.0
        %1452 = vmatprep.subr.mxu0 0.0
        %1453 = vmatpush1.msra.mxu0 0.0
        %1454 = vmatprep.subr.mxu0 0.0
        %1455 = vmatpush1.msra.mxu0 0.0
        %1456 = vmatprep.subr.mxu0 0.0
        %1457 = vmatpush1.msra.mxu0 0.0
        %1458 = vmatprep.subr.mxu0 0.0
        %1459 = vmatpush1.msra.mxu0 0.0
        %1460 = vmatprep.subr.mxu0 0.0
        %1461 = vmatpush1.msra.mxu0 0.0
        %1462 = vmatprep.mubr.f32.mxu0 0.0
        %1463 = vmatmul.mubr.f32.gmra.mrb[0].mxu0 %v1396
        %v1464 = vpop.f32.mrb[0].mxu0
        %v1465 = vadd.f32 0.0, %v1464
        %v1466 = vpop.f32.mrb[0].mxu0
        %1467 = vdwg.mxu0
        %v1468 = vpack.c.bf16 %v1465, %v1465
        %v1470 = vunpack.c.l.b16 %v1468
        %v1471 = vpack.c.b16 %v1470, %v1470
        %v1472 = vrot.slane %v1471, 6
        %1473 = vrot.lane.b32.xlu0 %v1472, 72
        %v1474 = vpop.permute.xlu0 %1473
        %vm1476 = vcmask 781890
        %1477 = vst.msk [vmem:[#allocation2 + $0x4] sm:$0xc] %vm1476, %v1474
        %v1478 = vld [vmem:[%s367 + $0x1] sm:$0x1]
        %v1479 = vld [vmem:[%s367 + $0x9] sm:$0x1]
        %v1480 = vld [vmem:[%s367 + $0x11] sm:$0x1]
        %v1481 = vld [vmem:[%s367 + $0x19] sm:$0x1]
        %v1482 = vmul.f32 %v1478, 0.13333334
        %v1483 = vmul.f32 %v1479, 0.13333334
        %v1484 = vmul.f32 %v1480, 0.13333334
        %v1485 = vmul.f32 %v1481, 0.13333334
        %v1486 = vld [vmem:[%s367 + $0x2] sm:$0x1]
        %v1487 = vld [vmem:[%s367 + $0xa] sm:$0x1]
        %v1488 = vld [vmem:[%s367 + $0x12] sm:$0x1]
        %v1489 = vld [vmem:[%s367 + $0x1a] sm:$0x1]
        %v1490 = vmul.f32 %v1486, 0.8666667
        %v1491 = vmul.f32 %v1487, 0.8666667
        %v1492 = vmul.f32 %v1488, 0.8666667
        %v1493 = vmul.f32 %v1489, 0.8666667
        %v1494 = vadd.f32 %v1482, %v1490
        %v1495 = vadd.f32 %v1483, %v1491
        %v1496 = vadd.f32 %v1484, %v1492
        %v1497 = vadd.f32 %v1485, %v1493
        %v1502 = vrot.slane %v1495, 7
        %v1503 = vsel %vm448, %v1502, %v1494
        %v1504 = vrot.slane %v1496, 6
        %v1505 = vsel %vm451, %v1504, %v1503
        %v1506 = vrot.slane %v1497, 5
        %v1507 = vsel %vm454, %v1506, %v1505
        %v1508 = vsel %vm1061, %v1507, 0
        %1510 = vmatprep.subr.mxu0 0.0
        %1511 = vmatpush1.msra.mxu0 %v1046
        %1512 = vmatprep.subr.mxu0 0.0
        %1513 = vmatpush1.msra.mxu0 0.0
        %1514 = vmatprep.subr.mxu0 0.0
        %1515 = vmatpush1.msra.mxu0 0.0
        %1516 = vmatprep.subr.mxu0 0.0
        %1517 = vmatpush1.msra.mxu0 0.0
        %1518 = vmatprep.subr.mxu0 0.0
        %1519 = vmatpush1.msra.mxu0 0.0
        %1520 = vmatprep.subr.mxu0 0.0
        %1521 = vmatpush1.msra.mxu0 0.0
        %1522 = vmatprep.subr.mxu0 0.0
        %1523 = vmatpush1.msra.mxu0 0.0
        %1524 = vmatprep.subr.mxu0 0.0
        %1525 = vmatpush1.msra.mxu0 0.0
        %1526 = vmatprep.subr.mxu0 0.0
        %1527 = vmatpush1.msra.mxu0 0.0
        %1528 = vmatprep.subr.mxu0 0.0
        %1529 = vmatpush1.msra.mxu0 0.0
        %1530 = vmatprep.subr.mxu0 0.0
        %1531 = vmatpush1.msra.mxu0 0.0
        %1532 = vmatprep.subr.mxu0 0.0
        %1533 = vmatpush1.msra.mxu0 0.0
        %1534 = vmatprep.subr.mxu0 0.0
        %1535 = vmatpush1.msra.mxu0 0.0
        %1536 = vmatprep.subr.mxu0 0.0
        %1537 = vmatpush1.msra.mxu0 0.0
        %1538 = vmatprep.subr.mxu0 0.0
        %1539 = vmatpush1.msra.mxu0 0.0
        %1540 = vmatprep.subr.mxu0 0.0
        %1541 = vmatpush1.msra.mxu0 0.0
        %1542 = vmatprep.subr.mxu0 0.0
        %1543 = vmatpush1.msra.mxu0 0.0
        %1544 = vmatprep.subr.mxu0 0.0
        %1545 = vmatpush1.msra.mxu0 0.0
        %1546 = vmatprep.subr.mxu0 0.0
        %1547 = vmatpush1.msra.mxu0 0.0
        %1548 = vmatprep.subr.mxu0 0.0
        %1549 = vmatpush1.msra.mxu0 0.0
        %1550 = vmatprep.subr.mxu0 0.0
        %1551 = vmatpush1.msra.mxu0 0.0
        %1552 = vmatprep.subr.mxu0 0.0
        %1553 = vmatpush1.msra.mxu0 0.0
        %1554 = vmatprep.subr.mxu0 0.0
        %1555 = vmatpush1.msra.mxu0 0.0
        %1556 = vmatprep.subr.mxu0 0.0
        %1557 = vmatpush1.msra.mxu0 0.0
        %1558 = vmatprep.subr.mxu0 0.0
        %1559 = vmatpush1.msra.mxu0 0.0
        %1560 = vmatprep.subr.mxu0 0.0
        %1561 = vmatpush1.msra.mxu0 0.0
        %1562 = vmatprep.subr.mxu0 0.0
        %1563 = vmatpush1.msra.mxu0 0.0
        %1564 = vmatprep.subr.mxu0 0.0
        %1565 = vmatpush1.msra.mxu0 0.0
        %1566 = vmatprep.subr.mxu0 0.0
        %1567 = vmatpush1.msra.mxu0 0.0
        %1568 = vmatprep.subr.mxu0 0.0
        %1569 = vmatpush1.msra.mxu0 0.0
        %1570 = vmatprep.subr.mxu0 0.0
        %1571 = vmatpush1.msra.mxu0 0.0
        %1572 = vmatprep.subr.mxu0 0.0
        %1573 = vmatpush1.msra.mxu0 0.0
        %1574 = vmatprep.mubr.f32.mxu0 0.0
        %1575 = vmatmul.mubr.f32.gmra.mrb[0].mxu0 %v1508
        %v1576 = vpop.f32.mrb[0].mxu0
        %v1577 = vadd.f32 0.0, %v1576
        %v1578 = vpop.f32.mrb[0].mxu0
        %1579 = vdwg.mxu0
        %v1580 = vpack.c.bf16 %v1577, %v1577
        %v1582 = vunpack.c.l.b16 %v1580
        %v1583 = vpack.c.b16 %v1582, %v1582
        %v1584 = vrot.slane %v1583, 6
        %1585 = vrot.lane.b32.xlu0 %v1584, 96
        %v1586 = vpop.permute.xlu0 %1585
        %vm1588 = vcmask 978690
        %1589 = vst.msk [vmem:[#allocation2 + $0x4] sm:$0xc] %vm1588, %v1586
        %v1590 = vld [vmem:[%s367 + $0x2] sm:$0x1]
        %v1591 = vld [vmem:[%s367 + $0xa] sm:$0x1]
        %v1592 = vld [vmem:[%s367 + $0x12] sm:$0x1]
        %v1593 = vld [vmem:[%s367 + $0x1a] sm:$0x1]
        %v1594 = vmul.f32 %v1590, 0.6666667
        %v1595 = vmul.f32 %v1591, 0.6666667
        %v1596 = vmul.f32 %v1592, 0.6666667
        %v1597 = vmul.f32 %v1593, 0.6666667
        %v1598 = vld [vmem:[%s367 + $0x3] sm:$0x1]
        %v1599 = vld [vmem:[%s367 + $0xb] sm:$0x1]
        %v1600 = vld [vmem:[%s367 + $0x13] sm:$0x1]
        %v1601 = vld [vmem:[%s367 + $0x1b] sm:$0x1]
        %v1602 = vmul.f32 %v1598, 0.33333334
        %v1603 = vmul.f32 %v1599, 0.33333334
        %v1604 = vmul.f32 %v1600, 0.33333334
        %v1605 = vmul.f32 %v1601, 0.33333334
        %v1606 = vadd.f32 %v1594, %v1602
        %v1607 = vadd.f32 %v1595, %v1603
        %v1608 = vadd.f32 %v1596, %v1604
        %v1609 = vadd.f32 %v1597, %v1605
        %v1614 = vrot.slane %v1607, 7
        %v1615 = vsel %vm448, %v1614, %v1606
        %v1616 = vrot.slane %v1608, 6
        %v1617 = vsel %vm451, %v1616, %v1615
        %v1618 = vrot.slane %v1609, 5
        %v1619 = vsel %vm454, %v1618, %v1617
        %v1620 = vsel %vm1061, %v1619, 0
        %1622 = vmatprep.subr.mxu0 0.0
        %1623 = vmatpush1.msra.mxu0 %v1046
        %1624 = vmatprep.subr.mxu0 0.0
        %1625 = vmatpush1.msra.mxu0 0.0
        %1626 = vmatprep.subr.mxu0 0.0
        %1627 = vmatpush1.msra.mxu0 0.0
        %1628 = vmatprep.subr.mxu0 0.0
        %1629 = vmatpush1.msra.mxu0 0.0
        %1630 = vmatprep.subr.mxu0 0.0
        %1631 = vmatpush1.msra.mxu0 0.0
        %1632 = vmatprep.subr.mxu0 0.0
        %1633 = vmatpush1.msra.mxu0 0.0
        %1634 = vmatprep.subr.mxu0 0.0
        %1635 = vmatpush1.msra.mxu0 0.0
        %1636 = vmatprep.subr.mxu0 0.0
        %1637 = vmatpush1.msra.mxu0 0.0
        %1638 = vmatprep.subr.mxu0 0.0
        %1639 = vmatpush1.msra.mxu0 0.0
        %1640 = vmatprep.subr.mxu0 0.0
        %1641 = vmatpush1.msra.mxu0 0.0
        %1642 = vmatprep.subr.mxu0 0.0
        %1643 = vmatpush1.msra.mxu0 0.0
        %1644 = vmatprep.subr.mxu0 0.0
        %1645 = vmatpush1.msra.mxu0 0.0
        %1646 = vmatprep.subr.mxu0 0.0
        %1647 = vmatpush1.msra.mxu0 0.0
        %1648 = vmatprep.subr.mxu0 0.0
        %1649 = vmatpush1.msra.mxu0 0.0
        %1650 = vmatprep.subr.mxu0 0.0
        %1651 = vmatpush1.msra.mxu0 0.0
        %1652 = vmatprep.subr.mxu0 0.0
        %1653 = vmatpush1.msra.mxu0 0.0
        %1654 = vmatprep.subr.mxu0 0.0
        %1655 = vmatpush1.msra.mxu0 0.0
        %1656 = vmatprep.subr.mxu0 0.0
        %1657 = vmatpush1.msra.mxu0 0.0
        %1658 = vmatprep.subr.mxu0 0.0
        %1659 = vmatpush1.msra.mxu0 0.0
        %1660 = vmatprep.subr.mxu0 0.0
        %1661 = vmatpush1.msra.mxu0 0.0
        %1662 = vmatprep.subr.mxu0 0.0
        %1663 = vmatpush1.msra.mxu0 0.0
        %1664 = vmatprep.subr.mxu0 0.0
        %1665 = vmatpush1.msra.mxu0 0.0
        %1666 = vmatprep.subr.mxu0 0.0
        %1667 = vmatpush1.msra.mxu0 0.0
        %1668 = vmatprep.subr.mxu0 0.0
        %1669 = vmatpush1.msra.mxu0 0.0
        %1670 = vmatprep.subr.mxu0 0.0
        %1671 = vmatpush1.msra.mxu0 0.0
        %1672 = vmatprep.subr.mxu0 0.0
        %1673 = vmatpush1.msra.mxu0 0.0
        %1674 = vmatprep.subr.mxu0 0.0
        %1675 = vmatpush1.msra.mxu0 0.0
        %1676 = vmatprep.subr.mxu0 0.0
        %1677 = vmatpush1.msra.mxu0 0.0
        %1678 = vmatprep.subr.mxu0 0.0
        %1679 = vmatpush1.msra.mxu0 0.0
        %1680 = vmatprep.subr.mxu0 0.0
        %1681 = vmatpush1.msra.mxu0 0.0
        %1682 = vmatprep.subr.mxu0 0.0
        %1683 = vmatpush1.msra.mxu0 0.0
        %1684 = vmatprep.subr.mxu0 0.0
        %1685 = vmatpush1.msra.mxu0 0.0
        %1686 = vmatprep.mubr.f32.mxu0 0.0
        %1687 = vmatmul.mubr.f32.gmra.mrb[0].mxu0 %v1620
        %v1688 = vpop.f32.mrb[0].mxu0
        %v1689 = vadd.f32 0.0, %v1688
        %v1690 = vpop.f32.mrb[0].mxu0
        %1691 = vdwg.mxu0
        %v1692 = vpack.c.bf16 %v1689, %v1689
        %v1694 = vunpack.c.l.b16 %v1692
        %v1695 = vpack.c.b16 %v1694, %v1694
        %v1696 = vrot.slane %v1695, 6
        %1697 = vrot.lane.b32.xlu0 %v1696, 120
        %v1698 = vpop.permute.xlu0 %1697
        %v1699 = vrot.slane %v1698, 4
        %vm1700 = vcmask 982016
        %v1701 = vsel %vm1700, %v1699, %v1698
        %vm1703 = vcmask 1044418
        %vm1704 = vcmask 130054
        %vm1705 = vmor %vm1704, %vm1703
        %1706 = vst.msk [vmem:[#allocation2 + $0x4] sm:$0xcc] %vm1705, %v1701
        %v1707 = vld [vmem:[%s367 + $0x2] sm:$0x1]
        %v1708 = vld [vmem:[%s367 + $0xa] sm:$0x1]
        %v1709 = vld [vmem:[%s367 + $0x12] sm:$0x1]
        %v1710 = vld [vmem:[%s367 + $0x1a] sm:$0x1]
        %v1711 = vmul.f32 %v1707, 0.2
        %v1712 = vmul.f32 %v1708, 0.2
        %v1713 = vmul.f32 %v1709, 0.2
        %v1714 = vmul.f32 %v1710, 0.2
        %v1715 = vld [vmem:[%s367 + $0x3] sm:$0x1]
        %v1716 = vld [vmem:[%s367 + $0xb] sm:$0x1]
        %v1717 = vld [vmem:[%s367 + $0x13] sm:$0x1]
        %v1718 = vld [vmem:[%s367 + $0x1b] sm:$0x1]
        %v1719 = vmul.f32 %v1715, 0.8
        %v1720 = vmul.f32 %v1716, 0.8
        %v1721 = vmul.f32 %v1717, 0.8
        %v1722 = vmul.f32 %v1718, 0.8
        %v1723 = vadd.f32 %v1711, %v1719
        %v1724 = vadd.f32 %v1712, %v1720
        %v1725 = vadd.f32 %v1713, %v1721
        %v1726 = vadd.f32 %v1714, %v1722
        %v1731 = vrot.slane %v1724, 7
        %v1732 = vsel %vm448, %v1731, %v1723
        %v1733 = vrot.slane %v1725, 6
        %v1734 = vsel %vm451, %v1733, %v1732
        %v1735 = vrot.slane %v1726, 5
        %v1736 = vsel %vm454, %v1735, %v1734
        %v1737 = vsel %vm1061, %v1736, 0
        %1739 = vmatprep.subr.mxu0 0.0
        %1740 = vmatpush1.msra.mxu0 %v1046
        %1741 = vmatprep.subr.mxu0 0.0
        %1742 = vmatpush1.msra.mxu0 0.0
        %1743 = vmatprep.subr.mxu0 0.0
        %1744 = vmatpush1.msra.mxu0 0.0
        %1745 = vmatprep.subr.mxu0 0.0
        %1746 = vmatpush1.msra.mxu0 0.0
        %1747 = vmatprep.subr.mxu0 0.0
        %1748 = vmatpush1.msra.mxu0 0.0
        %1749 = vmatprep.subr.mxu0 0.0
        %1750 = vmatpush1.msra.mxu0 0.0
        %1751 = vmatprep.subr.mxu0 0.0
        %1752 = vmatpush1.msra.mxu0 0.0
        %1753 = vmatprep.subr.mxu0 0.0
        %1754 = vmatpush1.msra.mxu0 0.0
        %1755 = vmatprep.subr.mxu0 0.0
        %1756 = vmatpush1.msra.mxu0 0.0
        %1757 = vmatprep.subr.mxu0 0.0
        %1758 = vmatpush1.msra.mxu0 0.0
        %1759 = vmatprep.subr.mxu0 0.0
        %1760 = vmatpush1.msra.mxu0 0.0
        %1761 = vmatprep.subr.mxu0 0.0
        %1762 = vmatpush1.msra.mxu0 0.0
        %1763 = vmatprep.subr.mxu0 0.0
        %1764 = vmatpush1.msra.mxu0 0.0
        %1765 = vmatprep.subr.mxu0 0.0
        %1766 = vmatpush1.msra.mxu0 0.0
        %1767 = vmatprep.subr.mxu0 0.0
        %1768 = vmatpush1.msra.mxu0 0.0
        %1769 = vmatprep.subr.mxu0 0.0
        %1770 = vmatpush1.msra.mxu0 0.0
        %1771 = vmatprep.subr.mxu0 0.0
        %1772 = vmatpush1.msra.mxu0 0.0
        %1773 = vmatprep.subr.mxu0 0.0
        %1774 = vmatpush1.msra.mxu0 0.0
        %1775 = vmatprep.subr.mxu0 0.0
        %1776 = vmatpush1.msra.mxu0 0.0
        %1777 = vmatprep.subr.mxu0 0.0
        %1778 = vmatpush1.msra.mxu0 0.0
        %1779 = vmatprep.subr.mxu0 0.0
        %1780 = vmatpush1.msra.mxu0 0.0
        %1781 = vmatprep.subr.mxu0 0.0
        %1782 = vmatpush1.msra.mxu0 0.0
        %1783 = vmatprep.subr.mxu0 0.0
        %1784 = vmatpush1.msra.mxu0 0.0
        %1785 = vmatprep.subr.mxu0 0.0
        %1786 = vmatpush1.msra.mxu0 0.0
        %1787 = vmatprep.subr.mxu0 0.0
        %1788 = vmatpush1.msra.mxu0 0.0
        %1789 = vmatprep.subr.mxu0 0.0
        %1790 = vmatpush1.msra.mxu0 0.0
        %1791 = vmatprep.subr.mxu0 0.0
        %1792 = vmatpush1.msra.mxu0 0.0
        %1793 = vmatprep.subr.mxu0 0.0
        %1794 = vmatpush1.msra.mxu0 0.0
        %1795 = vmatprep.subr.mxu0 0.0
        %1796 = vmatpush1.msra.mxu0 0.0
        %1797 = vmatprep.subr.mxu0 0.0
        %1798 = vmatpush1.msra.mxu0 0.0
        %1799 = vmatprep.subr.mxu0 0.0
        %1800 = vmatpush1.msra.mxu0 0.0
        %1801 = vmatprep.subr.mxu0 0.0
        %1802 = vmatpush1.msra.mxu0 0.0
        %1803 = vmatprep.mubr.f32.mxu0 0.0
        %1804 = vmatmul.mubr.f32.gmra.mrb[0].mxu0 %v1737
        %v1805 = vpop.f32.mrb[0].mxu0
        %v1806 = vadd.f32 0.0, %v1805
        %v1807 = vpop.f32.mrb[0].mxu0
        %1808 = vdwg.mxu0
        %v1809 = vpack.c.bf16 %v1806, %v1806
        %v1811 = vunpack.c.l.b16 %v1809
        %v1812 = vpack.c.b16 %v1811, %v1811
        %v1813 = vrot.slane %v1812, 6
        %1814 = vrot.lane.b32.xlu0 %v1813, 16
        %v1815 = vpop.permute.xlu0 %1814
        %vm1817 = vcmask 322690
        %1818 = vst.msk [vmem:[#allocation2 + $0x8] sm:$0xc] %vm1817, %v1815
        %v1819 = vld [vmem:[%s367 + $0x3] sm:$0x1]
        %v1820 = vld [vmem:[%s367 + $0xb] sm:$0x1]
        %v1821 = vld [vmem:[%s367 + $0x13] sm:$0x1]
        %v1822 = vld [vmem:[%s367 + $0x1b] sm:$0x1]
        %v1823 = vmul.f32 %v1819, 0.73333335
        %v1824 = vmul.f32 %v1820, 0.73333335
        %v1825 = vmul.f32 %v1821, 0.73333335
        %v1826 = vmul.f32 %v1822, 0.73333335
        %v1827 = vld [vmem:[%s367 + $0x4] sm:$0x1]
        %v1828 = vld [vmem:[%s367 + $0xc] sm:$0x1]
        %v1829 = vld [vmem:[%s367 + $0x14] sm:$0x1]
        %v1830 = vld [vmem:[%s367 + $0x1c] sm:$0x1]
        %v1831 = vmul.f32 %v1827, 0.26666668
        %v1832 = vmul.f32 %v1828, 0.26666668
        %v1833 = vmul.f32 %v1829, 0.26666668
        %v1834 = vmul.f32 %v1830, 0.26666668
        %v1835 = vadd.f32 %v1823, %v1831
        %v1836 = vadd.f32 %v1824, %v1832
        %v1837 = vadd.f32 %v1825, %v1833
        %v1838 = vadd.f32 %v1826, %v1834
        %v1843 = vrot.slane %v1836, 7
        %v1844 = vsel %vm448, %v1843, %v1835
        %v1845 = vrot.slane %v1837, 6
        %v1846 = vsel %vm451, %v1845, %v1844
        %v1847 = vrot.slane %v1838, 5
        %v1848 = vsel %vm454, %v1847, %v1846
        %v1849 = vsel %vm1061, %v1848, 0
        %1851 = vmatprep.subr.mxu0 0.0
        %1852 = vmatpush1.msra.mxu0 %v1046
        %1853 = vmatprep.subr.mxu0 0.0
        %1854 = vmatpush1.msra.mxu0 0.0
        %1855 = vmatprep.subr.mxu0 0.0
        %1856 = vmatpush1.msra.mxu0 0.0
        %1857 = vmatprep.subr.mxu0 0.0
        %1858 = vmatpush1.msra.mxu0 0.0
        %1859 = vmatprep.subr.mxu0 0.0
        %1860 = vmatpush1.msra.mxu0 0.0
        %1861 = vmatprep.subr.mxu0 0.0
        %1862 = vmatpush1.msra.mxu0 0.0
        %1863 = vmatprep.subr.mxu0 0.0
        %1864 = vmatpush1.msra.mxu0 0.0
        %1865 = vmatprep.subr.mxu0 0.0
        %1866 = vmatpush1.msra.mxu0 0.0
        %1867 = vmatprep.subr.mxu0 0.0
        %1868 = vmatpush1.msra.mxu0 0.0
        %1869 = vmatprep.subr.mxu0 0.0
        %1870 = vmatpush1.msra.mxu0 0.0
        %1871 = vmatprep.subr.mxu0 0.0
        %1872 = vmatpush1.msra.mxu0 0.0
        %1873 = vmatprep.subr.mxu0 0.0
        %1874 = vmatpush1.msra.mxu0 0.0
        %1875 = vmatprep.subr.mxu0 0.0
        %1876 = vmatpush1.msra.mxu0 0.0
        %1877 = vmatprep.subr.mxu0 0.0
        %1878 = vmatpush1.msra.mxu0 0.0
        %1879 = vmatprep.subr.mxu0 0.0
        %1880 = vmatpush1.msra.mxu0 0.0
        %1881 = vmatprep.subr.mxu0 0.0
        %1882 = vmatpush1.msra.mxu0 0.0
        %1883 = vmatprep.subr.mxu0 0.0
        %1884 = vmatpush1.msra.mxu0 0.0
        %1885 = vmatprep.subr.mxu0 0.0
        %1886 = vmatpush1.msra.mxu0 0.0
        %1887 = vmatprep.subr.mxu0 0.0
        %1888 = vmatpush1.msra.mxu0 0.0
        %1889 = vmatprep.subr.mxu0 0.0
        %1890 = vmatpush1.msra.mxu0 0.0
        %1891 = vmatprep.subr.mxu0 0.0
        %1892 = vmatpush1.msra.mxu0 0.0
        %1893 = vmatprep.subr.mxu0 0.0
        %1894 = vmatpush1.msra.mxu0 0.0
        %1895 = vmatprep.subr.mxu0 0.0
        %1896 = vmatpush1.msra.mxu0 0.0
        %1897 = vmatprep.subr.mxu0 0.0
        %1898 = vmatpush1.msra.mxu0 0.0
        %1899 = vmatprep.subr.mxu0 0.0
        %1900 = vmatpush1.msra.mxu0 0.0
        %1901 = vmatprep.subr.mxu0 0.0
        %1902 = vmatpush1.msra.mxu0 0.0
        %1903 = vmatprep.subr.mxu0 0.0
        %1904 = vmatpush1.msra.mxu0 0.0
        %1905 = vmatprep.subr.mxu0 0.0
        %1906 = vmatpush1.msra.mxu0 0.0
        %1907 = vmatprep.subr.mxu0 0.0
        %1908 = vmatpush1.msra.mxu0 0.0
        %1909 = vmatprep.subr.mxu0 0.0
        %1910 = vmatpush1.msra.mxu0 0.0
        %1911 = vmatprep.subr.mxu0 0.0
        %1912 = vmatpush1.msra.mxu0 0.0
        %1913 = vmatprep.subr.mxu0 0.0
        %1914 = vmatpush1.msra.mxu0 0.0
        %1915 = vmatprep.mubr.f32.mxu0 0.0
        %1916 = vmatmul.mubr.f32.gmra.mrb[0].mxu0 %v1849
        %v1917 = vpop.f32.mrb[0].mxu0
        %v1918 = vadd.f32 0.0, %v1917
        %v1919 = vpop.f32.mrb[0].mxu0
        %1920 = vdwg.mxu0
        %v1921 = vpack.c.bf16 %v1918, %v1918
        %v1923 = vunpack.c.l.b16 %v1921
        %v1924 = vpack.c.b16 %v1923, %v1923
        %v1925 = vrot.slane %v1924, 6
        %1926 = vrot.lane.b32.xlu0 %v1925, 40
        %v1927 = vpop.permute.xlu0 %1926
        %vm1929 = vcmask 519490
        %1930 = vst.msk [vmem:[#allocation2 + $0x8] sm:$0xc] %vm1929, %v1927
        %v1931 = vld [vmem:[%s367 + $0x3] sm:$0x1]
        %v1932 = vld [vmem:[%s367 + $0xb] sm:$0x1]
        %v1933 = vld [vmem:[%s367 + $0x13] sm:$0x1]
        %v1934 = vld [vmem:[%s367 + $0x1b] sm:$0x1]
        %v1935 = vmul.f32 %v1931, 0.26666668
        %v1936 = vmul.f32 %v1932, 0.26666668
        %v1937 = vmul.f32 %v1933, 0.26666668
        %v1938 = vmul.f32 %v1934, 0.26666668
        %v1939 = vld [vmem:[%s367 + $0x4] sm:$0x1]
        %v1940 = vld [vmem:[%s367 + $0xc] sm:$0x1]
        %v1941 = vld [vmem:[%s367 + $0x14] sm:$0x1]
        %v1942 = vld [vmem:[%s367 + $0x1c] sm:$0x1]
        %v1943 = vmul.f32 %v1939, 0.73333335
        %v1944 = vmul.f32 %v1940, 0.73333335
        %v1945 = vmul.f32 %v1941, 0.73333335
        %v1946 = vmul.f32 %v1942, 0.73333335
        %v1947 = vadd.f32 %v1935, %v1943
        %v1948 = vadd.f32 %v1936, %v1944
        %v1949 = vadd.f32 %v1937, %v1945
        %v1950 = vadd.f32 %v1938, %v1946
        %v1955 = vrot.slane %v1948, 7
        %v1956 = vsel %vm448, %v1955, %v1947
        %v1957 = vrot.slane %v1949, 6
        %v1958 = vsel %vm451, %v1957, %v1956
        %v1959 = vrot.slane %v1950, 5
        %v1960 = vsel %vm454, %v1959, %v1958
        %v1961 = vsel %vm1061, %v1960, 0
        %1963 = vmatprep.subr.mxu0 0.0
        %1964 = vmatpush1.msra.mxu0 %v1046
        %1965 = vmatprep.subr.mxu0 0.0
        %1966 = vmatpush1.msra.mxu0 0.0
        %1967 = vmatprep.subr.mxu0 0.0
        %1968 = vmatpush1.msra.mxu0 0.0
        %1969 = vmatprep.subr.mxu0 0.0
        %1970 = vmatpush1.msra.mxu0 0.0
        %1971 = vmatprep.subr.mxu0 0.0
        %1972 = vmatpush1.msra.mxu0 0.0
        %1973 = vmatprep.subr.mxu0 0.0
        %1974 = vmatpush1.msra.mxu0 0.0
        %1975 = vmatprep.subr.mxu0 0.0
        %1976 = vmatpush1.msra.mxu0 0.0
        %1977 = vmatprep.subr.mxu0 0.0
        %1978 = vmatpush1.msra.mxu0 0.0
        %1979 = vmatprep.subr.mxu0 0.0
        %1980 = vmatpush1.msra.mxu0 0.0
        %1981 = vmatprep.subr.mxu0 0.0
        %1982 = vmatpush1.msra.mxu0 0.0
        %1983 = vmatprep.subr.mxu0 0.0
        %1984 = vmatpush1.msra.mxu0 0.0
        %1985 = vmatprep.subr.mxu0 0.0
        %1986 = vmatpush1.msra.mxu0 0.0
        %1987 = vmatprep.subr.mxu0 0.0
        %1988 = vmatpush1.msra.mxu0 0.0
        %1989 = vmatprep.subr.mxu0 0.0
        %1990 = vmatpush1.msra.mxu0 0.0
        %1991 = vmatprep.subr.mxu0 0.0
        %1992 = vmatpush1.msra.mxu0 0.0
        %1993 = vmatprep.subr.mxu0 0.0
        %1994 = vmatpush1.msra.mxu0 0.0
        %1995 = vmatprep.subr.mxu0 0.0
        %1996 = vmatpush1.msra.mxu0 0.0
        %1997 = vmatprep.subr.mxu0 0.0
        %1998 = vmatpush1.msra.mxu0 0.0
        %1999 = vmatprep.subr.mxu0 0.0
        %2000 = vmatpush1.msra.mxu0 0.0
        %2001 = vmatprep.subr.mxu0 0.0
        %2002 = vmatpush1.msra.mxu0 0.0
        %2003 = vmatprep.subr.mxu0 0.0
        %2004 = vmatpush1.msra.mxu0 0.0
        %2005 = vmatprep.subr.mxu0 0.0
        %2006 = vmatpush1.msra.mxu0 0.0
        %2007 = vmatprep.subr.mxu0 0.0
        %2008 = vmatpush1.msra.mxu0 0.0
        %2009 = vmatprep.subr.mxu0 0.0
        %2010 = vmatpush1.msra.mxu0 0.0
        %2011 = vmatprep.subr.mxu0 0.0
        %2012 = vmatpush1.msra.mxu0 0.0
        %2013 = vmatprep.subr.mxu0 0.0
        %2014 = vmatpush1.msra.mxu0 0.0
        %2015 = vmatprep.subr.mxu0 0.0
        %2016 = vmatpush1.msra.mxu0 0.0
        %2017 = vmatprep.subr.mxu0 0.0
        %2018 = vmatpush1.msra.mxu0 0.0
        %2019 = vmatprep.subr.mxu0 0.0
        %2020 = vmatpush1.msra.mxu0 0.0
        %2021 = vmatprep.subr.mxu0 0.0
        %2022 = vmatpush1.msra.mxu0 0.0
        %2023 = vmatprep.subr.mxu0 0.0
        %2024 = vmatpush1.msra.mxu0 0.0
        %2025 = vmatprep.subr.mxu0 0.0
        %2026 = vmatpush1.msra.mxu0 0.0
        %2027 = vmatprep.mubr.f32.mxu0 0.0
        %2028 = vmatmul.mubr.f32.gmra.mrb[0].mxu0 %v1961
        %v2029 = vpop.f32.mrb[0].mxu0
        %v2030 = vadd.f32 0.0, %v2029
        %v2031 = vpop.f32.mrb[0].mxu0
        %2032 = vdwg.mxu0
        %v2033 = vpack.c.bf16 %v2030, %v2030
        %v2035 = vunpack.c.l.b16 %v2033
        %v2036 = vpack.c.b16 %v2035, %v2035
        %v2037 = vrot.slane %v2036, 6
        %2038 = vrot.lane.b32.xlu0 %v2037, 64
        %v2039 = vpop.permute.xlu0 %2038
        %vm2041 = vcmask 716290
        %2042 = vst.msk [vmem:[#allocation2 + $0x8] sm:$0xc] %vm2041, %v2039
        %v2043 = vld [vmem:[%s367 + $0x4] sm:$0x1]
        %v2044 = vld [vmem:[%s367 + $0xc] sm:$0x1]
        %v2045 = vld [vmem:[%s367 + $0x14] sm:$0x1]
        %v2046 = vld [vmem:[%s367 + $0x1c] sm:$0x1]
        %v2047 = vmul.f32 %v2043, 0.8
        %v2048 = vmul.f32 %v2044, 0.8
        %v2049 = vmul.f32 %v2045, 0.8
        %v2050 = vmul.f32 %v2046, 0.8
        %v2051 = vld [vmem:[%s367 + $0x5] sm:$0x1]
        %v2052 = vld [vmem:[%s367 + $0xd] sm:$0x1]
        %v2053 = vld [vmem:[%s367 + $0x15] sm:$0x1]
        %v2054 = vld [vmem:[%s367 + $0x1d] sm:$0x1]
        %v2055 = vmul.f32 %v2051, 0.2
        %v2056 = vmul.f32 %v2052, 0.2
        %v2057 = vmul.f32 %v2053, 0.2
        %v2058 = vmul.f32 %v2054, 0.2
        %v2059 = vadd.f32 %v2047, %v2055
        %v2060 = vadd.f32 %v2048, %v2056
        %v2061 = vadd.f32 %v2049, %v2057
        %v2062 = vadd.f32 %v2050, %v2058
        %v2067 = vrot.slane %v2060, 7
        %v2068 = vsel %vm448, %v2067, %v2059
        %v2069 = vrot.slane %v2061, 6
        %v2070 = vsel %vm451, %v2069, %v2068
        %v2071 = vrot.slane %v2062, 5
        %v2072 = vsel %vm454, %v2071, %v2070
        %v2073 = vsel %vm1061, %v2072, 0
        %2075 = vmatprep.subr.mxu0 0.0
        %2076 = vmatpush1.msra.mxu0 %v1046
        %2077 = vmatprep.subr.mxu0 0.0
        %2078 = vmatpush1.msra.mxu0 0.0
        %2079 = vmatprep.subr.mxu0 0.0
        %2080 = vmatpush1.msra.mxu0 0.0
        %2081 = vmatprep.subr.mxu0 0.0
        %2082 = vmatpush1.msra.mxu0 0.0
        %2083 = vmatprep.subr.mxu0 0.0
        %2084 = vmatpush1.msra.mxu0 0.0
        %2085 = vmatprep.subr.mxu0 0.0
        %2086 = vmatpush1.msra.mxu0 0.0
        %2087 = vmatprep.subr.mxu0 0.0
        %2088 = vmatpush1.msra.mxu0 0.0
        %2089 = vmatprep.subr.mxu0 0.0
        %2090 = vmatpush1.msra.mxu0 0.0
        %2091 = vmatprep.subr.mxu0 0.0
        %2092 = vmatpush1.msra.mxu0 0.0
        %2093 = vmatprep.subr.mxu0 0.0
        %2094 = vmatpush1.msra.mxu0 0.0
        %2095 = vmatprep.subr.mxu0 0.0
        %2096 = vmatpush1.msra.mxu0 0.0
        %2097 = vmatprep.subr.mxu0 0.0
        %2098 = vmatpush1.msra.mxu0 0.0
        %2099 = vmatprep.subr.mxu0 0.0
        %2100 = vmatpush1.msra.mxu0 0.0
        %2101 = vmatprep.subr.mxu0 0.0
        %2102 = vmatpush1.msra.mxu0 0.0
        %2103 = vmatprep.subr.mxu0 0.0
        %2104 = vmatpush1.msra.mxu0 0.0
        %2105 = vmatprep.subr.mxu0 0.0
        %2106 = vmatpush1.msra.mxu0 0.0
        %2107 = vmatprep.subr.mxu0 0.0
        %2108 = vmatpush1.msra.mxu0 0.0
        %2109 = vmatprep.subr.mxu0 0.0
        %2110 = vmatpush1.msra.mxu0 0.0
        %2111 = vmatprep.subr.mxu0 0.0
        %2112 = vmatpush1.msra.mxu0 0.0
        %2113 = vmatprep.subr.mxu0 0.0
        %2114 = vmatpush1.msra.mxu0 0.0
        %2115 = vmatprep.subr.mxu0 0.0
        %2116 = vmatpush1.msra.mxu0 0.0
        %2117 = vmatprep.subr.mxu0 0.0
        %2118 = vmatpush1.msra.mxu0 0.0
        %2119 = vmatprep.subr.mxu0 0.0
        %2120 = vmatpush1.msra.mxu0 0.0
        %2121 = vmatprep.subr.mxu0 0.0
        %2122 = vmatpush1.msra.mxu0 0.0
        %2123 = vmatprep.subr.mxu0 0.0
        %2124 = vmatpush1.msra.mxu0 0.0
        %2125 = vmatprep.subr.mxu0 0.0
        %2126 = vmatpush1.msra.mxu0 0.0
        %2127 = vmatprep.subr.mxu0 0.0
        %2128 = vmatpush1.msra.mxu0 0.0
        %2129 = vmatprep.subr.mxu0 0.0
        %2130 = vmatpush1.msra.mxu0 0.0
        %2131 = vmatprep.subr.mxu0 0.0
        %2132 = vmatpush1.msra.mxu0 0.0
        %2133 = vmatprep.subr.mxu0 0.0
        %2134 = vmatpush1.msra.mxu0 0.0
        %2135 = vmatprep.subr.mxu0 0.0
        %2136 = vmatpush1.msra.mxu0 0.0
        %2137 = vmatprep.subr.mxu0 0.0
        %2138 = vmatpush1.msra.mxu0 0.0
        %2139 = vmatprep.mubr.f32.mxu0 0.0
        %2140 = vmatmul.mubr.f32.gmra.mrb[0].mxu0 %v2073
        %v2141 = vpop.f32.mrb[0].mxu0
        %v2142 = vadd.f32 0.0, %v2141
        %v2143 = vpop.f32.mrb[0].mxu0
        %2144 = vdwg.mxu0
        %v2145 = vpack.c.bf16 %v2142, %v2142
        %v2147 = vunpack.c.l.b16 %v2145
        %v2148 = vpack.c.b16 %v2147, %v2147
        %v2149 = vrot.slane %v2148, 6
        %2150 = vrot.lane.b32.xlu0 %v2149, 88
        %v2151 = vpop.permute.xlu0 %2150
        %vm2153 = vcmask 913090
        %2154 = vst.msk [vmem:[#allocation2 + $0x8] sm:$0xc] %vm2153, %v2151
        %v2155 = vld [vmem:[%s367 + $0x4] sm:$0x1]
        %v2156 = vld [vmem:[%s367 + $0xc] sm:$0x1]
        %v2157 = vld [vmem:[%s367 + $0x14] sm:$0x1]
        %v2158 = vld [vmem:[%s367 + $0x1c] sm:$0x1]
        %v2159 = vmul.f32 %v2155, 0.33333334
        %v2160 = vmul.f32 %v2156, 0.33333334
        %v2161 = vmul.f32 %v2157, 0.33333334
        %v2162 = vmul.f32 %v2158, 0.33333334
        %v2163 = vld [vmem:[%s367 + $0x5] sm:$0x1]
        %v2164 = vld [vmem:[%s367 + $0xd] sm:$0x1]
        %v2165 = vld [vmem:[%s367 + $0x15] sm:$0x1]
        %v2166 = vld [vmem:[%s367 + $0x1d] sm:$0x1]
        %v2167 = vmul.f32 %v2163, 0.6666667
        %v2168 = vmul.f32 %v2164, 0.6666667
        %v2169 = vmul.f32 %v2165, 0.6666667
        %v2170 = vmul.f32 %v2166, 0.6666667
        %v2171 = vadd.f32 %v2159, %v2167
        %v2172 = vadd.f32 %v2160, %v2168
        %v2173 = vadd.f32 %v2161, %v2169
        %v2174 = vadd.f32 %v2162, %v2170
        %v2179 = vrot.slane %v2172, 7
        %v2180 = vsel %vm448, %v2179, %v2171
        %v2181 = vrot.slane %v2173, 6
        %v2182 = vsel %vm451, %v2181, %v2180
        %v2183 = vrot.slane %v2174, 5
        %v2184 = vsel %vm454, %v2183, %v2182
        %v2185 = vsel %vm1061, %v2184, 0
        %2187 = vmatprep.subr.mxu0 0.0
        %2188 = vmatpush1.msra.mxu0 %v1046
        %2189 = vmatprep.subr.mxu0 0.0
        %2190 = vmatpush1.msra.mxu0 0.0
        %2191 = vmatprep.subr.mxu0 0.0
        %2192 = vmatpush1.msra.mxu0 0.0
        %2193 = vmatprep.subr.mxu0 0.0
        %2194 = vmatpush1.msra.mxu0 0.0
        %2195 = vmatprep.subr.mxu0 0.0
        %2196 = vmatpush1.msra.mxu0 0.0
        %2197 = vmatprep.subr.mxu0 0.0
        %2198 = vmatpush1.msra.mxu0 0.0
        %2199 = vmatprep.subr.mxu0 0.0
        %2200 = vmatpush1.msra.mxu0 0.0
        %2201 = vmatprep.subr.mxu0 0.0
        %2202 = vmatpush1.msra.mxu0 0.0
        %2203 = vmatprep.subr.mxu0 0.0
        %2204 = vmatpush1.msra.mxu0 0.0
        %2205 = vmatprep.subr.mxu0 0.0
        %2206 = vmatpush1.msra.mxu0 0.0
        %2207 = vmatprep.subr.mxu0 0.0
        %2208 = vmatpush1.msra.mxu0 0.0
        %2209 = vmatprep.subr.mxu0 0.0
        %2210 = vmatpush1.msra.mxu0 0.0
        %2211 = vmatprep.subr.mxu0 0.0
        %2212 = vmatpush1.msra.mxu0 0.0
        %2213 = vmatprep.subr.mxu0 0.0
        %2214 = vmatpush1.msra.mxu0 0.0
        %2215 = vmatprep.subr.mxu0 0.0
        %2216 = vmatpush1.msra.mxu0 0.0
        %2217 = vmatprep.subr.mxu0 0.0
        %2218 = vmatpush1.msra.mxu0 0.0
        %2219 = vmatprep.subr.mxu0 0.0
        %2220 = vmatpush1.msra.mxu0 0.0
        %2221 = vmatprep.subr.mxu0 0.0
        %2222 = vmatpush1.msra.mxu0 0.0
        %2223 = vmatprep.subr.mxu0 0.0
        %2224 = vmatpush1.msra.mxu0 0.0
        %2225 = vmatprep.subr.mxu0 0.0
        %2226 = vmatpush1.msra.mxu0 0.0
        %2227 = vmatprep.subr.mxu0 0.0
        %2228 = vmatpush1.msra.mxu0 0.0
        %2229 = vmatprep.subr.mxu0 0.0
        %2230 = vmatpush1.msra.mxu0 0.0
        %2231 = vmatprep.subr.mxu0 0.0
        %2232 = vmatpush1.msra.mxu0 0.0
        %2233 = vmatprep.subr.mxu0 0.0
        %2234 = vmatpush1.msra.mxu0 0.0
        %2235 = vmatprep.subr.mxu0 0.0
        %2236 = vmatpush1.msra.mxu0 0.0
        %2237 = vmatprep.subr.mxu0 0.0
        %2238 = vmatpush1.msra.mxu0 0.0
        %2239 = vmatprep.subr.mxu0 0.0
        %2240 = vmatpush1.msra.mxu0 0.0
        %2241 = vmatprep.subr.mxu0 0.0
        %2242 = vmatpush1.msra.mxu0 0.0
        %2243 = vmatprep.subr.mxu0 0.0
        %2244 = vmatpush1.msra.mxu0 0.0
        %2245 = vmatprep.subr.mxu0 0.0
        %2246 = vmatpush1.msra.mxu0 0.0
        %2247 = vmatprep.subr.mxu0 0.0
        %2248 = vmatpush1.msra.mxu0 0.0
        %2249 = vmatprep.subr.mxu0 0.0
        %2250 = vmatpush1.msra.mxu0 0.0
        %2251 = vmatprep.mubr.f32.mxu0 0.0
        %2252 = vmatmul.mubr.f32.gmra.mrb[0].mxu0 %v2185
        %v2253 = vpop.f32.mrb[0].mxu0
        %v2254 = vadd.f32 0.0, %v2253
        %v2255 = vpop.f32.mrb[0].mxu0
        %2256 = vdwg.mxu0
        %v2257 = vpack.c.bf16 %v2254, %v2254
        %v2259 = vunpack.c.l.b16 %v2257
        %v2260 = vpack.c.b16 %v2259, %v2259
        %v2261 = vrot.slane %v2260, 6
        %2262 = vrot.lane.b32.xlu0 %v2261, 112
        %v2263 = vpop.permute.xlu0 %2262
        %v2264 = vrot.slane %v2263, 4
        %vm2265 = vcmask 916480
        %v2266 = vsel %vm2265, %v2264, %v2263
        %vm2268 = vcmask 1044354
        %vm2269 = vcmask 64518
        %vm2270 = vmor %vm2269, %vm2268
        %2271 = vst.msk [vmem:[#allocation2 + $0x8] sm:$0xcc] %vm2270, %v2266
        %v2272 = vld [vmem:[%s367 + $0x5] sm:$0x1]
        %v2273 = vld [vmem:[%s367 + $0xd] sm:$0x1]
        %v2274 = vld [vmem:[%s367 + $0x15] sm:$0x1]
        %v2275 = vld [vmem:[%s367 + $0x1d] sm:$0x1]
        %v2276 = vmul.f32 %v2272, 0.8666667
        %v2277 = vmul.f32 %v2273, 0.8666667
        %v2278 = vmul.f32 %v2274, 0.8666667
        %v2279 = vmul.f32 %v2275, 0.8666667
        %v2280 = vld [vmem:[%s367 + $0x6] sm:$0x1]
        %v2281 = vld [vmem:[%s367 + $0xe] sm:$0x1]
        %v2282 = vld [vmem:[%s367 + $0x16] sm:$0x1]
        %v2283 = vld [vmem:[%s367 + $0x1e] sm:$0x1]
        %v2284 = vmul.f32 %v2280, 0.13333334
        %v2285 = vmul.f32 %v2281, 0.13333334
        %v2286 = vmul.f32 %v2282, 0.13333334
        %v2287 = vmul.f32 %v2283, 0.13333334
        %v2288 = vadd.f32 %v2276, %v2284
        %v2289 = vadd.f32 %v2277, %v2285
        %v2290 = vadd.f32 %v2278, %v2286
        %v2291 = vadd.f32 %v2279, %v2287
        %v2296 = vrot.slane %v2289, 7
        %v2297 = vsel %vm448, %v2296, %v2288
        %v2298 = vrot.slane %v2290, 6
        %v2299 = vsel %vm451, %v2298, %v2297
        %v2300 = vrot.slane %v2291, 5
        %v2301 = vsel %vm454, %v2300, %v2299
        %v2302 = vsel %vm1061, %v2301, 0
        %2304 = vmatprep.subr.mxu0 0.0
        %2305 = vmatpush1.msra.mxu0 %v1046
        %2306 = vmatprep.subr.mxu0 0.0
        %2307 = vmatpush1.msra.mxu0 0.0
        %2308 = vmatprep.subr.mxu0 0.0
        %2309 = vmatpush1.msra.mxu0 0.0
        %2310 = vmatprep.subr.mxu0 0.0
        %2311 = vmatpush1.msra.mxu0 0.0
        %2312 = vmatprep.subr.mxu0 0.0
        %2313 = vmatpush1.msra.mxu0 0.0
        %2314 = vmatprep.subr.mxu0 0.0
        %2315 = vmatpush1.msra.mxu0 0.0
        %2316 = vmatprep.subr.mxu0 0.0
        %2317 = vmatpush1.msra.mxu0 0.0
        %2318 = vmatprep.subr.mxu0 0.0
        %2319 = vmatpush1.msra.mxu0 0.0
        %2320 = vmatprep.subr.mxu0 0.0
        %2321 = vmatpush1.msra.mxu0 0.0
        %2322 = vmatprep.subr.mxu0 0.0
        %2323 = vmatpush1.msra.mxu0 0.0
        %2324 = vmatprep.subr.mxu0 0.0
        %2325 = vmatpush1.msra.mxu0 0.0
        %2326 = vmatprep.subr.mxu0 0.0
        %2327 = vmatpush1.msra.mxu0 0.0
        %2328 = vmatprep.subr.mxu0 0.0
        %2329 = vmatpush1.msra.mxu0 0.0
        %2330 = vmatprep.subr.mxu0 0.0
        %2331 = vmatpush1.msra.mxu0 0.0
        %2332 = vmatprep.subr.mxu0 0.0
        %2333 = vmatpush1.msra.mxu0 0.0
        %2334 = vmatprep.subr.mxu0 0.0
        %2335 = vmatpush1.msra.mxu0 0.0
        %2336 = vmatprep.subr.mxu0 0.0
        %2337 = vmatpush1.msra.mxu0 0.0
        %2338 = vmatprep.subr.mxu0 0.0
        %2339 = vmatpush1.msra.mxu0 0.0
        %2340 = vmatprep.subr.mxu0 0.0
        %2341 = vmatpush1.msra.mxu0 0.0
        %2342 = vmatprep.subr.mxu0 0.0
        %2343 = vmatpush1.msra.mxu0 0.0
        %2344 = vmatprep.subr.mxu0 0.0
        %2345 = vmatpush1.msra.mxu0 0.0
        %2346 = vmatprep.subr.mxu0 0.0
        %2347 = vmatpush1.msra.mxu0 0.0
        %2348 = vmatprep.subr.mxu0 0.0
        %2349 = vmatpush1.msra.mxu0 0.0
        %2350 = vmatprep.subr.mxu0 0.0
        %2351 = vmatpush1.msra.mxu0 0.0
        %2352 = vmatprep.subr.mxu0 0.0
        %2353 = vmatpush1.msra.mxu0 0.0
        %2354 = vmatprep.subr.mxu0 0.0
        %2355 = vmatpush1.msra.mxu0 0.0
        %2356 = vmatprep.subr.mxu0 0.0
        %2357 = vmatpush1.msra.mxu0 0.0
        %2358 = vmatprep.subr.mxu0 0.0
        %2359 = vmatpush1.msra.mxu0 0.0
        %2360 = vmatprep.subr.mxu0 0.0
        %2361 = vmatpush1.msra.mxu0 0.0
        %2362 = vmatprep.subr.mxu0 0.0
        %2363 = vmatpush1.msra.mxu0 0.0
        %2364 = vmatprep.subr.mxu0 0.0
        %2365 = vmatpush1.msra.mxu0 0.0
        %2366 = vmatprep.subr.mxu0 0.0
        %2367 = vmatpush1.msra.mxu0 0.0
        %2368 = vmatprep.mubr.f32.mxu0 0.0
        %2369 = vmatmul.mubr.f32.gmra.mrb[0].mxu0 %v2302
        %v2370 = vpop.f32.mrb[0].mxu0
        %v2371 = vadd.f32 0.0, %v2370
        %v2372 = vpop.f32.mrb[0].mxu0
        %2373 = vdwg.mxu0
        %v2374 = vpack.c.bf16 %v2371, %v2371
        %v2376 = vunpack.c.l.b16 %v2374
        %v2377 = vpack.c.b16 %v2376, %v2376
        %v2378 = vrot.slane %v2377, 6
        %2379 = vrot.lane.b32.xlu0 %v2378, 8
        %v2380 = vpop.permute.xlu0 %2379
        %vm2382 = vcmask 257090
        %2383 = vst.msk [vmem:[#allocation2 + $0xc] sm:$0xc] %vm2382, %v2380
        %v2384 = vld [vmem:[%s367 + $0x5] sm:$0x1]
        %v2385 = vld [vmem:[%s367 + $0xd] sm:$0x1]
        %v2386 = vld [vmem:[%s367 + $0x15] sm:$0x1]
        %v2387 = vld [vmem:[%s367 + $0x1d] sm:$0x1]
        %v2388 = vmul.f32 %v2384, 0.4
        %v2389 = vmul.f32 %v2385, 0.4
        %v2390 = vmul.f32 %v2386, 0.4
        %v2391 = vmul.f32 %v2387, 0.4
        %v2392 = vld [vmem:[%s367 + $0x6] sm:$0x1]
        %v2393 = vld [vmem:[%s367 + $0xe] sm:$0x1]
        %v2394 = vld [vmem:[%s367 + $0x16] sm:$0x1]
        %v2395 = vld [vmem:[%s367 + $0x1e] sm:$0x1]
        %v2396 = vmul.f32 %v2392, 0.6
        %v2397 = vmul.f32 %v2393, 0.6
        %v2398 = vmul.f32 %v2394, 0.6
        %v2399 = vmul.f32 %v2395, 0.6
        %v2400 = vadd.f32 %v2388, %v2396
        %v2401 = vadd.f32 %v2389, %v2397
        %v2402 = vadd.f32 %v2390, %v2398
        %v2403 = vadd.f32 %v2391, %v2399
        %v2408 = vrot.slane %v2401, 7
        %v2409 = vsel %vm448, %v2408, %v2400
        %v2410 = vrot.slane %v2402, 6
        %v2411 = vsel %vm451, %v2410, %v2409
        %v2412 = vrot.slane %v2403, 5
        %v2413 = vsel %vm454, %v2412, %v2411
        %v2414 = vsel %vm1061, %v2413, 0
        %2416 = vmatprep.subr.mxu0 0.0
        %2417 = vmatpush1.msra.mxu0 %v1046
        %2418 = vmatprep.subr.mxu0 0.0
        %2419 = vmatpush1.msra.mxu0 0.0
        %2420 = vmatprep.subr.mxu0 0.0
        %2421 = vmatpush1.msra.mxu0 0.0
        %2422 = vmatprep.subr.mxu0 0.0
        %2423 = vmatpush1.msra.mxu0 0.0
        %2424 = vmatprep.subr.mxu0 0.0
        %2425 = vmatpush1.msra.mxu0 0.0
        %2426 = vmatprep.subr.mxu0 0.0
        %2427 = vmatpush1.msra.mxu0 0.0
        %2428 = vmatprep.subr.mxu0 0.0
        %2429 = vmatpush1.msra.mxu0 0.0
        %2430 = vmatprep.subr.mxu0 0.0
        %2431 = vmatpush1.msra.mxu0 0.0
        %2432 = vmatprep.subr.mxu0 0.0
        %2433 = vmatpush1.msra.mxu0 0.0
        %2434 = vmatprep.subr.mxu0 0.0
        %2435 = vmatpush1.msra.mxu0 0.0
        %2436 = vmatprep.subr.mxu0 0.0
        %2437 = vmatpush1.msra.mxu0 0.0
        %2438 = vmatprep.subr.mxu0 0.0
        %2439 = vmatpush1.msra.mxu0 0.0
        %2440 = vmatprep.subr.mxu0 0.0
        %2441 = vmatpush1.msra.mxu0 0.0
        %2442 = vmatprep.subr.mxu0 0.0
        %2443 = vmatpush1.msra.mxu0 0.0
        %2444 = vmatprep.subr.mxu0 0.0
        %2445 = vmatpush1.msra.mxu0 0.0
        %2446 = vmatprep.subr.mxu0 0.0
        %2447 = vmatpush1.msra.mxu0 0.0
        %2448 = vmatprep.subr.mxu0 0.0
        %2449 = vmatpush1.msra.mxu0 0.0
        %2450 = vmatprep.subr.mxu0 0.0
        %2451 = vmatpush1.msra.mxu0 0.0
        %2452 = vmatprep.subr.mxu0 0.0
        %2453 = vmatpush1.msra.mxu0 0.0
        %2454 = vmatprep.subr.mxu0 0.0
        %2455 = vmatpush1.msra.mxu0 0.0
        %2456 = vmatprep.subr.mxu0 0.0
        %2457 = vmatpush1.msra.mxu0 0.0
        %2458 = vmatprep.subr.mxu0 0.0
        %2459 = vmatpush1.msra.mxu0 0.0
        %2460 = vmatprep.subr.mxu0 0.0
        %2461 = vmatpush1.msra.mxu0 0.0
        %2462 = vmatprep.subr.mxu0 0.0
        %2463 = vmatpush1.msra.mxu0 0.0
        %2464 = vmatprep.subr.mxu0 0.0
        %2465 = vmatpush1.msra.mxu0 0.0
        %2466 = vmatprep.subr.mxu0 0.0
        %2467 = vmatpush1.msra.mxu0 0.0
        %2468 = vmatprep.subr.mxu0 0.0
        %2469 = vmatpush1.msra.mxu0 0.0
        %2470 = vmatprep.subr.mxu0 0.0
        %2471 = vmatpush1.msra.mxu0 0.0
        %2472 = vmatprep.subr.mxu0 0.0
        %2473 = vmatpush1.msra.mxu0 0.0
        %2474 = vmatprep.subr.mxu0 0.0
        %2475 = vmatpush1.msra.mxu0 0.0
        %2476 = vmatprep.subr.mxu0 0.0
        %2477 = vmatpush1.msra.mxu0 0.0
        %2478 = vmatprep.subr.mxu0 0.0
        %2479 = vmatpush1.msra.mxu0 0.0
        %2480 = vmatprep.mubr.f32.mxu0 0.0
        %2481 = vmatmul.mubr.f32.gmra.mrb[0].mxu0 %v2414
        %v2482 = vpop.f32.mrb[0].mxu0
        %v2483 = vadd.f32 0.0, %v2482
        %v2484 = vpop.f32.mrb[0].mxu0
        %2485 = vdwg.mxu0
        %v2486 = vpack.c.bf16 %v2483, %v2483
        %v2488 = vunpack.c.l.b16 %v2486
        %v2489 = vpack.c.b16 %v2488, %v2488
        %v2490 = vrot.slane %v2489, 6
        %2491 = vrot.lane.b32.xlu0 %v2490, 32
        %v2492 = vpop.permute.xlu0 %2491
        %vm2494 = vcmask 453890
        %2495 = vst.msk [vmem:[#allocation2 + $0xc] sm:$0xc] %vm2494, %v2492
        %v2496 = vld [vmem:[%s367 + $0x6] sm:$0x1]
        %v2497 = vld [vmem:[%s367 + $0xe] sm:$0x1]
        %v2498 = vld [vmem:[%s367 + $0x16] sm:$0x1]
        %v2499 = vld [vmem:[%s367 + $0x1e] sm:$0x1]
        %v2500 = vmul.f32 %v2496, 0.93333334
        %v2501 = vmul.f32 %v2497, 0.93333334
        %v2502 = vmul.f32 %v2498, 0.93333334
        %v2503 = vmul.f32 %v2499, 0.93333334
        %v2504 = vld [vmem:[%s367 + $0x7] sm:$0x1]
        %v2505 = vld [vmem:[%s367 + $0xf] sm:$0x1]
        %v2506 = vld [vmem:[%s367 + $0x17] sm:$0x1]
        %v2507 = vld [vmem:[%s367 + $0x1f] sm:$0x1]
        %v2508 = vmul.f32 %v2504, 0.06666667
        %v2509 = vmul.f32 %v2505, 0.06666667
        %v2510 = vmul.f32 %v2506, 0.06666667
        %v2511 = vmul.f32 %v2507, 0.06666667
        %v2512 = vadd.f32 %v2500, %v2508
        %v2513 = vadd.f32 %v2501, %v2509
        %v2514 = vadd.f32 %v2502, %v2510
        %v2515 = vadd.f32 %v2503, %v2511
        %v2520 = vrot.slane %v2513, 7
        %v2521 = vsel %vm448, %v2520, %v2512
        %v2522 = vrot.slane %v2514, 6
        %v2523 = vsel %vm451, %v2522, %v2521
        %v2524 = vrot.slane %v2515, 5
        %v2525 = vsel %vm454, %v2524, %v2523
        %v2526 = vsel %vm1061, %v2525, 0
        %2528 = vmatprep.subr.mxu0 0.0
        %2529 = vmatpush1.msra.mxu0 %v1046
        %2530 = vmatprep.subr.mxu0 0.0
        %2531 = vmatpush1.msra.mxu0 0.0
        %2532 = vmatprep.subr.mxu0 0.0
        %2533 = vmatpush1.msra.mxu0 0.0
        %2534 = vmatprep.subr.mxu0 0.0
        %2535 = vmatpush1.msra.mxu0 0.0
        %2536 = vmatprep.subr.mxu0 0.0
        %2537 = vmatpush1.msra.mxu0 0.0
        %2538 = vmatprep.subr.mxu0 0.0
        %2539 = vmatpush1.msra.mxu0 0.0
        %2540 = vmatprep.subr.mxu0 0.0
        %2541 = vmatpush1.msra.mxu0 0.0
        %2542 = vmatprep.subr.mxu0 0.0
        %2543 = vmatpush1.msra.mxu0 0.0
        %2544 = vmatprep.subr.mxu0 0.0
        %2545 = vmatpush1.msra.mxu0 0.0
        %2546 = vmatprep.subr.mxu0 0.0
        %2547 = vmatpush1.msra.mxu0 0.0
        %2548 = vmatprep.subr.mxu0 0.0
        %2549 = vmatpush1.msra.mxu0 0.0
        %2550 = vmatprep.subr.mxu0 0.0
        %2551 = vmatpush1.msra.mxu0 0.0
        %2552 = vmatprep.subr.mxu0 0.0
        %2553 = vmatpush1.msra.mxu0 0.0
        %2554 = vmatprep.subr.mxu0 0.0
        %2555 = vmatpush1.msra.mxu0 0.0
        %2556 = vmatprep.subr.mxu0 0.0
        %2557 = vmatpush1.msra.mxu0 0.0
        %2558 = vmatprep.subr.mxu0 0.0
        %2559 = vmatpush1.msra.mxu0 0.0
        %2560 = vmatprep.subr.mxu0 0.0
        %2561 = vmatpush1.msra.mxu0 0.0
        %2562 = vmatprep.subr.mxu0 0.0
        %2563 = vmatpush1.msra.mxu0 0.0
        %2564 = vmatprep.subr.mxu0 0.0
        %2565 = vmatpush1.msra.mxu0 0.0
        %2566 = vmatprep.subr.mxu0 0.0
        %2567 = vmatpush1.msra.mxu0 0.0
        %2568 = vmatprep.subr.mxu0 0.0
        %2569 = vmatpush1.msra.mxu0 0.0
        %2570 = vmatprep.subr.mxu0 0.0
        %2571 = vmatpush1.msra.mxu0 0.0
        %2572 = vmatprep.subr.mxu0 0.0
        %2573 = vmatpush1.msra.mxu0 0.0
        %2574 = vmatprep.subr.mxu0 0.0
        %2575 = vmatpush1.msra.mxu0 0.0
        %2576 = vmatprep.subr.mxu0 0.0
        %2577 = vmatpush1.msra.mxu0 0.0
        %2578 = vmatprep.subr.mxu0 0.0
        %2579 = vmatpush1.msra.mxu0 0.0
        %2580 = vmatprep.subr.mxu0 0.0
        %2581 = vmatpush1.msra.mxu0 0.0
        %2582 = vmatprep.subr.mxu0 0.0
        %2583 = vmatpush1.msra.mxu0 0.0
        %2584 = vmatprep.subr.mxu0 0.0
        %2585 = vmatpush1.msra.mxu0 0.0
        %2586 = vmatprep.subr.mxu0 0.0
        %2587 = vmatpush1.msra.mxu0 0.0
        %2588 = vmatprep.subr.mxu0 0.0
        %2589 = vmatpush1.msra.mxu0 0.0
        %2590 = vmatprep.subr.mxu0 0.0
        %2591 = vmatpush1.msra.mxu0 0.0
        %2592 = vmatprep.mubr.f32.mxu0 0.0
        %2593 = vmatmul.mubr.f32.gmra.mrb[0].mxu0 %v2526
        %v2594 = vpop.f32.mrb[0].mxu0
        %v2595 = vadd.f32 0.0, %v2594
        %v2596 = vpop.f32.mrb[0].mxu0
        %2597 = vdwg.mxu0
        %v2598 = vpack.c.bf16 %v2595, %v2595
        %v2600 = vunpack.c.l.b16 %v2598
        %v2601 = vpack.c.b16 %v2600, %v2600
        %v2602 = vrot.slane %v2601, 6
        %2603 = vrot.lane.b32.xlu0 %v2602, 56
        %v2604 = vpop.permute.xlu0 %2603
        %vm2606 = vcmask 650690
        %2607 = vst.msk [vmem:[#allocation2 + $0xc] sm:$0xc] %vm2606, %v2604
        %v2608 = vld [vmem:[%s367 + $0x6] sm:$0x1]
        %v2609 = vld [vmem:[%s367 + $0xe] sm:$0x1]
        %v2610 = vld [vmem:[%s367 + $0x16] sm:$0x1]
        %v2611 = vld [vmem:[%s367 + $0x1e] sm:$0x1]
        %v2612 = vmul.f32 %v2608, 0.46666667
        %v2613 = vmul.f32 %v2609, 0.46666667
        %v2614 = vmul.f32 %v2610, 0.46666667
        %v2615 = vmul.f32 %v2611, 0.46666667
        %v2616 = vld [vmem:[%s367 + $0x7] sm:$0x1]
        %v2617 = vld [vmem:[%s367 + $0xf] sm:$0x1]
        %v2618 = vld [vmem:[%s367 + $0x17] sm:$0x1]
        %v2619 = vld [vmem:[%s367 + $0x1f] sm:$0x1]
        %v2620 = vmul.f32 %v2616, 0.53333336
        %v2621 = vmul.f32 %v2617, 0.53333336
        %v2622 = vmul.f32 %v2618, 0.53333336
        %v2623 = vmul.f32 %v2619, 0.53333336
        %v2624 = vadd.f32 %v2612, %v2620
        %v2625 = vadd.f32 %v2613, %v2621
        %v2626 = vadd.f32 %v2614, %v2622
        %v2627 = vadd.f32 %v2615, %v2623
        %v2632 = vrot.slane %v2625, 7
        %v2633 = vsel %vm448, %v2632, %v2624
        %v2634 = vrot.slane %v2626, 6
        %v2635 = vsel %vm451, %v2634, %v2633
        %v2636 = vrot.slane %v2627, 5
        %v2637 = vsel %vm454, %v2636, %v2635
        %v2638 = vsel %vm1061, %v2637, 0
        %2640 = vmatprep.subr.mxu0 0.0
        %2641 = vmatpush1.msra.mxu0 %v1046
        %2642 = vmatprep.subr.mxu0 0.0
        %2643 = vmatpush1.msra.mxu0 0.0
        %2644 = vmatprep.subr.mxu0 0.0
        %2645 = vmatpush1.msra.mxu0 0.0
        %2646 = vmatprep.subr.mxu0 0.0
        %2647 = vmatpush1.msra.mxu0 0.0
        %2648 = vmatprep.subr.mxu0 0.0
        %2649 = vmatpush1.msra.mxu0 0.0
        %2650 = vmatprep.subr.mxu0 0.0
        %2651 = vmatpush1.msra.mxu0 0.0
        %2652 = vmatprep.subr.mxu0 0.0
        %2653 = vmatpush1.msra.mxu0 0.0
        %2654 = vmatprep.subr.mxu0 0.0
        %2655 = vmatpush1.msra.mxu0 0.0
        %2656 = vmatprep.subr.mxu0 0.0
        %2657 = vmatpush1.msra.mxu0 0.0
        %2658 = vmatprep.subr.mxu0 0.0
        %2659 = vmatpush1.msra.mxu0 0.0
        %2660 = vmatprep.subr.mxu0 0.0
        %2661 = vmatpush1.msra.mxu0 0.0
        %2662 = vmatprep.subr.mxu0 0.0
        %2663 = vmatpush1.msra.mxu0 0.0
        %2664 = vmatprep.subr.mxu0 0.0
        %2665 = vmatpush1.msra.mxu0 0.0
        %2666 = vmatprep.subr.mxu0 0.0
        %2667 = vmatpush1.msra.mxu0 0.0
        %2668 = vmatprep.subr.mxu0 0.0
        %2669 = vmatpush1.msra.mxu0 0.0
        %2670 = vmatprep.subr.mxu0 0.0
        %2671 = vmatpush1.msra.mxu0 0.0
        %2672 = vmatprep.subr.mxu0 0.0
        %2673 = vmatpush1.msra.mxu0 0.0
        %2674 = vmatprep.subr.mxu0 0.0
        %2675 = vmatpush1.msra.mxu0 0.0
        %2676 = vmatprep.subr.mxu0 0.0
        %2677 = vmatpush1.msra.mxu0 0.0
        %2678 = vmatprep.subr.mxu0 0.0
        %2679 = vmatpush1.msra.mxu0 0.0
        %2680 = vmatprep.subr.mxu0 0.0
        %2681 = vmatpush1.msra.mxu0 0.0
        %2682 = vmatprep.subr.mxu0 0.0
        %2683 = vmatpush1.msra.mxu0 0.0
        %2684 = vmatprep.subr.mxu0 0.0
        %2685 = vmatpush1.msra.mxu0 0.0
        %2686 = vmatprep.subr.mxu0 0.0
        %2687 = vmatpush1.msra.mxu0 0.0
        %2688 = vmatprep.subr.mxu0 0.0
        %2689 = vmatpush1.msra.mxu0 0.0
        %2690 = vmatprep.subr.mxu0 0.0
        %2691 = vmatpush1.msra.mxu0 0.0
        %2692 = vmatprep.subr.mxu0 0.0
        %2693 = vmatpush1.msra.mxu0 0.0
        %2694 = vmatprep.subr.mxu0 0.0
        %2695 = vmatpush1.msra.mxu0 0.0
        %2696 = vmatprep.subr.mxu0 0.0
        %2697 = vmatpush1.msra.mxu0 0.0
        %2698 = vmatprep.subr.mxu0 0.0
        %2699 = vmatpush1.msra.mxu0 0.0
        %2700 = vmatprep.subr.mxu0 0.0
        %2701 = vmatpush1.msra.mxu0 0.0
        %2702 = vmatprep.subr.mxu0 0.0
        %2703 = vmatpush1.msra.mxu0 0.0
        %2704 = vmatprep.mubr.f32.mxu0 0.0
        %2705 = vmatmul.mubr.f32.gmra.mrb[0].mxu0 %v2638
        %v2706 = vpop.f32.mrb[0].mxu0
        %v2707 = vadd.f32 0.0, %v2706
        %v2708 = vpop.f32.mrb[0].mxu0
        %2709 = vdwg.mxu0
        %v2710 = vpack.c.bf16 %v2707, %v2707
        %v2712 = vunpack.c.l.b16 %v2710
        %v2713 = vpack.c.b16 %v2712, %v2712
        %v2714 = vrot.slane %v2713, 6
        %2715 = vrot.lane.b32.xlu0 %v2714, 80
        %v2716 = vpop.permute.xlu0 %2715
        %vm2718 = vcmask 847490
        %2719 = vst.msk [vmem:[#allocation2 + $0xc] sm:$0xc] %vm2718, %v2716
        %v2720 = vld [vmem:[%s367 + $0x7] sm:$0x1]
        %v2721 = vld [vmem:[%s367 + $0xf] sm:$0x1]
        %v2722 = vld [vmem:[%s367 + $0x17] sm:$0x1]
        %v2723 = vld [vmem:[%s367 + $0x1f] sm:$0x1]
        %v2728 = vrot.slane %v2721, 7
        %v2729 = vsel %vm448, %v2728, %v2720
        %v2730 = vrot.slane %v2722, 6
        %v2731 = vsel %vm451, %v2730, %v2729
        %v2732 = vrot.slane %v2723, 5
        %v2733 = vsel %vm454, %v2732, %v2731
        %v2734 = vsel %vm1061, %v2733, 0
        %2736 = vmatprep.subr.mxu0 0.0
        %2737 = vmatpush1.msra.mxu0 %v1046
        %2738 = vmatprep.subr.mxu0 0.0
        %2739 = vmatpush1.msra.mxu0 0.0
        %2740 = vmatprep.subr.mxu0 0.0
        %2741 = vmatpush1.msra.mxu0 0.0
        %2742 = vmatprep.subr.mxu0 0.0
        %2743 = vmatpush1.msra.mxu0 0.0
        %2744 = vmatprep.subr.mxu0 0.0
        %2745 = vmatpush1.msra.mxu0 0.0
        %2746 = vmatprep.subr.mxu0 0.0
        %2747 = vmatpush1.msra.mxu0 0.0
        %2748 = vmatprep.subr.mxu0 0.0
        %2749 = vmatpush1.msra.mxu0 0.0
        %2750 = vmatprep.subr.mxu0 0.0
        %2751 = vmatpush1.msra.mxu0 0.0
        %2752 = vmatprep.subr.mxu0 0.0
        %2753 = vmatpush1.msra.mxu0 0.0
        %2754 = vmatprep.subr.mxu0 0.0
        %2755 = vmatpush1.msra.mxu0 0.0
        %2756 = vmatprep.subr.mxu0 0.0
        %2757 = vmatpush1.msra.mxu0 0.0
        %2758 = vmatprep.subr.mxu0 0.0
        %2759 = vmatpush1.msra.mxu0 0.0
        %2760 = vmatprep.subr.mxu0 0.0
        %2761 = vmatpush1.msra.mxu0 0.0
        %2762 = vmatprep.subr.mxu0 0.0
        %2763 = vmatpush1.msra.mxu0 0.0
        %2764 = vmatprep.subr.mxu0 0.0
        %2765 = vmatpush1.msra.mxu0 0.0
        %2766 = vmatprep.subr.mxu0 0.0
        %2767 = vmatpush1.msra.mxu0 0.0
        %2768 = vmatprep.subr.mxu0 0.0
        %2769 = vmatpush1.msra.mxu0 0.0
        %2770 = vmatprep.subr.mxu0 0.0
        %2771 = vmatpush1.msra.mxu0 0.0
        %2772 = vmatprep.subr.mxu0 0.0
        %2773 = vmatpush1.msra.mxu0 0.0
        %2774 = vmatprep.subr.mxu0 0.0
        %2775 = vmatpush1.msra.mxu0 0.0
        %2776 = vmatprep.subr.mxu0 0.0
        %2777 = vmatpush1.msra.mxu0 0.0
        %2778 = vmatprep.subr.mxu0 0.0
        %2779 = vmatpush1.msra.mxu0 0.0
        %2780 = vmatprep.subr.mxu0 0.0
        %2781 = vmatpush1.msra.mxu0 0.0
        %2782 = vmatprep.subr.mxu0 0.0
        %2783 = vmatpush1.msra.mxu0 0.0
        %2784 = vmatprep.subr.mxu0 0.0
        %2785 = vmatpush1.msra.mxu0 0.0
        %2786 = vmatprep.subr.mxu0 0.0
        %2787 = vmatpush1.msra.mxu0 0.0
        %2788 = vmatprep.subr.mxu0 0.0
        %2789 = vmatpush1.msra.mxu0 0.0
        %2790 = vmatprep.subr.mxu0 0.0
        %2791 = vmatpush1.msra.mxu0 0.0
        %2792 = vmatprep.subr.mxu0 0.0
        %2793 = vmatpush1.msra.mxu0 0.0
        %2794 = vmatprep.subr.mxu0 0.0
        %2795 = vmatpush1.msra.mxu0 0.0
        %2796 = vmatprep.subr.mxu0 0.0
        %2797 = vmatpush1.msra.mxu0 0.0
        %2798 = vmatprep.subr.mxu0 0.0
        %2799 = vmatpush1.msra.mxu0 0.0
        %2800 = vmatprep.mubr.f32.mxu0 0.0
        %2801 = vmatmul.mubr.f32.gmra.mrb[0].mxu0 %v2734
        %v2802 = vpop.f32.mrb[0].mxu0
        %v2803 = vadd.f32 0.0, %v2802
        %v2804 = vpop.f32.mrb[0].mxu0
        %2805 = vdwg.mxu0
        %v2806 = vpack.c.bf16 %v2803, %v2803
        %v2808 = vunpack.c.l.b16 %v2806
        %v2809 = vpack.c.b16 %v2808, %v2808
        %v2810 = vrot.slane %v2809, 6
        %2811 = vrot.lane.b32.xlu0 %v2810, 104
        %v2812 = vpop.permute.xlu0 %2811
        %vm2814 = vcmask 1044290
        %2815 = vst.msk [vmem:[#allocation2 + $0xc] sm:$0xc] %vm2814, %v2812
        %v2816 = vld [vmem:[%s9] sm:$0x7]
        %v2817 = vld [vmem:[#allocation2] sm:$0xff]
        %v2818 = vld [vmem:[#allocation2 + $0x8] sm:$0xff]
        %v2819 = vld [vmem:[#allocation2 + $0x4] sm:$0xff]
        %v2820 = vld [vmem:[#allocation2 + $0xc] sm:$0xf]
        %v2821 = vld [vmem:[#allocation2 + $0x4] sm:$0xff]
        %v2822 = vld [vmem:[#allocation2 + $0xc] sm:$0xff]
        %v2825 = vunpack.c.l.b16 %v2817
        %v2826 = vunpack.c.h.b16 %v2817
        %v2827 = vunpack.c.l.b16 %v2818
        %v2828 = vunpack.c.h.b16 %v2818
        %v2829 = vpack.c.b16 %v2825, %v2825
        %v2830 = vpack.c.b16 %v2826, %v2826
        %v2831 = vpack.c.b16 %v2827, %v2827
        %v2832 = vpack.c.b16 %v2828, %v2828
        %2833 = vrot.lane.b32.xlu0 %v2829, 127
        %v2834 = vpop.permute.xlu0 %2833
        %2835 = vrot.lane.b32.xlu0 %v2830, 127
        %v2836 = vpop.permute.xlu0 %2835
        %2837 = vrot.lane.b32.xlu0 %v2831, 127
        %v2838 = vpop.permute.xlu0 %2837
        %2839 = vrot.lane.b32.xlu0 %v2832, 127
        %v2840 = vpop.permute.xlu0 %2839
        %vm2841 = vcmask 1039360
        %v2842 = vsel %vm2841, %v2834, %v2836
        %v2843 = vsel %vm2841, %v2836, %v2838
        %v2844 = vsel %vm2841, %v2838, %v2840
        %2845 = vrot.lane.b32.xlu0 %v2829, 126
        %v2846 = vpop.permute.xlu0 %2845
        %2847 = vrot.lane.b32.xlu0 %v2830, 126
        %v2848 = vpop.permute.xlu0 %2847
        %2849 = vrot.lane.b32.xlu0 %v2831, 126
        %v2850 = vpop.permute.xlu0 %2849
        %2851 = vrot.lane.b32.xlu0 %v2832, 126
        %v2852 = vpop.permute.xlu0 %2851
        %vm2853 = vcmask 1031168
        %v2854 = vsel %vm2853, %v2846, %v2848
        %v2855 = vsel %vm2853, %v2848, %v2850
        %v2856 = vsel %vm2853, %v2850, %v2852
        %2857 = vrot.lane.b32.xlu0 %v2829, 104
        %v2858 = vpop.permute.xlu0 %2857
        %2859 = vrot.lane.b32.xlu0 %v2830, 104
        %v2860 = vpop.permute.xlu0 %2859
        %2861 = vrot.lane.b32.xlu0 %v2831, 104
        %v2862 = vpop.permute.xlu0 %2861
        %2863 = vrot.lane.b32.xlu0 %v2832, 104
        %v2864 = vpop.permute.xlu0 %2863
        %vm2865 = vcmask 850944
        %v2866 = vsel %vm2865, %v2858, %v2860
        %v2867 = vsel %vm2865, %v2860, %v2862
        %v2868 = vsel %vm2865, %v2862, %v2864
        %v2871 = vunpack.c.l.b16 %v2819
        %v2872 = vunpack.c.h.b16 %v2819
        %v2873 = vunpack.c.l.b16 %v2820
        %v2874 = vpack.c.b16 %v2871, %v2871
        %v2875 = vpack.c.b16 %v2872, %v2872
        %v2876 = vpack.c.b16 %v2873, %v2873
        %2877 = vrot.lane.b32.xlu0 %v2874, 103
        %v2878 = vpop.permute.xlu0 %2877
        %2879 = vrot.lane.b32.xlu0 %v2875, 103
        %v2880 = vpop.permute.xlu0 %2879
        %2881 = vrot.lane.b32.xlu0 %v2876, 103
        %v2882 = vpop.permute.xlu0 %2881
        %vm2883 = vcmask 842752
        %v2884 = vsel %vm2883, %v2878, %v2880
        %v2885 = vsel %vm2883, %v2880, %v2882
        %v2888 = vunpack.c.l.b16 %v2821
        %v2889 = vunpack.c.h.b16 %v2821
        %v2890 = vunpack.c.l.b16 %v2822
        %v2891 = vunpack.c.h.b16 %v2822
        %v2892 = vpack.c.b16 %v2888, %v2888
        %v2893 = vpack.c.b16 %v2889, %v2889
        %v2894 = vpack.c.b16 %v2890, %v2890
        %v2895 = vpack.c.b16 %v2891, %v2891
        %2896 = vrot.lane.b32.xlu0 %v2892, 102
        %v2897 = vpop.permute.xlu0 %2896
        %2898 = vrot.lane.b32.xlu0 %v2893, 102
        %v2899 = vpop.permute.xlu0 %2898
        %2900 = vrot.lane.b32.xlu0 %v2894, 102
        %v2901 = vpop.permute.xlu0 %2900
        %2902 = vrot.lane.b32.xlu0 %v2895, 102
        %v2903 = vpop.permute.xlu0 %2902
        %vm2904 = vcmask 834560
        %v2905 = vsel %vm2904, %v2897, %v2899
        %v2906 = vsel %vm2904, %v2899, %v2901
        %v2907 = vsel %vm2904, %v2901, %v2903
        %2908 = vrot.lane.b32.xlu0 %v2892, 80
        %v2909 = vpop.permute.xlu0 %2908
        %2910 = vrot.lane.b32.xlu0 %v2893, 80
        %v2911 = vpop.permute.xlu0 %2910
        %2912 = vrot.lane.b32.xlu0 %v2894, 80
        %v2913 = vpop.permute.xlu0 %2912
        %2914 = vrot.lane.b32.xlu0 %v2895, 80
        %v2915 = vpop.permute.xlu0 %2914
        %vm2916 = vcmask 654336
        %v2917 = vsel %vm2916, %v2909, %v2911
        %v2918 = vsel %vm2916, %v2911, %v2913
        %v2919 = vsel %vm2916, %v2913, %v2915
        %2920 = vrot.lane.b32.xlu0 %v2892, 79
        %v2921 = vpop.permute.xlu0 %2920
        %2922 = vrot.lane.b32.xlu0 %v2893, 79
        %v2923 = vpop.permute.xlu0 %2922
        %2924 = vrot.lane.b32.xlu0 %v2894, 79
        %v2925 = vpop.permute.xlu0 %2924
        %2926 = vrot.lane.b32.xlu0 %v2895, 79
        %v2927 = vpop.permute.xlu0 %2926
        %vm2928 = vcmask 646144
        %v2929 = vsel %vm2928, %v2921, %v2923
        %v2930 = vsel %vm2928, %v2923, %v2925
        %v2931 = vsel %vm2928, %v2925, %v2927
        %2932 = vrot.lane.b32.xlu0 %v2892, 78
        %v2933 = vpop.permute.xlu0 %2932
        %2934 = vrot.lane.b32.xlu0 %v2893, 78
        %v2935 = vpop.permute.xlu0 %2934
        %2936 = vrot.lane.b32.xlu0 %v2894, 78
        %v2937 = vpop.permute.xlu0 %2936
        %2938 = vrot.lane.b32.xlu0 %v2895, 78
        %v2939 = vpop.permute.xlu0 %2938
        %vm2940 = vcmask 637952
        %v2941 = vsel %vm2940, %v2933, %v2935
        %v2942 = vsel %vm2940, %v2935, %v2937
        %v2943 = vsel %vm2940, %v2937, %v2939
        %vm2944 = vcmask 1043456
        %v2947 = vsel %vm2944, %v2829, %v2842
        %v2950 = vsel %vm2944, %v2830, %v2843
        %v2953 = vsel %vm2944, %v2831, %v2844
        %v2956 = vsel %vm2944, %v2832, %v2840
        %v2959 = vsel %vm2944, %v2854, %v2866
        %v2962 = vsel %vm2944, %v2855, %v2867
        %v2965 = vsel %vm2944, %v2856, %v2868
        %v2968 = vsel %vm2944, %v2852, %v2864
        %v2971 = vsel %vm2944, %v2878, %v2897
        %v2974 = vsel %vm2944, %v2884, %v2905
        %v2977 = vsel %vm2944, %v2885, %v2906
        %v2980 = vsel %vm2944, %v2882, %v2907
        %v2983 = vsel %vm2944, %v2909, %v2921
        %v2986 = vsel %vm2944, %v2917, %v2929
        %v2989 = vsel %vm2944, %v2918, %v2930
        %v2992 = vsel %vm2944, %v2919, %v2931
        %v2993 = vld [vmem:[%s3] sm:$0x3]
        %3010 = vrot.lane.b32.xlu0 %v2947, 25
        %v3011 = vpop.permute.xlu0 %3010
        %3012 = vrot.lane.b32.xlu0 %v2950, 25
        %v3013 = vpop.permute.xlu0 %3012
        %3014 = vrot.lane.b32.xlu0 %v2953, 25
        %v3015 = vpop.permute.xlu0 %3014
        %3016 = vrot.lane.b32.xlu0 %v2956, 25
        %v3017 = vpop.permute.xlu0 %3016
        %3018 = vrot.lane.b32.xlu0 %v2959, 25
        %v3019 = vpop.permute.xlu0 %3018
        %3020 = vrot.lane.b32.xlu0 %v2962, 25
        %v3021 = vpop.permute.xlu0 %3020
        %3022 = vrot.lane.b32.xlu0 %v2965, 25
        %v3023 = vpop.permute.xlu0 %3022
        %3024 = vrot.lane.b32.xlu0 %v2968, 25
        %v3025 = vpop.permute.xlu0 %3024
        %3026 = vrot.lane.b32.xlu0 %v2971, 25
        %v3027 = vpop.permute.xlu0 %3026
        %3028 = vrot.lane.b32.xlu0 %v2974, 25
        %v3029 = vpop.permute.xlu0 %3028
        %3030 = vrot.lane.b32.xlu0 %v2977, 25
        %v3031 = vpop.permute.xlu0 %3030
        %3032 = vrot.lane.b32.xlu0 %v2980, 25
        %v3033 = vpop.permute.xlu0 %3032
        %3034 = vrot.lane.b32.xlu0 %v2983, 25
        %v3035 = vpop.permute.xlu0 %3034
        %3036 = vrot.lane.b32.xlu0 %v2986, 25
        %v3037 = vpop.permute.xlu0 %3036
        %3038 = vrot.lane.b32.xlu0 %v2989, 25
        %v3039 = vpop.permute.xlu0 %3038
        %3040 = vrot.lane.b32.xlu0 %v2992, 25
        %v3041 = vpop.permute.xlu0 %3040
        %3042 = vrot.lane.b32.xlu0 %v2933, 25
        %v3043 = vpop.permute.xlu0 %3042
        %3044 = vrot.lane.b32.xlu0 %v2941, 25
        %v3045 = vpop.permute.xlu0 %3044
        %3046 = vrot.lane.b32.xlu0 %v2942, 25
        %v3047 = vpop.permute.xlu0 %3046
        %3048 = vrot.lane.b32.xlu0 %v2943, 25
        %v3049 = vpop.permute.xlu0 %3048
        %vm3050 = vcmask 203776
        %v3051 = vsel %vm3050, %v3011, %v3013
        %v3052 = vsel %vm3050, %v3013, %v3015
        %v3053 = vsel %vm3050, %v3015, %v3017
        %v3054 = vsel %vm3050, %v3019, %v3021
        %v3055 = vsel %vm3050, %v3021, %v3023
        %v3056 = vsel %vm3050, %v3023, %v3025
        %v3057 = vsel %vm3050, %v3027, %v3029
        %v3058 = vsel %vm3050, %v3029, %v3031
        %v3059 = vsel %vm3050, %v3031, %v3033
        %v3060 = vsel %vm3050, %v3035, %v3037
        %v3061 = vsel %vm3050, %v3037, %v3039
        %v3062 = vsel %vm3050, %v3039, %v3041
        %v3063 = vsel %vm3050, %v3043, %v3045
        %v3064 = vsel %vm3050, %v3045, %v3047
        %v3065 = vsel %vm3050, %v3047, %v3049
        %vm3078 = vcmask 588800
        %v3080 = vsel %vm3078, %v2993, 0
        %v3083 = vsel %vm2944, %v3063, 0
        %v3086 = vsel %vm2944, %v3064, 0
        %v3089 = vsel %vm2944, %v3065, 0
        %3091 = vmatprep.subr.bf16.mxu0 %v3052
        %3092 = vmatpush1.bf16.msra.mxu0 %v3051
        %3093 = vmatprep.subr.bf16.mxu0 %v3055
        %3094 = vmatpush1.bf16.msra.mxu0 %v3054
        %3095 = vmatprep.subr.bf16.mxu0 %v3058
        %3096 = vmatpush1.bf16.msra.mxu0 %v3057
        %3097 = vmatprep.subr.bf16.mxu0 %v3061
        %3098 = vmatpush1.bf16.msra.mxu0 %v3060
        %3099 = vmatprep.subr.bf16.mxu0 %v3086
        %3100 = vmatpush1.bf16.msra.mxu0 %v3083
        %3101 = vmatprep.subr.bf16.mxu0 0
        %3102 = vmatpush1.bf16.msra.mxu0 0
        %3103 = vmatprep.subr.bf16.mxu0 0
        %3104 = vmatpush1.bf16.msra.mxu0 0
        %3105 = vmatprep.subr.bf16.mxu0 0
        %3106 = vmatpush1.bf16.msra.mxu0 0
        %3107 = vmatprep.subr.bf16.mxu0 0
        %3108 = vmatpush1.bf16.msra.mxu0 0
        %3109 = vmatprep.subr.bf16.mxu0 0
        %3110 = vmatpush1.bf16.msra.mxu0 0
        %3111 = vmatprep.subr.bf16.mxu0 0
        %3112 = vmatpush1.bf16.msra.mxu0 0
        %3113 = vmatprep.subr.bf16.mxu0 0
        %3114 = vmatpush1.bf16.msra.mxu0 0
        %3115 = vmatprep.subr.bf16.mxu0 0
        %3116 = vmatpush1.bf16.msra.mxu0 0
        %3117 = vmatprep.subr.bf16.mxu0 0
        %3118 = vmatpush1.bf16.msra.mxu0 0
        %3119 = vmatprep.subr.bf16.mxu0 0
        %3120 = vmatpush1.bf16.msra.mxu0 0
        %3121 = vmatprep.subr.bf16.mxu0 0
        %3122 = vmatpush1.bf16.msra.mxu0 0
        %3123 = vmatprep.mubr.bf16.mxu0 0
        %3124 = vmatmul.mubr.bf16.gmra.mrb[0].mxu0 %v3080
        %v3125 = vpop.f32.mrb[0].mxu0
        %v3126 = vadd.f32 0.0, %v3125
        %v3127 = vpop.f32.mrb[0].mxu0
        %v3128 = vadd.f32 0.0, %v3127
        %v3129 = vpop.f32.mrb[0].mxu0
        %v3130 = vpop.f32.mrb[0].mxu0
        %3131 = vdwg.mxu0
        %3132 = vmatprep.subr.bf16.mxu0 0
        %3133 = vmatpush1.bf16.msra.mxu0 %v3053
        %3134 = vmatprep.subr.bf16.mxu0 0
        %3135 = vmatpush1.bf16.msra.mxu0 %v3056
        %3136 = vmatprep.subr.bf16.mxu0 0
        %3137 = vmatpush1.bf16.msra.mxu0 %v3059
        %3138 = vmatprep.subr.bf16.mxu0 0
        %3139 = vmatpush1.bf16.msra.mxu0 %v3062
        %3140 = vmatprep.subr.bf16.mxu0 0
        %3141 = vmatpush1.bf16.msra.mxu0 %v3089
        %3142 = vmatprep.subr.bf16.mxu0 0
        %3143 = vmatpush1.bf16.msra.mxu0 0
        %3144 = vmatprep.subr.bf16.mxu0 0
        %3145 = vmatpush1.bf16.msra.mxu0 0
        %3146 = vmatprep.subr.bf16.mxu0 0
        %3147 = vmatpush1.bf16.msra.mxu0 0
        %3148 = vmatprep.subr.bf16.mxu0 0
        %3149 = vmatpush1.bf16.msra.mxu0 0
        %3150 = vmatprep.subr.bf16.mxu0 0
        %3151 = vmatpush1.bf16.msra.mxu0 0
        %3152 = vmatprep.subr.bf16.mxu0 0
        %3153 = vmatpush1.bf16.msra.mxu0 0
        %3154 = vmatprep.subr.bf16.mxu0 0
        %3155 = vmatpush1.bf16.msra.mxu0 0
        %3156 = vmatprep.subr.bf16.mxu0 0
        %3157 = vmatpush1.bf16.msra.mxu0 0
        %3158 = vmatprep.subr.bf16.mxu0 0
        %3159 = vmatpush1.bf16.msra.mxu0 0
        %3160 = vmatprep.subr.bf16.mxu0 0
        %3161 = vmatpush1.bf16.msra.mxu0 0
        %3162 = vmatprep.subr.bf16.mxu0 0
        %3163 = vmatpush1.bf16.msra.mxu0 0
        %3164 = vmatprep.mubr.bf16.mxu0 0
        %3165 = vmatmul.mubr.bf16.gmra.mrb[0].mxu0 %v3080
        %v3166 = vpop.f32.mrb[0].mxu0
        %v3167 = vadd.f32 0.0, %v3166
        %v3168 = vpop.f32.mrb[0].mxu0
        %v3169 = vpop.f32.mrb[0].mxu0
        %v3170 = vpop.f32.mrb[0].mxu0
        %3171 = vdwg.mxu0
        %v3172 = vld [vmem:[%s4] sm:$0xf]
        %3174 = vset.pattern.permute.xlu0 0
        %3175 = vperm.xlu0 %3174, %v3172
        %v3176 = vpop.permute.xlu0 %3175
        %v3178 = vmul.f32 %v3126, %v3176
        %v3179 = vmul.f32 %v3128, %v3176
        %v3180 = vmul.f32 %v3167, %v3176
        %v3181 = vld [vmem:[%s5] sm:$0xf]
        %3183 = vset.pattern.permute.xlu0 0
        %3184 = vperm.xlu0 %3183, %v3181
        %v3185 = vpop.permute.xlu0 %3184
        %v3187 = vadd.f32 %v3178, %v3185
        %v3188 = vadd.f32 %v3179, %v3185
        %v3189 = vadd.f32 %v3180, %v3185
        %v3190 = vmax.f32 %v3187, 0.0
        %v3191 = vmax.f32 %v3188, 0.0
        %v3192 = vmax.f32 %v3189, 0.0
        %v3194 = vlaneseq
        %v3195 = vshrl.u32 %v3194, 7
        %v3196 = vsub.s32 0, %v3195
        %v3197 = vrot.slane %v2816, %v3196
        %v3198 = vlaneseq
        %v3199 = vshrl.u32 %v3198, 7
        %v3200 = vsub.s32 1, %v3199
        %v3201 = vrot.slane %v2816, %v3200
        %v3202 = vlaneseq
        %v3203 = vshrl.u32 %v3202, 7
        %v3204 = vsub.s32 2, %v3203
        %v3205 = vrot.slane %v2816, %v3204
        %v3209 = vmul.f32 %v3190, %v3197
        %v3210 = vmul.f32 %v3191, %v3201
        %v3211 = vmul.f32 %v3192, %v3205
        %v3212 = vpack.c.bf16 %v3209, %v3209
        %v3213 = vpack.c.bf16 %v3210, %v3210
        %v3214 = vpack.c.bf16 %v3211, %v3211
        %v3218 = vunpack.c.l.b16 %v3212
        %v3219 = vunpack.c.l.b16 %v3213
        %v3220 = vunpack.c.l.b16 %v3214
        %v3221 = vpack.c.b16 %v3219, %v3218
        %v3222 = vpack.c.b16 %v3220, %v3220
        %3225 = vst [vmem:[#allocation2 + $0x4] sm:$0x33] %v3221
        %3226 = vst [vmem:[#allocation2 + $0xc] sm:$0x3] %v3222
        %v3227 = vld [vmem:[#allocation2] sm:$0x33]
        %v3228 = vld [vmem:[#allocation2 + $0x8] sm:$0x33]
        %v3229 = vld [vmem:[#allocation2 + $0x4] sm:$0x33]
        %v3230 = vld [vmem:[#allocation2 + $0xc] sm:$0x3]
        %v3231 = vld [vmem:[#allocation2 + $0x4] sm:$0x33]
        %v3232 = vld [vmem:[#allocation2 + $0xc] sm:$0x33]
        %v3235 = vunpack.c.l.b16 %v3227
        %v3236 = vunpack.c.h.b16 %v3227
        %v3237 = vunpack.c.l.b16 %v3228
        %v3238 = vunpack.c.h.b16 %v3228
        %v3239 = vpack.c.b16 %v3235, %v3235
        %v3240 = vpack.c.b16 %v3236, %v3236
        %v3241 = vpack.c.b16 %v3237, %v3237
        %v3242 = vpack.c.b16 %v3238, %v3238
        %v3243 = vrot.slane %v3239, 6
        %v3244 = vrot.slane %v3240, 6
        %v3245 = vrot.slane %v3241, 6
        %v3246 = vrot.slane %v3242, 6
        %3247 = vrot.lane.b32.xlu0 %v3243, 127
        %v3248 = vpop.permute.xlu0 %3247
        %3249 = vrot.lane.b32.xlu0 %v3244, 127
        %v3250 = vpop.permute.xlu0 %3249
        %3251 = vrot.lane.b32.xlu0 %v3245, 127
        %v3252 = vpop.permute.xlu0 %3251
        %3253 = vrot.lane.b32.xlu0 %v3246, 127
        %v3254 = vpop.permute.xlu0 %3253
        %v3255 = vsel %vm2841, %v3248, %v3250
        %v3256 = vsel %vm2841, %v3250, %v3252
        %v3257 = vsel %vm2841, %v3252, %v3254
        %3258 = vrot.lane.b32.xlu0 %v3239, 126
        %v3259 = vpop.permute.xlu0 %3258
        %3260 = vrot.lane.b32.xlu0 %v3240, 126
        %v3261 = vpop.permute.xlu0 %3260
        %3262 = vrot.lane.b32.xlu0 %v3241, 126
        %v3263 = vpop.permute.xlu0 %3262
        %3264 = vrot.lane.b32.xlu0 %v3242, 126
        %v3265 = vpop.permute.xlu0 %3264
        %v3266 = vsel %vm2853, %v3259, %v3261
        %v3267 = vsel %vm2853, %v3261, %v3263
        %v3268 = vsel %vm2853, %v3263, %v3265
        %v3269 = vrot.slane %v3239, 2
        %v3270 = vrot.slane %v3240, 2
        %v3271 = vrot.slane %v3241, 2
        %v3272 = vrot.slane %v3242, 2
        %3273 = vrot.lane.b32.xlu0 %v3269, 104
        %v3274 = vpop.permute.xlu0 %3273
        %3275 = vrot.lane.b32.xlu0 %v3270, 104
        %v3276 = vpop.permute.xlu0 %3275
        %3277 = vrot.lane.b32.xlu0 %v3271, 104
        %v3278 = vpop.permute.xlu0 %3277
        %3279 = vrot.lane.b32.xlu0 %v3272, 104
        %v3280 = vpop.permute.xlu0 %3279
        %v3281 = vsel %vm2865, %v3274, %v3276
        %v3282 = vsel %vm2865, %v3276, %v3278
        %v3283 = vsel %vm2865, %v3278, %v3280
        %v3286 = vunpack.c.l.b16 %v3229
        %v3287 = vunpack.c.h.b16 %v3229
        %v3288 = vunpack.c.l.b16 %v3230
        %v3289 = vpack.c.b16 %v3286, %v3286
        %v3290 = vpack.c.b16 %v3287, %v3287
        %v3291 = vpack.c.b16 %v3288, %v3288
        %3292 = vrot.lane.b32.xlu0 %v3289, 103
        %v3293 = vpop.permute.xlu0 %3292
        %3294 = vrot.lane.b32.xlu0 %v3290, 103
        %v3295 = vpop.permute.xlu0 %3294
        %3296 = vrot.lane.b32.xlu0 %v3291, 103
        %v3297 = vpop.permute.xlu0 %3296
        %v3298 = vsel %vm2883, %v3293, %v3295
        %v3299 = vsel %vm2883, %v3295, %v3297
        %v3302 = vunpack.c.l.b16 %v3231
        %v3303 = vunpack.c.h.b16 %v3231
        %v3304 = vunpack.c.l.b16 %v3232
        %v3305 = vunpack.c.h.b16 %v3232
        %v3306 = vpack.c.b16 %v3302, %v3302
        %v3307 = vpack.c.b16 %v3303, %v3303
        %v3308 = vpack.c.b16 %v3304, %v3304
        %v3309 = vpack.c.b16 %v3305, %v3305
        %v3310 = vrot.slane %v3306, 6
        %v3311 = vrot.slane %v3307, 6
        %v3312 = vrot.slane %v3308, 6
        %v3313 = vrot.slane %v3309, 6
        %3314 = vrot.lane.b32.xlu0 %v3310, 102
        %v3315 = vpop.permute.xlu0 %3314
        %3316 = vrot.lane.b32.xlu0 %v3311, 102
        %v3317 = vpop.permute.xlu0 %3316
        %3318 = vrot.lane.b32.xlu0 %v3312, 102
        %v3319 = vpop.permute.xlu0 %3318
        %3320 = vrot.lane.b32.xlu0 %v3313, 102
        %v3321 = vpop.permute.xlu0 %3320
        %v3322 = vsel %vm2904, %v3315, %v3317
        %v3323 = vsel %vm2904, %v3317, %v3319
        %v3324 = vsel %vm2904, %v3319, %v3321
        %3325 = vrot.lane.b32.xlu0 %v3306, 80
        %v3326 = vpop.permute.xlu0 %3325
        %3327 = vrot.lane.b32.xlu0 %v3307, 80
        %v3328 = vpop.permute.xlu0 %3327
        %3329 = vrot.lane.b32.xlu0 %v3308, 80
        %v3330 = vpop.permute.xlu0 %3329
        %3331 = vrot.lane.b32.xlu0 %v3309, 80
        %v3332 = vpop.permute.xlu0 %3331
        %v3333 = vsel %vm2916, %v3326, %v3328
        %v3334 = vsel %vm2916, %v3328, %v3330
        %v3335 = vsel %vm2916, %v3330, %v3332
        %v3336 = vrot.slane %v3306, 2
        %v3337 = vrot.slane %v3307, 2
        %v3338 = vrot.slane %v3308, 2
        %v3339 = vrot.slane %v3309, 2
        %3340 = vrot.lane.b32.xlu0 %v3336, 79
        %v3341 = vpop.permute.xlu0 %3340
        %3342 = vrot.lane.b32.xlu0 %v3337, 79
        %v3343 = vpop.permute.xlu0 %3342
        %3344 = vrot.lane.b32.xlu0 %v3338, 79
        %v3345 = vpop.permute.xlu0 %3344
        %3346 = vrot.lane.b32.xlu0 %v3339, 79
        %v3347 = vpop.permute.xlu0 %3346
        %v3348 = vsel %vm2928, %v3341, %v3343
        %v3349 = vsel %vm2928, %v3343, %v3345
        %v3350 = vsel %vm2928, %v3345, %v3347
        %3351 = vrot.lane.b32.xlu0 %v3306, 78
        %v3352 = vpop.permute.xlu0 %3351
        %3353 = vrot.lane.b32.xlu0 %v3307, 78
        %v3354 = vpop.permute.xlu0 %3353
        %3355 = vrot.lane.b32.xlu0 %v3308, 78
        %v3356 = vpop.permute.xlu0 %3355
        %3357 = vrot.lane.b32.xlu0 %v3309, 78
        %v3358 = vpop.permute.xlu0 %3357
        %v3359 = vsel %vm2940, %v3352, %v3354
        %v3360 = vsel %vm2940, %v3354, %v3356
        %v3361 = vsel %vm2940, %v3356, %v3358
        %vm3362 = vcmask 1041408
        %v3365 = vsel %vm3362, %v3239, %v3255
        %v3368 = vsel %vm3362, %v3240, %v3256
        %v3371 = vsel %vm3362, %v3241, %v3257
        %v3374 = vsel %vm3362, %v3242, %v3254
        %v3376 = vsel %vm2944, %v3365, %v3266
        %v3378 = vsel %vm2944, %v3368, %v3267
        %v3380 = vsel %vm2944, %v3371, %v3268
        %v3382 = vsel %vm2944, %v3374, %v3265
        %vm3383 = vcmask 1045504
        %v3385 = vsel %vm3383, %v3376, %v3281
        %v3387 = vsel %vm3383, %v3378, %v3282
        %v3389 = vsel %vm3383, %v3380, %v3283
        %v3391 = vsel %vm3383, %v3382, %v3280
        %v3394 = vsel %vm3362, %v3293, %v3315
        %v3397 = vsel %vm3362, %v3298, %v3322
        %v3400 = vsel %vm3362, %v3299, %v3323
        %v3403 = vsel %vm3362, %v3297, %v3324
        %v3405 = vsel %vm2944, %v3394, %v3326
        %v3407 = vsel %vm2944, %v3397, %v3333
        %v3409 = vsel %vm2944, %v3400, %v3334
        %v3411 = vsel %vm2944, %v3403, %v3335
        %v3413 = vsel %vm3383, %v3405, %v3341
        %v3415 = vsel %vm3383, %v3407, %v3348
        %v3417 = vsel %vm3383, %v3409, %v3349
        %v3419 = vsel %vm3383, %v3411, %v3350
        %v3420 = vld [vmem:[%s6] sm:$0xf]
        %3429 = vrot.lane.b32.xlu0 %v3385, 25
        %v3430 = vpop.permute.xlu0 %3429
        %3431 = vrot.lane.b32.xlu0 %v3387, 25
        %v3432 = vpop.permute.xlu0 %3431
        %3433 = vrot.lane.b32.xlu0 %v3389, 25
        %v3434 = vpop.permute.xlu0 %3433
        %3435 = vrot.lane.b32.xlu0 %v3391, 25
        %v3436 = vpop.permute.xlu0 %3435
        %3437 = vrot.lane.b32.xlu0 %v3413, 25
        %v3438 = vpop.permute.xlu0 %3437
        %3439 = vrot.lane.b32.xlu0 %v3415, 25
        %v3440 = vpop.permute.xlu0 %3439
        %3441 = vrot.lane.b32.xlu0 %v3417, 25
        %v3442 = vpop.permute.xlu0 %3441
        %3443 = vrot.lane.b32.xlu0 %v3419, 25
        %v3444 = vpop.permute.xlu0 %3443
        %3445 = vrot.lane.b32.xlu0 %v3352, 25
        %v3446 = vpop.permute.xlu0 %3445
        %3447 = vrot.lane.b32.xlu0 %v3359, 25
        %v3448 = vpop.permute.xlu0 %3447
        %3449 = vrot.lane.b32.xlu0 %v3360, 25
        %v3450 = vpop.permute.xlu0 %3449
        %3451 = vrot.lane.b32.xlu0 %v3361, 25
        %v3452 = vpop.permute.xlu0 %3451
        %v3453 = vsel %vm3050, %v3430, %v3432
        %v3454 = vsel %vm3050, %v3432, %v3434
        %v3455 = vsel %vm3050, %v3434, %v3436
        %v3456 = vsel %vm3050, %v3438, %v3440
        %v3457 = vsel %vm3050, %v3440, %v3442
        %v3458 = vsel %vm3050, %v3442, %v3444
        %v3459 = vsel %vm3050, %v3446, %v3448
        %v3460 = vsel %vm3050, %v3448, %v3450
        %v3461 = vsel %vm3050, %v3450, %v3452
        %vm3468 = vcmask 293888
        %v3470 = vsel %vm3468, %v3420, 0
        %v3473 = vsel %vm3362, %v3459, 0
        %v3476 = vsel %vm3362, %v3460, 0
        %v3479 = vsel %vm3362, %v3461, 0
        %3481 = vmatprep.subr.bf16.mxu0 %v3454
        %3482 = vmatpush1.bf16.msra.mxu0 %v3453
        %3483 = vmatprep.subr.bf16.mxu0 %v3457
        %3484 = vmatpush1.bf16.msra.mxu0 %v3456
        %3485 = vmatprep.subr.bf16.mxu0 %v3476
        %3486 = vmatpush1.bf16.msra.mxu0 %v3473
        %3487 = vmatprep.subr.bf16.mxu0 0
        %3488 = vmatpush1.bf16.msra.mxu0 0
        %3489 = vmatprep.subr.bf16.mxu0 0
        %3490 = vmatpush1.bf16.msra.mxu0 0
        %3491 = vmatprep.subr.bf16.mxu0 0
        %3492 = vmatpush1.bf16.msra.mxu0 0
        %3493 = vmatprep.subr.bf16.mxu0 0
        %3494 = vmatpush1.bf16.msra.mxu0 0
        %3495 = vmatprep.subr.bf16.mxu0 0
        %3496 = vmatpush1.bf16.msra.mxu0 0
        %3497 = vmatprep.subr.bf16.mxu0 0
        %3498 = vmatpush1.bf16.msra.mxu0 0
        %3499 = vmatprep.subr.bf16.mxu0 0
        %3500 = vmatpush1.bf16.msra.mxu0 0
        %3501 = vmatprep.subr.bf16.mxu0 0
        %3502 = vmatpush1.bf16.msra.mxu0 0
        %3503 = vmatprep.subr.bf16.mxu0 0
        %3504 = vmatpush1.bf16.msra.mxu0 0
        %3505 = vmatprep.subr.bf16.mxu0 0
        %3506 = vmatpush1.bf16.msra.mxu0 0
        %3507 = vmatprep.subr.bf16.mxu0 0
        %3508 = vmatpush1.bf16.msra.mxu0 0
        %3509 = vmatprep.subr.bf16.mxu0 0
        %3510 = vmatpush1.bf16.msra.mxu0 0
        %3511 = vmatprep.subr.bf16.mxu0 0
        %3512 = vmatpush1.bf16.msra.mxu0 0
        %3513 = vmatprep.mubr.bf16.mxu0 0
        %3514 = vmatmul.mubr.bf16.gmra.mrb[0].mxu0 %v3470
        %v3515 = vpop.f32.mrb[0].mxu0
        %v3516 = vadd.f32 0.0, %v3515
        %v3517 = vpop.f32.mrb[0].mxu0
        %v3518 = vadd.f32 0.0, %v3517
        %v3519 = vpop.f32.mrb[0].mxu0
        %v3520 = vpop.f32.mrb[0].mxu0
        %3521 = vdwg.mxu0
        %3522 = vmatprep.subr.bf16.mxu0 0
        %3523 = vmatpush1.bf16.msra.mxu0 %v3455
        %3524 = vmatprep.subr.bf16.mxu0 0
        %3525 = vmatpush1.bf16.msra.mxu0 %v3458
        %3526 = vmatprep.subr.bf16.mxu0 0
        %3527 = vmatpush1.bf16.msra.mxu0 %v3479
        %3528 = vmatprep.subr.bf16.mxu0 0
        %3529 = vmatpush1.bf16.msra.mxu0 0
        %3530 = vmatprep.subr.bf16.mxu0 0
        %3531 = vmatpush1.bf16.msra.mxu0 0
        %3532 = vmatprep.subr.bf16.mxu0 0
        %3533 = vmatpush1.bf16.msra.mxu0 0
        %3534 = vmatprep.subr.bf16.mxu0 0
        %3535 = vmatpush1.bf16.msra.mxu0 0
        %3536 = vmatprep.subr.bf16.mxu0 0
        %3537 = vmatpush1.bf16.msra.mxu0 0
        %3538 = vmatprep.subr.bf16.mxu0 0
        %3539 = vmatpush1.bf16.msra.mxu0 0
        %3540 = vmatprep.subr.bf16.mxu0 0
        %3541 = vmatpush1.bf16.msra.mxu0 0
        %3542 = vmatprep.subr.bf16.mxu0 0
        %3543 = vmatpush1.bf16.msra.mxu0 0
        %3544 = vmatprep.subr.bf16.mxu0 0
        %3545 = vmatpush1.bf16.msra.mxu0 0
        %3546 = vmatprep.subr.bf16.mxu0 0
        %3547 = vmatpush1.bf16.msra.mxu0 0
        %3548 = vmatprep.subr.bf16.mxu0 0
        %3549 = vmatpush1.bf16.msra.mxu0 0
        %3550 = vmatprep.subr.bf16.mxu0 0
        %3551 = vmatpush1.bf16.msra.mxu0 0
        %3552 = vmatprep.subr.bf16.mxu0 0
        %3553 = vmatpush1.bf16.msra.mxu0 0
        %3554 = vmatprep.mubr.bf16.mxu0 0
        %3555 = vmatmul.mubr.bf16.gmra.mrb[0].mxu0 %v3470
        %v3556 = vpop.f32.mrb[0].mxu0
        %v3557 = vadd.f32 0.0, %v3556
        %v3558 = vpop.f32.mrb[0].mxu0
        %v3559 = vpop.f32.mrb[0].mxu0
        %v3560 = vpop.f32.mrb[0].mxu0
        %3561 = vdwg.mxu0
        %v3562 = vld [vmem:[%s7] sm:$0xff]
        %3564 = vset.pattern.permute.xlu0 0
        %3565 = vperm.xlu0 %3564, %v3562
        %v3566 = vpop.permute.xlu0 %3565
        %v3568 = vmul.f32 %v3516, %v3566
        %v3569 = vmul.f32 %v3518, %v3566
        %v3570 = vmul.f32 %v3557, %v3566
        %v3571 = vld [vmem:[%s8] sm:$0xff]
        %3573 = vset.pattern.permute.xlu0 0
        %3574 = vperm.xlu0 %3573, %v3571
        %v3575 = vpop.permute.xlu0 %3574
        %v3577 = vadd.f32 %v3568, %v3575
        %v3578 = vadd.f32 %v3569, %v3575
        %v3579 = vadd.f32 %v3570, %v3575
        %v3580 = vmax.f32 %v3577, 0.0
        %v3581 = vmax.f32 %v3578, 0.0
        %v3582 = vmax.f32 %v3579, 0.0
        %v3584 = vcombine.high %v3580, %v3580
        %v3586 = vunpack.c.l.s4 1966171168
        %v3587 = vunpack.c.0.s8 %v3586
        %v3588 = vlaneseq
        %v3589 = vshrl.u32 %v3588, 7
        %v3590 = vsub.s32 %v3587, %v3589
        %v3591 = vrot.slane %v3580, %v3590
        %v3593 = vunpack.c.l.s4 1966171168
        %v3594 = vunpack.c.0.s8 %v3593
        %v3595 = vlaneseq
        %v3596 = vshrl.u32 %v3595, 7
        %v3597 = vsub.s32 %v3594, %v3596
        %v3598 = vrot.slane %v3584, %v3597
        %v3599 = vcombine.high %v3591, %v3591
        %v3600 = vcombine.high %v3598, %v3598
        %v3602 = vunpack.c.l.s4 1966171168
        %v3603 = vunpack.c.0.s8 %v3602
        %v3604 = vlaneseq
        %v3605 = vshrl.u32 %v3604, 7
        %v3606 = vsub.s32 %v3603, %v3605
        %v3607 = vrot.slane %v3591, %v3606
        %v3609 = vunpack.c.l.s4 1966171168
        %v3610 = vunpack.c.0.s8 %v3609
        %v3611 = vlaneseq
        %v3612 = vshrl.u32 %v3611, 7
        %v3613 = vsub.s32 %v3610, %v3612
        %v3614 = vrot.slane %v3598, %v3613
        %v3616 = vunpack.c.l.s4 1966171168
        %v3617 = vunpack.c.0.s8 %v3616
        %v3618 = vlaneseq
        %v3619 = vshrl.u32 %v3618, 7
        %v3620 = vsub.s32 %v3617, %v3619
        %v3621 = vrot.slane %v3599, %v3620
        %v3623 = vunpack.c.l.s4 1966171168
        %v3624 = vunpack.c.0.s8 %v3623
        %v3625 = vlaneseq
        %v3626 = vshrl.u32 %v3625, 7
        %v3627 = vsub.s32 %v3624, %v3626
        %v3628 = vrot.slane %v3600, %v3627
        %v3629 = vcombine.high %v3607, %v3607
        %v3630 = vcombine.high %v3614, %v3614
        %v3631 = vcombine.high %v3621, %v3621
        %v3632 = vcombine.high %v3628, %v3628
        %v3633 = vlaneseq
        %v3634 = vshrl.u32 %v3633, 7
        %v3635 = vsub.s32 0, %v3634
        %v3636 = vrot.slane %v3607, %v3635
        %v3637 = vlaneseq
        %v3638 = vshrl.u32 %v3637, 7
        %v3639 = vsub.s32 0, %v3638
        %v3640 = vrot.slane %v3621, %v3639
        %v3641 = vlaneseq
        %v3642 = vshrl.u32 %v3641, 7
        %v3643 = vsub.s32 0, %v3642
        %v3644 = vrot.slane %v3629, %v3643
        %v3645 = vlaneseq
        %v3646 = vshrl.u32 %v3645, 7
        %v3647 = vsub.s32 0, %v3646
        %v3648 = vrot.slane %v3631, %v3647
        %v3649 = vlaneseq
        %v3650 = vshrl.u32 %v3649, 7
        %v3651 = vsub.s32 0, %v3650
        %v3652 = vrot.slane %v3614, %v3651
        %v3653 = vlaneseq
        %v3654 = vshrl.u32 %v3653, 7
        %v3655 = vsub.s32 0, %v3654
        %v3656 = vrot.slane %v3628, %v3655
        %v3657 = vlaneseq
        %v3658 = vshrl.u32 %v3657, 7
        %v3659 = vsub.s32 0, %v3658
        %v3660 = vrot.slane %v3630, %v3659
        %v3661 = vlaneseq
        %v3662 = vshrl.u32 %v3661, 7
        %v3663 = vsub.s32 0, %v3662
        %v3664 = vrot.slane %v3632, %v3663
        %3665 = vrot.lane.b32.xlu0 %v3636, 127
        %v3666 = vpop.permute.xlu0 %3665
        %3667 = vrot.lane.b32.xlu0 %v3640, 127
        %v3668 = vpop.permute.xlu0 %3667
        %3669 = vrot.lane.b32.xlu0 %v3644, 127
        %v3670 = vpop.permute.xlu0 %3669
        %3671 = vrot.lane.b32.xlu0 %v3648, 127
        %v3672 = vpop.permute.xlu0 %3671
        %3673 = vrot.lane.b32.xlu0 %v3652, 127
        %v3674 = vpop.permute.xlu0 %3673
        %3675 = vrot.lane.b32.xlu0 %v3656, 127
        %v3676 = vpop.permute.xlu0 %3675
        %3677 = vrot.lane.b32.xlu0 %v3660, 127
        %v3678 = vpop.permute.xlu0 %3677
        %3679 = vrot.lane.b32.xlu0 %v3664, 127
        %v3680 = vpop.permute.xlu0 %3679
        %vm3689 = vcmask 122880
        %3690 = vst.msk [vmem:[%s417] sm:$0x1] %vm3689, %v3666
        %3691 = vst.msk [vmem:[%s417 + $0x10] sm:$0x1] %vm3689, %v3668
        %3692 = vst.msk [vmem:[%s417 + $0x20] sm:$0x1] %vm3689, %v3670
        %3693 = vst.msk [vmem:[%s417 + $0x30] sm:$0x1] %vm3689, %v3672
        %3694 = vst.msk [vmem:[%s417 + $0x40] sm:$0x1] %vm3689, %v3674
        %3695 = vst.msk [vmem:[%s417 + $0x50] sm:$0x1] %vm3689, %v3676
        %3696 = vst.msk [vmem:[%s417 + $0x60] sm:$0x1] %vm3689, %v3678
        %3697 = vst.msk [vmem:[%s417 + $0x70] sm:$0x1] %vm3689, %v3680
        %3698 = vrot.lane.b32.xlu0 %v3636, 103
        %v3699 = vpop.permute.xlu0 %3698
        %3700 = vrot.lane.b32.xlu0 %v3640, 103
        %v3701 = vpop.permute.xlu0 %3700
        %3702 = vrot.lane.b32.xlu0 %v3644, 103
        %v3703 = vpop.permute.xlu0 %3702
        %3704 = vrot.lane.b32.xlu0 %v3648, 103
        %v3705 = vpop.permute.xlu0 %3704
        %3706 = vrot.lane.b32.xlu0 %v3652, 103
        %v3707 = vpop.permute.xlu0 %3706
        %3708 = vrot.lane.b32.xlu0 %v3656, 103
        %v3709 = vpop.permute.xlu0 %3708
        %3710 = vrot.lane.b32.xlu0 %v3660, 103
        %v3711 = vpop.permute.xlu0 %3710
        %3712 = vrot.lane.b32.xlu0 %v3664, 103
        %v3713 = vpop.permute.xlu0 %3712
        %3722 = vst.msk [vmem:[%s417 + $0x1] sm:$0x1] %vm3689, %v3699
        %3723 = vst.msk [vmem:[%s417 + $0x11] sm:$0x1] %vm3689, %v3701
        %3724 = vst.msk [vmem:[%s417 + $0x21] sm:$0x1] %vm3689, %v3703
        %3725 = vst.msk [vmem:[%s417 + $0x31] sm:$0x1] %vm3689, %v3705
        %3726 = vst.msk [vmem:[%s417 + $0x41] sm:$0x1] %vm3689, %v3707
        %3727 = vst.msk [vmem:[%s417 + $0x51] sm:$0x1] %vm3689, %v3709
        %3728 = vst.msk [vmem:[%s417 + $0x61] sm:$0x1] %vm3689, %v3711
        %3729 = vst.msk [vmem:[%s417 + $0x71] sm:$0x1] %vm3689, %v3713
        %3730 = vrot.lane.b32.xlu0 %v3636, 79
        %v3731 = vpop.permute.xlu0 %3730
        %3732 = vrot.lane.b32.xlu0 %v3640, 79
        %v3733 = vpop.permute.xlu0 %3732
        %3734 = vrot.lane.b32.xlu0 %v3644, 79
        %v3735 = vpop.permute.xlu0 %3734
        %3736 = vrot.lane.b32.xlu0 %v3648, 79
        %v3737 = vpop.permute.xlu0 %3736
        %3738 = vrot.lane.b32.xlu0 %v3652, 79
        %v3739 = vpop.permute.xlu0 %3738
        %3740 = vrot.lane.b32.xlu0 %v3656, 79
        %v3741 = vpop.permute.xlu0 %3740
        %3742 = vrot.lane.b32.xlu0 %v3660, 79
        %v3743 = vpop.permute.xlu0 %3742
        %3744 = vrot.lane.b32.xlu0 %v3664, 79
        %v3745 = vpop.permute.xlu0 %3744
        %3754 = vst.msk [vmem:[%s417 + $0x2] sm:$0x1] %vm3689, %v3731
        %3755 = vst.msk [vmem:[%s417 + $0x12] sm:$0x1] %vm3689, %v3733
        %3756 = vst.msk [vmem:[%s417 + $0x22] sm:$0x1] %vm3689, %v3735
        %3757 = vst.msk [vmem:[%s417 + $0x32] sm:$0x1] %vm3689, %v3737
        %3758 = vst.msk [vmem:[%s417 + $0x42] sm:$0x1] %vm3689, %v3739
        %3759 = vst.msk [vmem:[%s417 + $0x52] sm:$0x1] %vm3689, %v3741
        %3760 = vst.msk [vmem:[%s417 + $0x62] sm:$0x1] %vm3689, %v3743
        %3761 = vst.msk [vmem:[%s417 + $0x72] sm:$0x1] %vm3689, %v3745
        %3762 = vrot.lane.b32.xlu0 %v3636, 55
        %v3763 = vpop.permute.xlu0 %3762
        %3764 = vrot.lane.b32.xlu0 %v3640, 55
        %v3765 = vpop.permute.xlu0 %3764
        %3766 = vrot.lane.b32.xlu0 %v3644, 55
        %v3767 = vpop.permute.xlu0 %3766
        %3768 = vrot.lane.b32.xlu0 %v3648, 55
        %v3769 = vpop.permute.xlu0 %3768
        %3770 = vrot.lane.b32.xlu0 %v3652, 55
        %v3771 = vpop.permute.xlu0 %3770
        %3772 = vrot.lane.b32.xlu0 %v3656, 55
        %v3773 = vpop.permute.xlu0 %3772
        %3774 = vrot.lane.b32.xlu0 %v3660, 55
        %v3775 = vpop.permute.xlu0 %3774
        %3776 = vrot.lane.b32.xlu0 %v3664, 55
        %v3777 = vpop.permute.xlu0 %3776
        %3786 = vst.msk [vmem:[%s417 + $0x3] sm:$0x1] %vm3689, %v3763
        %3787 = vst.msk [vmem:[%s417 + $0x13] sm:$0x1] %vm3689, %v3765
        %3788 = vst.msk [vmem:[%s417 + $0x23] sm:$0x1] %vm3689, %v3767
        %3789 = vst.msk [vmem:[%s417 + $0x33] sm:$0x1] %vm3689, %v3769
        %3790 = vst.msk [vmem:[%s417 + $0x43] sm:$0x1] %vm3689, %v3771
        %3791 = vst.msk [vmem:[%s417 + $0x53] sm:$0x1] %vm3689, %v3773
        %3792 = vst.msk [vmem:[%s417 + $0x63] sm:$0x1] %vm3689, %v3775
        %3793 = vst.msk [vmem:[%s417 + $0x73] sm:$0x1] %vm3689, %v3777
        %3794 = vrot.lane.b32.xlu0 %v3636, 31
        %v3795 = vpop.permute.xlu0 %3794
        %3796 = vrot.lane.b32.xlu0 %v3640, 31
        %v3797 = vpop.permute.xlu0 %3796
        %3798 = vrot.lane.b32.xlu0 %v3644, 31
        %v3799 = vpop.permute.xlu0 %3798
        %3800 = vrot.lane.b32.xlu0 %v3648, 31
        %v3801 = vpop.permute.xlu0 %3800
        %3802 = vrot.lane.b32.xlu0 %v3652, 31
        %v3803 = vpop.permute.xlu0 %3802
        %3804 = vrot.lane.b32.xlu0 %v3656, 31
        %v3805 = vpop.permute.xlu0 %3804
        %3806 = vrot.lane.b32.xlu0 %v3660, 31
        %v3807 = vpop.permute.xlu0 %3806
        %3808 = vrot.lane.b32.xlu0 %v3664, 31
        %v3809 = vpop.permute.xlu0 %3808
        %3818 = vst.msk [vmem:[%s417 + $0x4] sm:$0x1] %vm3689, %v3795
        %3819 = vst.msk [vmem:[%s417 + $0x14] sm:$0x1] %vm3689, %v3797
        %3820 = vst.msk [vmem:[%s417 + $0x24] sm:$0x1] %vm3689, %v3799
        %3821 = vst.msk [vmem:[%s417 + $0x34] sm:$0x1] %vm3689, %v3801
        %3822 = vst.msk [vmem:[%s417 + $0x44] sm:$0x1] %vm3689, %v3803
        %3823 = vst.msk [vmem:[%s417 + $0x54] sm:$0x1] %vm3689, %v3805
        %3824 = vst.msk [vmem:[%s417 + $0x64] sm:$0x1] %vm3689, %v3807
        %3825 = vst.msk [vmem:[%s417 + $0x74] sm:$0x1] %vm3689, %v3809
        %v3827 = vcombine.low %v3580, %v3581
        %v3828 = vcombine.high %v3580, %v3581
        %v3830 = vunpack.c.l.s4 1966171168
        %v3831 = vunpack.c.0.s8 %v3830
        %v3832 = vlaneseq
        %v3833 = vshrl.u32 %v3832, 7
        %v3834 = vsub.s32 %v3831, %v3833
        %v3835 = vrot.slane %v3827, %v3834
        %v3837 = vunpack.c.l.s4 1966171168
        %v3838 = vunpack.c.0.s8 %v3837
        %v3839 = vlaneseq
        %v3840 = vshrl.u32 %v3839, 7
        %v3841 = vsub.s32 %v3838, %v3840
        %v3842 = vrot.slane %v3828, %v3841
        %v3843 = vcombine.high %v3835, %v3835
        %v3844 = vcombine.high %v3842, %v3842
        %v3846 = vunpack.c.l.s4 1966171168
        %v3847 = vunpack.c.0.s8 %v3846
        %v3848 = vlaneseq
        %v3849 = vshrl.u32 %v3848, 7
        %v3850 = vsub.s32 %v3847, %v3849
        %v3851 = vrot.slane %v3835, %v3850
        %v3853 = vunpack.c.l.s4 1966171168
        %v3854 = vunpack.c.0.s8 %v3853
        %v3855 = vlaneseq
        %v3856 = vshrl.u32 %v3855, 7
        %v3857 = vsub.s32 %v3854, %v3856
        %v3858 = vrot.slane %v3842, %v3857
        %v3860 = vunpack.c.l.s4 1966171168
        %v3861 = vunpack.c.0.s8 %v3860
        %v3862 = vlaneseq
        %v3863 = vshrl.u32 %v3862, 7
        %v3864 = vsub.s32 %v3861, %v3863
        %v3865 = vrot.slane %v3843, %v3864
        %v3867 = vunpack.c.l.s4 1966171168
        %v3868 = vunpack.c.0.s8 %v3867
        %v3869 = vlaneseq
        %v3870 = vshrl.u32 %v3869, 7
        %v3871 = vsub.s32 %v3868, %v3870
        %v3872 = vrot.slane %v3844, %v3871
        %v3873 = vcombine.high %v3851, %v3851
        %v3874 = vcombine.high %v3858, %v3858
        %v3875 = vcombine.high %v3865, %v3865
        %v3876 = vcombine.high %v3872, %v3872
        %v3877 = vlaneseq
        %v3878 = vshrl.u32 %v3877, 7
        %v3879 = vsub.s32 0, %v3878
        %v3880 = vrot.slane %v3851, %v3879
        %v3881 = vlaneseq
        %v3882 = vshrl.u32 %v3881, 7
        %v3883 = vsub.s32 1, %v3882
        %v3884 = vrot.slane %v3851, %v3883
        %v3885 = vlaneseq
        %v3886 = vshrl.u32 %v3885, 7
        %v3887 = vsub.s32 0, %v3886
        %v3888 = vrot.slane %v3865, %v3887
        %v3889 = vlaneseq
        %v3890 = vshrl.u32 %v3889, 7
        %v3891 = vsub.s32 1, %v3890
        %v3892 = vrot.slane %v3865, %v3891
        %v3893 = vlaneseq
        %v3894 = vshrl.u32 %v3893, 7
        %v3895 = vsub.s32 0, %v3894
        %v3896 = vrot.slane %v3873, %v3895
        %v3897 = vlaneseq
        %v3898 = vshrl.u32 %v3897, 7
        %v3899 = vsub.s32 1, %v3898
        %v3900 = vrot.slane %v3873, %v3899
        %v3901 = vlaneseq
        %v3902 = vshrl.u32 %v3901, 7
        %v3903 = vsub.s32 0, %v3902
        %v3904 = vrot.slane %v3875, %v3903
        %v3905 = vlaneseq
        %v3906 = vshrl.u32 %v3905, 7
        %v3907 = vsub.s32 1, %v3906
        %v3908 = vrot.slane %v3875, %v3907
        %v3909 = vlaneseq
        %v3910 = vshrl.u32 %v3909, 7
        %v3911 = vsub.s32 0, %v3910
        %v3912 = vrot.slane %v3858, %v3911
        %v3913 = vlaneseq
        %v3914 = vshrl.u32 %v3913, 7
        %v3915 = vsub.s32 1, %v3914
        %v3916 = vrot.slane %v3858, %v3915
        %v3917 = vlaneseq
        %v3918 = vshrl.u32 %v3917, 7
        %v3919 = vsub.s32 0, %v3918
        %v3920 = vrot.slane %v3872, %v3919
        %v3921 = vlaneseq
        %v3922 = vshrl.u32 %v3921, 7
        %v3923 = vsub.s32 1, %v3922
        %v3924 = vrot.slane %v3872, %v3923
        %v3925 = vlaneseq
        %v3926 = vshrl.u32 %v3925, 7
        %v3927 = vsub.s32 0, %v3926
        %v3928 = vrot.slane %v3874, %v3927
        %v3929 = vlaneseq
        %v3930 = vshrl.u32 %v3929, 7
        %v3931 = vsub.s32 1, %v3930
        %v3932 = vrot.slane %v3874, %v3931
        %v3933 = vlaneseq
        %v3934 = vshrl.u32 %v3933, 7
        %v3935 = vsub.s32 0, %v3934
        %v3936 = vrot.slane %v3876, %v3935
        %v3937 = vlaneseq
        %v3938 = vshrl.u32 %v3937, 7
        %v3939 = vsub.s32 1, %v3938
        %v3940 = vrot.slane %v3876, %v3939
        %3941 = vrot.lane.b32.xlu0 %v3880, 7
        %v3942 = vpop.permute.xlu0 %3941
        %3943 = vrot.lane.b32.xlu0 %v3884, 7
        %v3944 = vpop.permute.xlu0 %3943
        %3945 = vrot.lane.b32.xlu0 %v3888, 7
        %v3946 = vpop.permute.xlu0 %3945
        %3947 = vrot.lane.b32.xlu0 %v3892, 7
        %v3948 = vpop.permute.xlu0 %3947
        %3949 = vrot.lane.b32.xlu0 %v3896, 7
        %v3950 = vpop.permute.xlu0 %3949
        %3951 = vrot.lane.b32.xlu0 %v3900, 7
        %v3952 = vpop.permute.xlu0 %3951
        %3953 = vrot.lane.b32.xlu0 %v3904, 7
        %v3954 = vpop.permute.xlu0 %3953
        %3955 = vrot.lane.b32.xlu0 %v3908, 7
        %v3956 = vpop.permute.xlu0 %3955
        %3957 = vrot.lane.b32.xlu0 %v3912, 7
        %v3958 = vpop.permute.xlu0 %3957
        %3959 = vrot.lane.b32.xlu0 %v3916, 7
        %v3960 = vpop.permute.xlu0 %3959
        %3961 = vrot.lane.b32.xlu0 %v3920, 7
        %v3962 = vpop.permute.xlu0 %3961
        %3963 = vrot.lane.b32.xlu0 %v3924, 7
        %v3964 = vpop.permute.xlu0 %3963
        %3965 = vrot.lane.b32.xlu0 %v3928, 7
        %v3966 = vpop.permute.xlu0 %3965
        %3967 = vrot.lane.b32.xlu0 %v3932, 7
        %v3968 = vpop.permute.xlu0 %3967
        %3969 = vrot.lane.b32.xlu0 %v3936, 7
        %v3970 = vpop.permute.xlu0 %3969
        %3971 = vrot.lane.b32.xlu0 %v3940, 7
        %v3972 = vpop.permute.xlu0 %3971
        %vm3973 = vcmask 56320
        %v3974 = vsel %vm3973, %v3942, %v3944
        %v3975 = vsel %vm3973, %v3946, %v3948
        %v3976 = vsel %vm3973, %v3950, %v3952
        %v3977 = vsel %vm3973, %v3954, %v3956
        %v3978 = vsel %vm3973, %v3958, %v3960
        %v3979 = vsel %vm3973, %v3962, %v3964
        %v3980 = vsel %vm3973, %v3966, %v3968
        %v3981 = vsel %vm3973, %v3970, %v3972
        %3990 = vst.msk [vmem:[%s417 + $0x5] sm:$0x1] %vm3689, %v3974
        %3991 = vst.msk [vmem:[%s417 + $0x15] sm:$0x1] %vm3689, %v3975
        %3992 = vst.msk [vmem:[%s417 + $0x25] sm:$0x1] %vm3689, %v3976
        %3993 = vst.msk [vmem:[%s417 + $0x35] sm:$0x1] %vm3689, %v3977
        %3994 = vst.msk [vmem:[%s417 + $0x45] sm:$0x1] %vm3689, %v3978
        %3995 = vst.msk [vmem:[%s417 + $0x55] sm:$0x1] %vm3689, %v3979
        %3996 = vst.msk [vmem:[%s417 + $0x65] sm:$0x1] %vm3689, %v3980
        %3997 = vst.msk [vmem:[%s417 + $0x75] sm:$0x1] %vm3689, %v3981
        %v3998 = vcombine.high %v3581, %v3581
        %v4000 = vunpack.c.l.s4 1966171168
        %v4001 = vunpack.c.0.s8 %v4000
        %v4002 = vlaneseq
        %v4003 = vshrl.u32 %v4002, 7
        %v4004 = vsub.s32 %v4001, %v4003
        %v4005 = vrot.slane %v3581, %v4004
        %v4007 = vunpack.c.l.s4 1966171168
        %v4008 = vunpack.c.0.s8 %v4007
        %v4009 = vlaneseq
        %v4010 = vshrl.u32 %v4009, 7
        %v4011 = vsub.s32 %v4008, %v4010
        %v4012 = vrot.slane %v3998, %v4011
        %v4013 = vcombine.high %v4005, %v4005
        %v4014 = vcombine.high %v4012, %v4012
        %v4016 = vunpack.c.l.s4 1966171168
        %v4017 = vunpack.c.0.s8 %v4016
        %v4018 = vlaneseq
        %v4019 = vshrl.u32 %v4018, 7
        %v4020 = vsub.s32 %v4017, %v4019
        %v4021 = vrot.slane %v4005, %v4020
        %v4023 = vunpack.c.l.s4 1966171168
        %v4024 = vunpack.c.0.s8 %v4023
        %v4025 = vlaneseq
        %v4026 = vshrl.u32 %v4025, 7
        %v4027 = vsub.s32 %v4024, %v4026
        %v4028 = vrot.slane %v4012, %v4027
        %v4030 = vunpack.c.l.s4 1966171168
        %v4031 = vunpack.c.0.s8 %v4030
        %v4032 = vlaneseq
        %v4033 = vshrl.u32 %v4032, 7
        %v4034 = vsub.s32 %v4031, %v4033
        %v4035 = vrot.slane %v4013, %v4034
        %v4037 = vunpack.c.l.s4 1966171168
        %v4038 = vunpack.c.0.s8 %v4037
        %v4039 = vlaneseq
        %v4040 = vshrl.u32 %v4039, 7
        %v4041 = vsub.s32 %v4038, %v4040
        %v4042 = vrot.slane %v4014, %v4041
        %v4043 = vcombine.high %v4021, %v4021
        %v4044 = vcombine.high %v4028, %v4028
        %v4045 = vcombine.high %v4035, %v4035
        %v4046 = vcombine.high %v4042, %v4042
        %v4047 = vlaneseq
        %v4048 = vshrl.u32 %v4047, 7
        %v4049 = vsub.s32 0, %v4048
        %v4050 = vrot.slane %v4021, %v4049
        %v4051 = vlaneseq
        %v4052 = vshrl.u32 %v4051, 7
        %v4053 = vsub.s32 0, %v4052
        %v4054 = vrot.slane %v4035, %v4053
        %v4055 = vlaneseq
        %v4056 = vshrl.u32 %v4055, 7
        %v4057 = vsub.s32 0, %v4056
        %v4058 = vrot.slane %v4043, %v4057
        %v4059 = vlaneseq
        %v4060 = vshrl.u32 %v4059, 7
        %v4061 = vsub.s32 0, %v4060
        %v4062 = vrot.slane %v4045, %v4061
        %v4063 = vlaneseq
        %v4064 = vshrl.u32 %v4063, 7
        %v4065 = vsub.s32 0, %v4064
        %v4066 = vrot.slane %v4028, %v4065
        %v4067 = vlaneseq
        %v4068 = vshrl.u32 %v4067, 7
        %v4069 = vsub.s32 0, %v4068
        %v4070 = vrot.slane %v4042, %v4069
        %v4071 = vlaneseq
        %v4072 = vshrl.u32 %v4071, 7
        %v4073 = vsub.s32 0, %v4072
        %v4074 = vrot.slane %v4044, %v4073
        %v4075 = vlaneseq
        %v4076 = vshrl.u32 %v4075, 7
        %v4077 = vsub.s32 0, %v4076
        %v4078 = vrot.slane %v4046, %v4077
        %4079 = vrot.lane.b32.xlu0 %v4050, 111
        %v4080 = vpop.permute.xlu0 %4079
        %4081 = vrot.lane.b32.xlu0 %v4054, 111
        %v4082 = vpop.permute.xlu0 %4081
        %4083 = vrot.lane.b32.xlu0 %v4058, 111
        %v4084 = vpop.permute.xlu0 %4083
        %4085 = vrot.lane.b32.xlu0 %v4062, 111
        %v4086 = vpop.permute.xlu0 %4085
        %4087 = vrot.lane.b32.xlu0 %v4066, 111
        %v4088 = vpop.permute.xlu0 %4087
        %4089 = vrot.lane.b32.xlu0 %v4070, 111
        %v4090 = vpop.permute.xlu0 %4089
        %4091 = vrot.lane.b32.xlu0 %v4074, 111
        %v4092 = vpop.permute.xlu0 %4091
        %4093 = vrot.lane.b32.xlu0 %v4078, 111
        %v4094 = vpop.permute.xlu0 %4093
        %4103 = vst.msk [vmem:[%s417 + $0x6] sm:$0x1] %vm3689, %v4080
        %4104 = vst.msk [vmem:[%s417 + $0x16] sm:$0x1] %vm3689, %v4082
        %4105 = vst.msk [vmem:[%s417 + $0x26] sm:$0x1] %vm3689, %v4084
        %4106 = vst.msk [vmem:[%s417 + $0x36] sm:$0x1] %vm3689, %v4086
        %4107 = vst.msk [vmem:[%s417 + $0x46] sm:$0x1] %vm3689, %v4088
        %4108 = vst.msk [vmem:[%s417 + $0x56] sm:$0x1] %vm3689, %v4090
        %4109 = vst.msk [vmem:[%s417 + $0x66] sm:$0x1] %vm3689, %v4092
        %4110 = vst.msk [vmem:[%s417 + $0x76] sm:$0x1] %vm3689, %v4094
        %4111 = vrot.lane.b32.xlu0 %v4050, 87
        %v4112 = vpop.permute.xlu0 %4111
        %4113 = vrot.lane.b32.xlu0 %v4054, 87
        %v4114 = vpop.permute.xlu0 %4113
        %4115 = vrot.lane.b32.xlu0 %v4058, 87
        %v4116 = vpop.permute.xlu0 %4115
        %4117 = vrot.lane.b32.xlu0 %v4062, 87
        %v4118 = vpop.permute.xlu0 %4117
        %4119 = vrot.lane.b32.xlu0 %v4066, 87
        %v4120 = vpop.permute.xlu0 %4119
        %4121 = vrot.lane.b32.xlu0 %v4070, 87
        %v4122 = vpop.permute.xlu0 %4121
        %4123 = vrot.lane.b32.xlu0 %v4074, 87
        %v4124 = vpop.permute.xlu0 %4123
        %4125 = vrot.lane.b32.xlu0 %v4078, 87
        %v4126 = vpop.permute.xlu0 %4125
        %4135 = vst.msk [vmem:[%s417 + $0x7] sm:$0x1] %vm3689, %v4112
        %4136 = vst.msk [vmem:[%s417 + $0x17] sm:$0x1] %vm3689, %v4114
        %4137 = vst.msk [vmem:[%s417 + $0x27] sm:$0x1] %vm3689, %v4116
        %4138 = vst.msk [vmem:[%s417 + $0x37] sm:$0x1] %vm3689, %v4118
        %4139 = vst.msk [vmem:[%s417 + $0x47] sm:$0x1] %vm3689, %v4120
        %4140 = vst.msk [vmem:[%s417 + $0x57] sm:$0x1] %vm3689, %v4122
        %4141 = vst.msk [vmem:[%s417 + $0x67] sm:$0x1] %vm3689, %v4124
        %4142 = vst.msk [vmem:[%s417 + $0x77] sm:$0x1] %vm3689, %v4126
        %4143 = vrot.lane.b32.xlu0 %v4050, 63
        %v4144 = vpop.permute.xlu0 %4143
        %4145 = vrot.lane.b32.xlu0 %v4054, 63
        %v4146 = vpop.permute.xlu0 %4145
        %4147 = vrot.lane.b32.xlu0 %v4058, 63
        %v4148 = vpop.permute.xlu0 %4147
        %4149 = vrot.lane.b32.xlu0 %v4062, 63
        %v4150 = vpop.permute.xlu0 %4149
        %4151 = vrot.lane.b32.xlu0 %v4066, 63
        %v4152 = vpop.permute.xlu0 %4151
        %4153 = vrot.lane.b32.xlu0 %v4070, 63
        %v4154 = vpop.permute.xlu0 %4153
        %4155 = vrot.lane.b32.xlu0 %v4074, 63
        %v4156 = vpop.permute.xlu0 %4155
        %4157 = vrot.lane.b32.xlu0 %v4078, 63
        %v4158 = vpop.permute.xlu0 %4157
        %4167 = vst.msk [vmem:[%s417 + $0x8] sm:$0x1] %vm3689, %v4144
        %4168 = vst.msk [vmem:[%s417 + $0x18] sm:$0x1] %vm3689, %v4146
        %4169 = vst.msk [vmem:[%s417 + $0x28] sm:$0x1] %vm3689, %v4148
        %4170 = vst.msk [vmem:[%s417 + $0x38] sm:$0x1] %vm3689, %v4150
        %4171 = vst.msk [vmem:[%s417 + $0x48] sm:$0x1] %vm3689, %v4152
        %4172 = vst.msk [vmem:[%s417 + $0x58] sm:$0x1] %vm3689, %v4154
        %4173 = vst.msk [vmem:[%s417 + $0x68] sm:$0x1] %vm3689, %v4156
        %4174 = vst.msk [vmem:[%s417 + $0x78] sm:$0x1] %vm3689, %v4158
        %4175 = vrot.lane.b32.xlu0 %v4050, 39
        %v4176 = vpop.permute.xlu0 %4175
        %4177 = vrot.lane.b32.xlu0 %v4054, 39
        %v4178 = vpop.permute.xlu0 %4177
        %4179 = vrot.lane.b32.xlu0 %v4058, 39
        %v4180 = vpop.permute.xlu0 %4179
        %4181 = vrot.lane.b32.xlu0 %v4062, 39
        %v4182 = vpop.permute.xlu0 %4181
        %4183 = vrot.lane.b32.xlu0 %v4066, 39
        %v4184 = vpop.permute.xlu0 %4183
        %4185 = vrot.lane.b32.xlu0 %v4070, 39
        %v4186 = vpop.permute.xlu0 %4185
        %4187 = vrot.lane.b32.xlu0 %v4074, 39
        %v4188 = vpop.permute.xlu0 %4187
        %4189 = vrot.lane.b32.xlu0 %v4078, 39
        %v4190 = vpop.permute.xlu0 %4189
        %4199 = vst.msk [vmem:[%s417 + $0x9] sm:$0x1] %vm3689, %v4176
        %4200 = vst.msk [vmem:[%s417 + $0x19] sm:$0x1] %vm3689, %v4178
        %4201 = vst.msk [vmem:[%s417 + $0x29] sm:$0x1] %vm3689, %v4180
        %4202 = vst.msk [vmem:[%s417 + $0x39] sm:$0x1] %vm3689, %v4182
        %4203 = vst.msk [vmem:[%s417 + $0x49] sm:$0x1] %vm3689, %v4184
        %4204 = vst.msk [vmem:[%s417 + $0x59] sm:$0x1] %vm3689, %v4186
        %4205 = vst.msk [vmem:[%s417 + $0x69] sm:$0x1] %vm3689, %v4188
        %4206 = vst.msk [vmem:[%s417 + $0x79] sm:$0x1] %vm3689, %v4190
        %v4208 = vcombine.low %v3581, %v3582
        %v4209 = vcombine.high %v3581, %v3582
        %v4211 = vunpack.c.l.s4 1966171168
        %v4212 = vunpack.c.0.s8 %v4211
        %v4213 = vlaneseq
        %v4214 = vshrl.u32 %v4213, 7
        %v4215 = vsub.s32 %v4212, %v4214
        %v4216 = vrot.slane %v4208, %v4215
        %v4218 = vunpack.c.l.s4 1966171168
        %v4219 = vunpack.c.0.s8 %v4218
        %v4220 = vlaneseq
        %v4221 = vshrl.u32 %v4220, 7
        %v4222 = vsub.s32 %v4219, %v4221
        %v4223 = vrot.slane %v4209, %v4222
        %v4224 = vcombine.high %v4216, %v4216
        %v4225 = vcombine.high %v4223, %v4223
        %v4227 = vunpack.c.l.s4 1966171168
        %v4228 = vunpack.c.0.s8 %v4227
        %v4229 = vlaneseq
        %v4230 = vshrl.u32 %v4229, 7
        %v4231 = vsub.s32 %v4228, %v4230
        %v4232 = vrot.slane %v4216, %v4231
        %v4234 = vunpack.c.l.s4 1966171168
        %v4235 = vunpack.c.0.s8 %v4234
        %v4236 = vlaneseq
        %v4237 = vshrl.u32 %v4236, 7
        %v4238 = vsub.s32 %v4235, %v4237
        %v4239 = vrot.slane %v4223, %v4238
        %v4241 = vunpack.c.l.s4 1966171168
        %v4242 = vunpack.c.0.s8 %v4241
        %v4243 = vlaneseq
        %v4244 = vshrl.u32 %v4243, 7
        %v4245 = vsub.s32 %v4242, %v4244
        %v4246 = vrot.slane %v4224, %v4245
        %v4248 = vunpack.c.l.s4 1966171168
        %v4249 = vunpack.c.0.s8 %v4248
        %v4250 = vlaneseq
        %v4251 = vshrl.u32 %v4250, 7
        %v4252 = vsub.s32 %v4249, %v4251
        %v4253 = vrot.slane %v4225, %v4252
        %v4254 = vcombine.high %v4232, %v4232
        %v4255 = vcombine.high %v4239, %v4239
        %v4256 = vcombine.high %v4246, %v4246
        %v4257 = vcombine.high %v4253, %v4253
        %v4258 = vlaneseq
        %v4259 = vshrl.u32 %v4258, 7
        %v4260 = vsub.s32 0, %v4259
        %v4261 = vrot.slane %v4232, %v4260
        %v4262 = vlaneseq
        %v4263 = vshrl.u32 %v4262, 7
        %v4264 = vsub.s32 1, %v4263
        %v4265 = vrot.slane %v4232, %v4264
        %v4266 = vlaneseq
        %v4267 = vshrl.u32 %v4266, 7
        %v4268 = vsub.s32 0, %v4267
        %v4269 = vrot.slane %v4246, %v4268
        %v4270 = vlaneseq
        %v4271 = vshrl.u32 %v4270, 7
        %v4272 = vsub.s32 1, %v4271
        %v4273 = vrot.slane %v4246, %v4272
        %v4274 = vlaneseq
        %v4275 = vshrl.u32 %v4274, 7
        %v4276 = vsub.s32 0, %v4275
        %v4277 = vrot.slane %v4254, %v4276
        %v4278 = vlaneseq
        %v4279 = vshrl.u32 %v4278, 7
        %v4280 = vsub.s32 1, %v4279
        %v4281 = vrot.slane %v4254, %v4280
        %v4282 = vlaneseq
        %v4283 = vshrl.u32 %v4282, 7
        %v4284 = vsub.s32 0, %v4283
        %v4285 = vrot.slane %v4256, %v4284
        %v4286 = vlaneseq
        %v4287 = vshrl.u32 %v4286, 7
        %v4288 = vsub.s32 1, %v4287
        %v4289 = vrot.slane %v4256, %v4288
        %v4290 = vlaneseq
        %v4291 = vshrl.u32 %v4290, 7
        %v4292 = vsub.s32 0, %v4291
        %v4293 = vrot.slane %v4239, %v4292
        %v4294 = vlaneseq
        %v4295 = vshrl.u32 %v4294, 7
        %v4296 = vsub.s32 1, %v4295
        %v4297 = vrot.slane %v4239, %v4296
        %v4298 = vlaneseq
        %v4299 = vshrl.u32 %v4298, 7
        %v4300 = vsub.s32 0, %v4299
        %v4301 = vrot.slane %v4253, %v4300
        %v4302 = vlaneseq
        %v4303 = vshrl.u32 %v4302, 7
        %v4304 = vsub.s32 1, %v4303
        %v4305 = vrot.slane %v4253, %v4304
        %v4306 = vlaneseq
        %v4307 = vshrl.u32 %v4306, 7
        %v4308 = vsub.s32 0, %v4307
        %v4309 = vrot.slane %v4255, %v4308
        %v4310 = vlaneseq
        %v4311 = vshrl.u32 %v4310, 7
        %v4312 = vsub.s32 1, %v4311
        %v4313 = vrot.slane %v4255, %v4312
        %v4314 = vlaneseq
        %v4315 = vshrl.u32 %v4314, 7
        %v4316 = vsub.s32 0, %v4315
        %v4317 = vrot.slane %v4257, %v4316
        %v4318 = vlaneseq
        %v4319 = vshrl.u32 %v4318, 7
        %v4320 = vsub.s32 1, %v4319
        %v4321 = vrot.slane %v4257, %v4320
        %4322 = vrot.lane.b32.xlu0 %v4261, 15
        %v4323 = vpop.permute.xlu0 %4322
        %4324 = vrot.lane.b32.xlu0 %v4265, 15
        %v4325 = vpop.permute.xlu0 %4324
        %4326 = vrot.lane.b32.xlu0 %v4269, 15
        %v4327 = vpop.permute.xlu0 %4326
        %4328 = vrot.lane.b32.xlu0 %v4273, 15
        %v4329 = vpop.permute.xlu0 %4328
        %4330 = vrot.lane.b32.xlu0 %v4277, 15
        %v4331 = vpop.permute.xlu0 %4330
        %4332 = vrot.lane.b32.xlu0 %v4281, 15
        %v4333 = vpop.permute.xlu0 %4332
        %4334 = vrot.lane.b32.xlu0 %v4285, 15
        %v4335 = vpop.permute.xlu0 %4334
        %4336 = vrot.lane.b32.xlu0 %v4289, 15
        %v4337 = vpop.permute.xlu0 %4336
        %4338 = vrot.lane.b32.xlu0 %v4293, 15
        %v4339 = vpop.permute.xlu0 %4338
        %4340 = vrot.lane.b32.xlu0 %v4297, 15
        %v4341 = vpop.permute.xlu0 %4340
        %4342 = vrot.lane.b32.xlu0 %v4301, 15
        %v4343 = vpop.permute.xlu0 %4342
        %4344 = vrot.lane.b32.xlu0 %v4305, 15
        %v4345 = vpop.permute.xlu0 %4344
        %4346 = vrot.lane.b32.xlu0 %v4309, 15
        %v4347 = vpop.permute.xlu0 %4346
        %4348 = vrot.lane.b32.xlu0 %v4313, 15
        %v4349 = vpop.permute.xlu0 %4348
        %4350 = vrot.lane.b32.xlu0 %v4317, 15
        %v4351 = vpop.permute.xlu0 %4350
        %4352 = vrot.lane.b32.xlu0 %v4321, 15
        %v4353 = vpop.permute.xlu0 %4352
        %vm4354 = vcmask 121856
        %v4355 = vsel %vm4354, %v4323, %v4325
        %v4356 = vsel %vm4354, %v4327, %v4329
        %v4357 = vsel %vm4354, %v4331, %v4333
        %v4358 = vsel %vm4354, %v4335, %v4337
        %v4359 = vsel %vm4354, %v4339, %v4341
        %v4360 = vsel %vm4354, %v4343, %v4345
        %v4361 = vsel %vm4354, %v4347, %v4349
        %v4362 = vsel %vm4354, %v4351, %v4353
        %4371 = vst.msk [vmem:[%s417 + $0xa] sm:$0x1] %vm3689, %v4355
        %4372 = vst.msk [vmem:[%s417 + $0x1a] sm:$0x1] %vm3689, %v4356
        %4373 = vst.msk [vmem:[%s417 + $0x2a] sm:$0x1] %vm3689, %v4357
        %4374 = vst.msk [vmem:[%s417 + $0x3a] sm:$0x1] %vm3689, %v4358
        %4375 = vst.msk [vmem:[%s417 + $0x4a] sm:$0x1] %vm3689, %v4359
        %4376 = vst.msk [vmem:[%s417 + $0x5a] sm:$0x1] %vm3689, %v4360
        %4377 = vst.msk [vmem:[%s417 + $0x6a] sm:$0x1] %vm3689, %v4361
        %4378 = vst.msk [vmem:[%s417 + $0x7a] sm:$0x1] %vm3689, %v4362
        %v4379 = vcombine.high %v3582, %v3582
        %v4381 = vunpack.c.l.s4 1966171168
        %v4382 = vunpack.c.0.s8 %v4381
        %v4383 = vlaneseq
        %v4384 = vshrl.u32 %v4383, 7
        %v4385 = vsub.s32 %v4382, %v4384
        %v4386 = vrot.slane %v3582, %v4385
        %v4388 = vunpack.c.l.s4 1966171168
        %v4389 = vunpack.c.0.s8 %v4388
        %v4390 = vlaneseq
        %v4391 = vshrl.u32 %v4390, 7
        %v4392 = vsub.s32 %v4389, %v4391
        %v4393 = vrot.slane %v4379, %v4392
        %v4394 = vcombine.high %v4386, %v4386
        %v4395 = vcombine.high %v4393, %v4393
        %v4397 = vunpack.c.l.s4 1966171168
        %v4398 = vunpack.c.0.s8 %v4397
        %v4399 = vlaneseq
        %v4400 = vshrl.u32 %v4399, 7
        %v4401 = vsub.s32 %v4398, %v4400
        %v4402 = vrot.slane %v4386, %v4401
        %v4404 = vunpack.c.l.s4 1966171168
        %v4405 = vunpack.c.0.s8 %v4404
        %v4406 = vlaneseq
        %v4407 = vshrl.u32 %v4406, 7
        %v4408 = vsub.s32 %v4405, %v4407
        %v4409 = vrot.slane %v4393, %v4408
        %v4411 = vunpack.c.l.s4 1966171168
        %v4412 = vunpack.c.0.s8 %v4411
        %v4413 = vlaneseq
        %v4414 = vshrl.u32 %v4413, 7
        %v4415 = vsub.s32 %v4412, %v4414
        %v4416 = vrot.slane %v4394, %v4415
        %v4418 = vunpack.c.l.s4 1966171168
        %v4419 = vunpack.c.0.s8 %v4418
        %v4420 = vlaneseq
        %v4421 = vshrl.u32 %v4420, 7
        %v4422 = vsub.s32 %v4419, %v4421
        %v4423 = vrot.slane %v4395, %v4422
        %v4424 = vcombine.high %v4402, %v4402
        %v4425 = vcombine.high %v4409, %v4409
        %v4426 = vcombine.high %v4416, %v4416
        %v4427 = vcombine.high %v4423, %v4423
        %v4428 = vlaneseq
        %v4429 = vshrl.u32 %v4428, 7
        %v4430 = vsub.s32 0, %v4429
        %v4431 = vrot.slane %v4402, %v4430
        %v4432 = vlaneseq
        %v4433 = vshrl.u32 %v4432, 7
        %v4434 = vsub.s32 0, %v4433
        %v4435 = vrot.slane %v4416, %v4434
        %v4436 = vlaneseq
        %v4437 = vshrl.u32 %v4436, 7
        %v4438 = vsub.s32 0, %v4437
        %v4439 = vrot.slane %v4424, %v4438
        %v4440 = vlaneseq
        %v4441 = vshrl.u32 %v4440, 7
        %v4442 = vsub.s32 0, %v4441
        %v4443 = vrot.slane %v4426, %v4442
        %v4444 = vlaneseq
        %v4445 = vshrl.u32 %v4444, 7
        %v4446 = vsub.s32 0, %v4445
        %v4447 = vrot.slane %v4409, %v4446
        %v4448 = vlaneseq
        %v4449 = vshrl.u32 %v4448, 7
        %v4450 = vsub.s32 0, %v4449
        %v4451 = vrot.slane %v4423, %v4450
        %v4452 = vlaneseq
        %v4453 = vshrl.u32 %v4452, 7
        %v4454 = vsub.s32 0, %v4453
        %v4455 = vrot.slane %v4425, %v4454
        %v4456 = vlaneseq
        %v4457 = vshrl.u32 %v4456, 7
        %v4458 = vsub.s32 0, %v4457
        %v4459 = vrot.slane %v4427, %v4458
        %4460 = vrot.lane.b32.xlu0 %v4431, 119
        %v4461 = vpop.permute.xlu0 %4460
        %4462 = vrot.lane.b32.xlu0 %v4435, 119
        %v4463 = vpop.permute.xlu0 %4462
        %4464 = vrot.lane.b32.xlu0 %v4439, 119
        %v4465 = vpop.permute.xlu0 %4464
        %4466 = vrot.lane.b32.xlu0 %v4443, 119
        %v4467 = vpop.permute.xlu0 %4466
        %4468 = vrot.lane.b32.xlu0 %v4447, 119
        %v4469 = vpop.permute.xlu0 %4468
        %4470 = vrot.lane.b32.xlu0 %v4451, 119
        %v4471 = vpop.permute.xlu0 %4470
        %4472 = vrot.lane.b32.xlu0 %v4455, 119
        %v4473 = vpop.permute.xlu0 %4472
        %4474 = vrot.lane.b32.xlu0 %v4459, 119
        %v4475 = vpop.permute.xlu0 %4474
        %4484 = vst.msk [vmem:[%s417 + $0xb] sm:$0x1] %vm3689, %v4461
        %4485 = vst.msk [vmem:[%s417 + $0x1b] sm:$0x1] %vm3689, %v4463
        %4486 = vst.msk [vmem:[%s417 + $0x2b] sm:$0x1] %vm3689, %v4465
        %4487 = vst.msk [vmem:[%s417 + $0x3b] sm:$0x1] %vm3689, %v4467
        %4488 = vst.msk [vmem:[%s417 + $0x4b] sm:$0x1] %vm3689, %v4469
        %4489 = vst.msk [vmem:[%s417 + $0x5b] sm:$0x1] %vm3689, %v4471
        %4490 = vst.msk [vmem:[%s417 + $0x6b] sm:$0x1] %vm3689, %v4473
        %4491 = vst.msk [vmem:[%s417 + $0x7b] sm:$0x1] %vm3689, %v4475
        %4492 = vrot.lane.b32.xlu0 %v4431, 95
        %v4493 = vpop.permute.xlu0 %4492
        %4494 = vrot.lane.b32.xlu0 %v4435, 95
        %v4495 = vpop.permute.xlu0 %4494
        %4496 = vrot.lane.b32.xlu0 %v4439, 95
        %v4497 = vpop.permute.xlu0 %4496
        %4498 = vrot.lane.b32.xlu0 %v4443, 95
        %v4499 = vpop.permute.xlu0 %4498
        %4500 = vrot.lane.b32.xlu0 %v4447, 95
        %v4501 = vpop.permute.xlu0 %4500
        %4502 = vrot.lane.b32.xlu0 %v4451, 95
        %v4503 = vpop.permute.xlu0 %4502
        %4504 = vrot.lane.b32.xlu0 %v4455, 95
        %v4505 = vpop.permute.xlu0 %4504
        %4506 = vrot.lane.b32.xlu0 %v4459, 95
        %v4507 = vpop.permute.xlu0 %4506
        %4516 = vst.msk [vmem:[%s417 + $0xc] sm:$0x1] %vm3689, %v4493
        %4517 = vst.msk [vmem:[%s417 + $0x1c] sm:$0x1] %vm3689, %v4495
        %4518 = vst.msk [vmem:[%s417 + $0x2c] sm:$0x1] %vm3689, %v4497
        %4519 = vst.msk [vmem:[%s417 + $0x3c] sm:$0x1] %vm3689, %v4499
        %4520 = vst.msk [vmem:[%s417 + $0x4c] sm:$0x1] %vm3689, %v4501
        %4521 = vst.msk [vmem:[%s417 + $0x5c] sm:$0x1] %vm3689, %v4503
        %4522 = vst.msk [vmem:[%s417 + $0x6c] sm:$0x1] %vm3689, %v4505
        %4523 = vst.msk [vmem:[%s417 + $0x7c] sm:$0x1] %vm3689, %v4507
        %4524 = vrot.lane.b32.xlu0 %v4431, 71
        %v4525 = vpop.permute.xlu0 %4524
        %4526 = vrot.lane.b32.xlu0 %v4435, 71
        %v4527 = vpop.permute.xlu0 %4526
        %4528 = vrot.lane.b32.xlu0 %v4439, 71
        %v4529 = vpop.permute.xlu0 %4528
        %4530 = vrot.lane.b32.xlu0 %v4443, 71
        %v4531 = vpop.permute.xlu0 %4530
        %4532 = vrot.lane.b32.xlu0 %v4447, 71
        %v4533 = vpop.permute.xlu0 %4532
        %4534 = vrot.lane.b32.xlu0 %v4451, 71
        %v4535 = vpop.permute.xlu0 %4534
        %4536 = vrot.lane.b32.xlu0 %v4455, 71
        %v4537 = vpop.permute.xlu0 %4536
        %4538 = vrot.lane.b32.xlu0 %v4459, 71
        %v4539 = vpop.permute.xlu0 %4538
        %4548 = vst.msk [vmem:[%s417 + $0xd] sm:$0x1] %vm3689, %v4525
        %4549 = vst.msk [vmem:[%s417 + $0x1d] sm:$0x1] %vm3689, %v4527
        %4550 = vst.msk [vmem:[%s417 + $0x2d] sm:$0x1] %vm3689, %v4529
        %4551 = vst.msk [vmem:[%s417 + $0x3d] sm:$0x1] %vm3689, %v4531
        %4552 = vst.msk [vmem:[%s417 + $0x4d] sm:$0x1] %vm3689, %v4533
        %4553 = vst.msk [vmem:[%s417 + $0x5d] sm:$0x1] %vm3689, %v4535
        %4554 = vst.msk [vmem:[%s417 + $0x6d] sm:$0x1] %vm3689, %v4537
        %4555 = vst.msk [vmem:[%s417 + $0x7d] sm:$0x1] %vm3689, %v4539
        %4556 = vrot.lane.b32.xlu0 %v4431, 47
        %v4557 = vpop.permute.xlu0 %4556
        %4558 = vrot.lane.b32.xlu0 %v4435, 47
        %v4559 = vpop.permute.xlu0 %4558
        %4560 = vrot.lane.b32.xlu0 %v4439, 47
        %v4561 = vpop.permute.xlu0 %4560
        %4562 = vrot.lane.b32.xlu0 %v4443, 47
        %v4563 = vpop.permute.xlu0 %4562
        %4564 = vrot.lane.b32.xlu0 %v4447, 47
        %v4565 = vpop.permute.xlu0 %4564
        %4566 = vrot.lane.b32.xlu0 %v4451, 47
        %v4567 = vpop.permute.xlu0 %4566
        %4568 = vrot.lane.b32.xlu0 %v4455, 47
        %v4569 = vpop.permute.xlu0 %4568
        %4570 = vrot.lane.b32.xlu0 %v4459, 47
        %v4571 = vpop.permute.xlu0 %4570
        %4580 = vst.msk [vmem:[%s417 + $0xe] sm:$0x1] %vm3689, %v4557
        %4581 = vst.msk [vmem:[%s417 + $0x1e] sm:$0x1] %vm3689, %v4559
        %4582 = vst.msk [vmem:[%s417 + $0x2e] sm:$0x1] %vm3689, %v4561
        %4583 = vst.msk [vmem:[%s417 + $0x3e] sm:$0x1] %vm3689, %v4563
        %4584 = vst.msk [vmem:[%s417 + $0x4e] sm:$0x1] %vm3689, %v4565
        %4585 = vst.msk [vmem:[%s417 + $0x5e] sm:$0x1] %vm3689, %v4567
        %4586 = vst.msk [vmem:[%s417 + $0x6e] sm:$0x1] %vm3689, %v4569
        %4587 = vst.msk [vmem:[%s417 + $0x7e] sm:$0x1] %vm3689, %v4571
        %4588 = vrot.lane.b32.xlu0 %v4431, 23
        %v4589 = vpop.permute.xlu0 %4588
        %4590 = vrot.lane.b32.xlu0 %v4435, 23
        %v4591 = vpop.permute.xlu0 %4590
        %4592 = vrot.lane.b32.xlu0 %v4439, 23
        %v4593 = vpop.permute.xlu0 %4592
        %4594 = vrot.lane.b32.xlu0 %v4443, 23
        %v4595 = vpop.permute.xlu0 %4594
        %4596 = vrot.lane.b32.xlu0 %v4447, 23
        %v4597 = vpop.permute.xlu0 %4596
        %4598 = vrot.lane.b32.xlu0 %v4451, 23
        %v4599 = vpop.permute.xlu0 %4598
        %4600 = vrot.lane.b32.xlu0 %v4455, 23
        %v4601 = vpop.permute.xlu0 %4600
        %4602 = vrot.lane.b32.xlu0 %v4459, 23
        %v4603 = vpop.permute.xlu0 %4602
        %4612 = vst.msk [vmem:[%s417 + $0xf] sm:$0x1] %vm3689, %v4589
        %4613 = vst.msk [vmem:[%s417 + $0x1f] sm:$0x1] %vm3689, %v4591
        %4614 = vst.msk [vmem:[%s417 + $0x2f] sm:$0x1] %vm3689, %v4593
        %4615 = vst.msk [vmem:[%s417 + $0x3f] sm:$0x1] %vm3689, %v4595
        %4616 = vst.msk [vmem:[%s417 + $0x4f] sm:$0x1] %vm3689, %v4597
        %4617 = vst.msk [vmem:[%s417 + $0x5f] sm:$0x1] %vm3689, %v4599
        %4618 = vst.msk [vmem:[%s417 + $0x6f] sm:$0x1] %vm3689, %v4601
        %4619 = vst.msk [vmem:[%s417 + $0x7f] sm:$0x1] %vm3689, %v4603
        %s4620 = sand.u32 %s258, 1
        %s4621 = scalar_lea.sflag [#allocation5], %s4620
        %s4622 = sand.u32 %s258, 1
        %s4623 = smul.addr %s4622, 128
        %s4624 = scalar_lea.vmem [#allocation8], %s4623
        // Predicated region
        $region69: #{tpu_custom_call.1} parent=59 // pred_check
          %p4625 = pneg %p268
        $region70: #{tpu_custom_call.1} parent=59 // pred_check_branch
          %4627 = sbr.rel (%p4625) target = $region72
        $region71: #{tpu_custom_call.1} parent=59 // pred_region
          %s4629 = ssub.s32 2048, 2048
          %4630 = vsyncadd %s4621, %s4629
          %s4631 = smul.addr %s30, 16
          %s4632 = smul.addr %s4631, 128
          %s4633 = scalar_lea.hbm %s10, %s4632
          %s4634 = sshll.u32 %s4624, 4
          %s4635 = int_to_ptr.vmem [resolvable:$true] %s4634
          %4640 = dma.vmem_to_hbm [thread:$0]  %s4635, 2048, %s4633, %s4621, 128, 128, 8
        $region72: #{tpu_custom_call.1} parent=59 // pred_fallthru
          _
      $region60: #{tpu_custom_call.1} parent=5 // pred_fallthru
        _
      %p4641 = scmp.le.s32.totalorder 2, %s25
      // Predicated region
      $region73: #{tpu_custom_call.1} parent=5 // pred_check
        %p4642 = pneg %p4641
      $region74: #{tpu_custom_call.1} parent=5 // pred_check_branch
        %4644 = sbr.rel (%p4642) target = $region76
      $region75: #{tpu_custom_call.1} parent=5 // pred_region
        %s4645 = ssub.s32 %s25, 2
        // Predicated region
        $region77: #{tpu_custom_call.1} parent=75 // pred_check
          %p4646 = pneg %p274
        $region78: #{tpu_custom_call.1} parent=75 // pred_check_branch
          %4648 = sbr.rel (%p4646) target = $region80
        $region79: #{tpu_custom_call.1} parent=75 // pred_region
          %s4649 = sand.u32 %s259, 1
          %s4650 = scalar_lea.sflag [#allocation5], %s4649
          %s4651 = sand.u32 %s259, 1
          %s4652 = smul.addr %s4651, 128
          %s4653 = scalar_lea.vmem [#allocation8], %s4652
          %4654 = dma.done %s4650, 2048
        $region80: #{tpu_custom_call.1} parent=75 // pred_fallthru
          _
      $region76: #{tpu_custom_call.1} parent=5 // pred_fallthru
        _
    $region6: #{tpu_custom_call.1} parent=1 // loop_footer
      %s29 = sadd.s32 1, %s25
    $region7: #{tpu_custom_call.1} parent=1 // loop_footer_branch
      %24 = sbr.rel target = $region3
    $region8: #{tpu_custom_call.1} parent=1 // loop_exit
      _
    %4655 = vsyncpa [#allocation4], 1
    %s4656 = scalar_lea.sflag [#allocation4], 1
    %4657 = vsyncpa %s4656, 1
    %4658 = vsyncpa [#allocation7], 1
    %s4659 = scalar_lea.sflag [#allocation7], 1
    %4660 = vsyncpa %s4659, 1
    %4661 = vsyncpa [#allocation5], 1
    %s4662 = scalar_lea.sflag [#allocation5], 1
    %4663 = vsyncpa %s4662, 1

</llo_original>
